<compile_context>
chip_gen: v7x
topology: tpu7x:2x2x1
jax: 0.10.0
libtpu: 0.0.40
codegen_flags: <defaults>
</compile_context>

<pallas_src>
import functools

import numpy as np
import jax
import jax.numpy as jnp
from jax import lax
from jax.experimental import pallas as pl
from jax.experimental.pallas import tpu as pltpu

LRELU_SLOPE = 0.1015625   # as in the provided module spec (get_activation('lrelu'))
BN_EPS = 1e-5


def _lrelu(x):
    return jnp.where(x > 0, x, LRELU_SLOPE * x)


def res_layer_kernel(x_ref, xtop_ref, xbot_ref, w1_ref, b1_ref, w2_ref, b2_ref,
                     o_ref, col_ref, *, TH, W, W_VALID, C, Cmp):
    """One (batch n, row-tile r) grid step.

    x_ref    : (1, TH, W, C)   bf16   centre rows of x
    xtop_ref : (1, 1, W, C)    bf16   row TH*r - 1 of x (clamped at the top edge)
    xbot_ref : (1, 1, W, C)    bf16   row TH*r + TH of x (clamped at the bottom edge)
    w1_ref   : (C, Cmp)        bf16   1x1 conv weight, BN1 folded, Cm zero-padded to Cmp
    b1_ref   : (1, Cmp)        f32    folded BN1 bias (zero in padded channels)
    w2_ref   : (3, 3*Cmp, C)   bf16   3x3 conv weight [dy, dx*Cmp + ci, co], BN2 folded
    b2_ref   : (1, C)          f32    folded BN2 bias
    o_ref    : (1, TH, W, C)   bf16   output tile
    col_ref  : (TH+2, W, 3*Cmp) bf16  VMEM scratch: dx-im2col of the padded y1 rows
    """
    f32, bf16 = jnp.float32, jnp.bfloat16
    r = pl.program_id(1)
    n_r = pl.num_programs(1)

    # ---- layer1: one fused 1x1-conv matmul over the TH centre rows + 2 halo rows.
    x_all = jnp.concatenate([xtop_ref[0], x_ref[0], xbot_ref[0]], axis=0)  # (TH+2, W, C)
    h = jnp.dot(x_all.reshape((TH + 2) * W, C), w1_ref[...],
                preferred_element_type=f32)
    yall = _lrelu(h + b1_ref[...]).reshape(TH + 2, W, Cmp)                 # f32

    # ---- zero the SAME-padding halo rows (image top/bottom) and any W-pad columns
    #      with a single value-domain mask (no conditional border stores).
    row_idx = lax.broadcasted_iota(jnp.int32, (TH + 2, W, 1), 0)
    valid = jnp.logical_and(jnp.logical_or(row_idx > 0, r > 0),
                            jnp.logical_or(row_idx < TH + 1, r < n_r - 1))
    if W_VALID < W:
        col_idx = lax.broadcasted_iota(jnp.int32, (TH + 2, W, 1), 1)
        valid = jnp.logical_and(valid, col_idx < W_VALID)
    yall = jnp.where(valid, yall, 0.0)

    # ---- dx-im2col: the +/-1 column shifts happen in registers; every col store is a
    #      full-width, 128-lane-aligned, unmasked store (Cmp is a multiple of 128).
    # TODO(synk): use pltpu.roll(yall, +/-1, axis=1) + border jnp.where to put the
    #             shifts on the idle XLU slot once the rotate path is verified.
    zcol = jnp.zeros((TH + 2, 1, Cmp), f32)
    left = jnp.concatenate([zcol, yall[:, :W - 1, :]], axis=1)    # col0[w] = y1[w-1]
    right = jnp.concatenate([yall[:, 1:, :], zcol], axis=1)       # col2[w] = y1[w+1]
    col_ref[:, :, 0:Cmp] = left.astype(bf16)
    col_ref[:, :, Cmp:2 * Cmp] = yall.astype(bf16)
    col_ref[:, :, 2 * Cmp:3 * Cmp] = right.astype(bf16)

    # ---- layer2: 3x3 conv as 3 matmuls (one per dy), K = 3*Cmp each; the accumulator
    #      starts from the dy=0 product (no zeros materialization / extra f32 add).
    K = 3 * Cmp
    acc = jnp.dot(col_ref[0:TH, :, :].reshape(TH * W, K), w2_ref[0],
                  preferred_element_type=f32)
    acc = acc + jnp.dot(col_ref[1:TH + 1, :, :].reshape(TH * W, K), w2_ref[1],
                        preferred_element_type=f32)
    acc = acc + jnp.dot(col_ref[2:TH + 2, :, :].reshape(TH * W, K), w2_ref[2],
                        preferred_element_type=f32)
    y2 = _lrelu(acc + b2_ref[...])

    # ---- residual: re-read x from VMEM here so it is not live across both convs.
    xres = x_ref[0].reshape(TH * W, C).astype(f32)
    # TODO(synk): for C < 128 present x/out to the kernel as (N, H, W*C) so the output
    #             store is lane-dense (needs a minor-dim reshape in wrapper + kernel).
    o_ref[0] = (xres + y2).reshape(TH, W, C).astype(o_ref.dtype)


def _pick_row_tile(H, W, C, Cmp, *, io_bytes=2, budget_bytes=36 * 1024 * 1024):
    """Largest divisor of H such that (a) TH*W rows/step keeps the layer-2 f32
    accumulator around the 256 KiB vreg file and (b) the per-step VMEM estimate fits
    a v7x-safe (64 MiB) budget.  Always divides H (no TH = H fallback blowup)."""
    m_max = max(128, min(2048, 65536 // C))                        # rows per step
    w_bytes = 2 * 2 * (C * Cmp + 9 * Cmp * C) + 2 * 4 * (Cmp + C)  # dbl-buffered weights

    def step_bytes(th):
        b = 2 * th * W * C * io_bytes          # x centre block, double-buffered
        b += 2 * 2 * W * C * io_bytes          # the two 1-row halo blocks
        b += 2 * th * W * C * io_bytes         # output block, double-buffered
        b += (th + 2) * W * 3 * Cmp * 2        # bf16 im2col scratch
        b += 6 * th * W * max(C, Cmp) * 4      # headroom for f32 temporaries / spill
        return b + w_bytes

    th = 1
    for cand in range(1, H + 1):
        if H % cand == 0 and cand * W <= m_max and step_bytes(cand) <= budget_bytes:
            th = cand
    return th


def res_layer_forward(x_nhwc, w1f, b1, w2f, b2, *, w_valid):
    """x_nhwc: (N, H, W, C) bf16 with W already padded to a multiple of 8.
    Weights/biases are BN-folded, bf16 (biases f32), with Cm zero-padded to Cmp."""
    N, H, W, C = x_nhwc.shape
    Cmp = w1f.shape[1]
    TH = _pick_row_tile(H, W, C, Cmp)
    RT = H // TH

    try:
        vmem_cap = pltpu.get_tpu_info().vmem_capacity_bytes
    except Exception:
        vmem_cap = 64 * 1024 * 1024
    vmem_limit = int(min(96 * 1024 * 1024, vmem_cap * 3 // 4))

    kernel = functools.partial(res_layer_kernel, TH=TH, W=W, W_VALID=w_valid,
                               C=C, Cmp=Cmp)
    return pl.pallas_call(
        kernel,
        out_shape=jax.ShapeDtypeStruct((N, H, W, C), jnp.bfloat16),
        grid_spec=pltpu.PrefetchScalarGridSpec(
            num_scalar_prefetch=0,
            grid=(N, RT),
            in_specs=[
                pl.BlockSpec((1, TH, W, C), lambda n, r: (n, r, 0, 0)),
                # 1-row halos: the block H-extent is 1, so the element-scale row index
                # returned here doubles as the block index (clamped at the image edges).
                pl.BlockSpec((1, 1, W, C),
                             lambda n, r: (n, jnp.maximum(r * TH - 1, 0), 0, 0)),
                pl.BlockSpec((1, 1, W, C),
                             lambda n, r: (n, jnp.minimum(r * TH + TH, H - 1), 0, 0)),
                # TODO(synk): single-buffer these constant weight blocks
                # (pipeline_mode=pl.Buffered(1)) to reclaim VMEM for bigger tiles on v7x.
                pl.BlockSpec((C, Cmp), lambda n, r: (0, 0)),
                pl.BlockSpec((1, Cmp), lambda n, r: (0, 0)),
                pl.BlockSpec((3, 3 * Cmp, C), lambda n, r: (0, 0, 0)),
                pl.BlockSpec((1, C), lambda n, r: (0, 0)),
            ],
            out_specs=pl.BlockSpec((1, TH, W, C), lambda n, r: (n, r, 0, 0)),
            scratch_shapes=[pltpu.VMEM((TH + 2, W, 3 * Cmp), jnp.bfloat16)],
        ),
        compiler_params=pltpu.CompilerParams(
            dimension_semantics=("parallel", "parallel"),
            vmem_limit_bytes=vmem_limit),
    )(x_nhwc, x_nhwc, x_nhwc, w1f, b1, w2f, b2)


def res_layer_pallas(x_nchw, w1f, b1, w2f, b2):
    """PyTorch-convention NCHW f32 in / NCHW f32 out; bf16 activation streams inside."""
    N, C, H, W = x_nchw.shape
    x = jnp.transpose(x_nchw, (0, 2, 3, 1))                      # NHWC
    Wp = ((W + 7) // 8) * 8                                       # keep reshapes layout-free
    if Wp != W:
        x = jnp.pad(x, ((0, 0), (0, 0), (0, Wp - W), (0, 0)))
    y = res_layer_forward(x.astype(jnp.bfloat16), w1f, b1, w2f, b2, w_valid=W)
    y = y[:, :, :W, :].astype(jnp.float32)
    return jnp.transpose(y, (0, 3, 1, 2))


def pack_params(w1_fold, bb1, w2_fold_hwio, bb2):
    """BN-folded params -> kernel layout, Cm zero-padded to a multiple of 128.
    w1_fold: (C, Cm), w2_fold_hwio: (3, 3, Cm, C)."""
    C, Cm = w1_fold.shape
    Cmp = ((Cm + 127) // 128) * 128
    w1f = jnp.zeros((C, Cmp), jnp.bfloat16).at[:, :Cm].set(w1_fold.astype(jnp.bfloat16))
    b1k = jnp.zeros((1, Cmp), jnp.float32).at[0, :Cm].set(bb1.astype(jnp.float32))
    w2p = jnp.zeros((3, 3, Cmp, C), jnp.bfloat16).at[:, :, :Cm, :].set(
        w2_fold_hwio.astype(jnp.bfloat16))
    w2f = w2p.reshape(3, 3 * Cmp, C)
    b2k = bb2.reshape(1, C).astype(jnp.float32)
    return w1f, b1k, w2f, b2k


def res_layer_reference(x_nchw, w1_fold, bb1, w2_fold_hwio, bb2):
    """Pure-JAX f32 reference of the eval-mode forward (BN folded into the weights,
    which the caller rounds the same way as the kernel so the check is tight)."""
    x = jnp.transpose(x_nchw, (0, 2, 3, 1))
    y = jnp.einsum('nhwc,cd->nhwd', x, w1_fold)
    y = _lrelu(y + bb1)
    y = lax.conv_general_dilated(y, w2_fold_hwio, window_strides=(1, 1),
                                 padding='SAME',
                                 dimension_numbers=('NHWC', 'HWIO', 'NHWC'))
    y = _lrelu(y + bb2)
    return jnp.transpose(x + y, (0, 3, 1, 2))


if __name__ == "__main__":
    key = jax.random.PRNGKey(0)
    # Realistic (lane-dense) ResLayer width; C must be even.
    N, C, H, W = 2, 128, 16, 16
    Cm = C // 2
    ks = jax.random.split(key, 11)

    x_nchw = jax.random.normal(ks[0], (N, C, H, W), jnp.float32)

    # layer1: Conv2d(C, Cm, 1, bias=False) + BatchNorm2d(Cm)
    w1_oihw = 0.05 * jax.random.normal(ks[1], (Cm, C, 1, 1), jnp.float32)
    g1 = 0.75 + 0.5 * jax.random.uniform(ks[2], (Cm,), jnp.float32)
    be1 = 0.1 * jax.random.normal(ks[3], (Cm,), jnp.float32)
    m1 = 0.1 * jax.random.normal(ks[4], (Cm,), jnp.float32)
    v1 = 0.75 + 0.5 * jax.random.uniform(ks[5], (Cm,), jnp.float32)

    # layer2: Conv2d(Cm, C, 3, pad=1, bias=False) + BatchNorm2d(C)
    w2_oihw = 0.05 * jax.random.normal(ks[6], (C, Cm, 3, 3), jnp.float32)
    g2 = 0.75 + 0.5 * jax.random.uniform(ks[7], (C,), jnp.float32)
    be2 = 0.1 * jax.random.normal(ks[8], (C,), jnp.float32)
    m2 = 0.1 * jax.random.normal(ks[9], (C,), jnp.float32)
    v2 = 0.75 + 0.5 * jax.random.uniform(ks[10], (C,), jnp.float32)

    # fold eval-mode BN into per-channel scale / bias, then into the conv weights
    s1 = g1 / jnp.sqrt(v1 + BN_EPS)
    bb1 = be1 - m1 * s1
    s2 = g2 / jnp.sqrt(v2 + BN_EPS)
    bb2 = be2 - m2 * s2
    w1_fold = jnp.transpose(w1_oihw[:, :, 0, 0], (1, 0)) * s1[None, :]          # (C, Cm)
    w2_fold = jnp.transpose(w2_oihw, (2, 3, 1, 0)) * s2[None, None, None, :]    # (3,3,Cm,C)

    # kernel sees bf16 weights; round the reference weights identically (tight check)
    w1_q = w1_fold.astype(jnp.bfloat16)
    w2_q = w2_fold.astype(jnp.bfloat16)
    w1f, b1k, w2f, b2k = pack_params(w1_q, bb1, w2_q, bb2)

    out = res_layer_pallas(x_nchw, w1f, b1k, w2f, b2k)
    out = jax.block_until_ready(out)

    x_q = x_nchw.astype(jnp.bfloat16).astype(jnp.float32)   # kernel streams x as bf16
    ref = res_layer_reference(x_q, w1_q.astype(jnp.float32), bb1,
                              w2_q.astype(jnp.float32), bb2)
    np.testing.assert_allclose(np.asarray(out, np.float32), np.asarray(ref),
                               atol=3e-2, rtol=3e-2)
    print("KERNEL_OK")
</pallas_src>

<mosaic_0001>
module attributes {stable_mosaic.version = 11 : i64} {
  func.func @res_layer_kernel(%arg0: i32, %arg1: i32, %arg2: memref<1x16x16x128xbf16, #tpu.memory_space<vmem>>, %arg3: memref<1x1x16x128xbf16, #tpu.memory_space<vmem>>, %arg4: memref<1x1x16x128xbf16, #tpu.memory_space<vmem>>, %arg5: memref<128x128xbf16, #tpu.memory_space<vmem>>, %arg6: memref<1x128xf32, #tpu.memory_space<vmem>>, %arg7: memref<3x384x128xbf16, #tpu.memory_space<vmem>>, %arg8: memref<1x128xf32, #tpu.memory_space<vmem>>, %arg9: memref<1x16x16x128xbf16, #tpu.memory_space<vmem>>, %arg10: memref<18x16x384xbf16, #tpu.memory_space<vmem>>) attributes {dimension_semantics = [#tpu.dimension_semantics<parallel>, #tpu.dimension_semantics<parallel>], iteration_bounds = array<i64: 2, 1>, scalar_prefetch = 0 : i64, scratch_operands = 1 : i64, tpu.core_type = #tpu.core_type<tc>, window_params = [{transform_indices = @transform_0, window_bounds = array<i64: 1, 16, 16, 128>}, {transform_indices = @transform_1, window_bounds = array<i64: 1, 1, 16, 128>}, {transform_indices = @transform_2, window_bounds = array<i64: 1, 1, 16, 128>}, {pipeline_mode = #tpu.pipeline_mode<synchronous>, transform_indices = @transform_3, window_bounds = array<i64: 128, 128>}, {pipeline_mode = #tpu.pipeline_mode<synchronous>, transform_indices = @transform_4, window_bounds = array<i64: 1, 128>}, {pipeline_mode = #tpu.pipeline_mode<synchronous>, transform_indices = @transform_5, window_bounds = array<i64: 3, 384, 128>}, {pipeline_mode = #tpu.pipeline_mode<synchronous>, transform_indices = @transform_6, window_bounds = array<i64: 1, 128>}, {transform_indices = @transform_7, window_bounds = array<i64: 1, 16, 16, 128>}]} {
    %c0 = arith.constant 0 : index
    %c0_0 = arith.constant 0 : index
    %c0_1 = arith.constant 0 : index
    %c0_2 = arith.constant 0 : index
    %0 = vector.load %arg3[%c0, %c0_0, %c0_1, %c0_2] : memref<1x1x16x128xbf16, #tpu.memory_space<vmem>>, vector<1x1x16x128xbf16>
    %1 = vector.shape_cast %0 : vector<1x1x16x128xbf16> to vector<1x16x128xbf16>
    %c0_3 = arith.constant 0 : index
    %c0_4 = arith.constant 0 : index
    %c0_5 = arith.constant 0 : index
    %c0_6 = arith.constant 0 : index
    %2 = vector.load %arg2[%c0_3, %c0_4, %c0_5, %c0_6] : memref<1x16x16x128xbf16, #tpu.memory_space<vmem>>, vector<1x16x16x128xbf16>
    %3 = vector.shape_cast %2 : vector<1x16x16x128xbf16> to vector<16x16x128xbf16>
    %c0_7 = arith.constant 0 : index
    %c0_8 = arith.constant 0 : index
    %c0_9 = arith.constant 0 : index
    %c0_10 = arith.constant 0 : index
    %4 = vector.load %arg4[%c0_7, %c0_8, %c0_9, %c0_10] : memref<1x1x16x128xbf16, #tpu.memory_space<vmem>>, vector<1x1x16x128xbf16>
    %5 = vector.shape_cast %4 : vector<1x1x16x128xbf16> to vector<1x16x128xbf16>
    %6 = tpu.concatenate %1, %3, %5 in 0 : vector<1x16x128xbf16>, vector<16x16x128xbf16>, vector<1x16x128xbf16> -> vector<18x16x128xbf16>
    %7 = vector.shape_cast %6 : vector<18x16x128xbf16> to vector<288x128xbf16>
    %c0_11 = arith.constant 0 : index
    %c0_12 = arith.constant 0 : index
    %8 = vector.load %arg5[%c0_11, %c0_12] : memref<128x128xbf16, #tpu.memory_space<vmem>>, vector<128x128xbf16>
    %cst = arith.constant dense<0.000000e+00> : vector<288x128xf32>
    %9 = tpu.matmul %7, %8, %cst {dimension_numbers = #tpu.dot_dimension_numbers<[1], [0], [0], [1], [0, 0, 1, 1], [], []>} : vector<288x128xbf16>, vector<128x128xbf16>, vector<288x128xf32> -> vector<288x128xf32>
    %c0_13 = arith.constant 0 : index
    %c0_14 = arith.constant 0 : index
    %10 = vector.load %arg6[%c0_13, %c0_14] : memref<1x128xf32, #tpu.memory_space<vmem>>, vector<1x128xf32>
    %11 = vector.broadcast %10 : vector<1x128xf32> to vector<288x128xf32>
    %12 = arith.addf %9, %11 : vector<288x128xf32>
    %cst_15 = arith.constant 0.000000e+00 : f32
    %13 = vector.broadcast %cst_15 : f32 to vector<288x128xf32>
    %14 = arith.cmpf ogt, %12, %13 : vector<288x128xf32>
    %cst_16 = arith.constant 0.1015625 : f32
    %15 = vector.broadcast %cst_16 : f32 to vector<288x128xf32>
    %16 = arith.mulf %15, %12 : vector<288x128xf32>
    %17 = arith.select %14, %12, %16 : vector<288x128xi1>, vector<288x128xf32>
    %18 = vector.shape_cast %17 : vector<288x128xf32> to vector<18x16x128xf32>
    %19 = tpu.iota {dimensions = array<i32: 0>} : vector<18x16x1xi32>
    %c0_i32 = arith.constant 0 : i32
    %20 = vector.broadcast %c0_i32 : i32 to vector<18x16x1xi32>
    %21 = arith.cmpi sgt, %19, %20 : vector<18x16x1xi32>
    %c0_i32_17 = arith.constant 0 : i32
    %22 = arith.cmpi sgt, %arg1, %c0_i32_17 : i32
    %23 = vector.broadcast %22 : i1 to vector<18x16x1xi1>
    %24 = arith.ori %21, %23 : vector<18x16x1xi1>
    %c17_i32 = arith.constant 17 : i32
    %25 = vector.broadcast %c17_i32 : i32 to vector<18x16x1xi32>
    %26 = arith.cmpi slt, %19, %25 : vector<18x16x1xi32>
    %c0_i32_18 = arith.constant 0 : i32
    %27 = arith.cmpi slt, %arg1, %c0_i32_18 : i32
    %28 = vector.broadcast %27 : i1 to vector<18x16x1xi1>
    %29 = arith.ori %26, %28 : vector<18x16x1xi1>
    %30 = arith.andi %24, %29 : vector<18x16x1xi1>
    %cst_19 = arith.constant 0.000000e+00 : f32
    %31 = vector.shape_cast %30 : vector<18x16x1xi1> to vector<18x16x1xi1>
    %32 = vector.broadcast %31 : vector<18x16x1xi1> to vector<18x16x128xi1>
    %33 = vector.broadcast %cst_19 : f32 to vector<18x16x128xf32>
    %34 = arith.select %32, %18, %33 : vector<18x16x128xi1>, vector<18x16x128xf32>
    %cst_20 = arith.constant 0.000000e+00 : f32
    %35 = vector.broadcast %cst_20 : f32 to vector<18x1x128xf32>
    %36 = vector.extract_strided_slice %34 {offsets = [0, 0, 0], sizes = [18, 15, 128], strides = [1, 1, 1]} : vector<18x16x128xf32> to vector<18x15x128xf32>
    %37 = tpu.concatenate %35, %36 in 1 : vector<18x1x128xf32>, vector<18x15x128xf32> -> vector<18x16x128xf32>
    %38 = vector.extract_strided_slice %34 {offsets = [0, 1, 0], sizes = [18, 15, 128], strides = [1, 1, 1]} : vector<18x16x128xf32> to vector<18x15x128xf32>
    %39 = tpu.concatenate %38, %35 in 1 : vector<18x15x128xf32>, vector<18x1x128xf32> -> vector<18x16x128xf32>
    %40 = arith.truncf %37 : vector<18x16x128xf32> to vector<18x16x128xbf16>
    %c0_21 = arith.constant 0 : index
    %c0_22 = arith.constant 0 : index
    %c0_23 = arith.constant 0 : index
    %41 = vector.load %arg10[%c0_21, %c0_22, %c0_23] : memref<18x16x384xbf16, #tpu.memory_space<vmem>>, vector<18x16x128xbf16>
    tpu.vector_store %arg10[%c0_21, %c0_22, %c0_23], %40 {strides = array<i32>} : memref<18x16x384xbf16, #tpu.memory_space<vmem>>, vector<18x16x128xbf16>,
    %42 = arith.truncf %34 : vector<18x16x128xf32> to vector<18x16x128xbf16>
    %c0_24 = arith.constant 0 : index
    %c0_25 = arith.constant 0 : index
    %c128 = arith.constant 128 : index
    %43 = vector.load %arg10[%c0_24, %c0_25, %c128] : memref<18x16x384xbf16, #tpu.memory_space<vmem>>, vector<18x16x128xbf16>
    tpu.vector_store %arg10[%c0_24, %c0_25, %c128], %42 {strides = array<i32>} : memref<18x16x384xbf16, #tpu.memory_space<vmem>>, vector<18x16x128xbf16>,
    %44 = arith.truncf %39 : vector<18x16x128xf32> to vector<18x16x128xbf16>
    %c0_26 = arith.constant 0 : index
    %c0_27 = arith.constant 0 : index
    %c256 = arith.constant 256 : index
    %45 = vector.load %arg10[%c0_26, %c0_27, %c256] : memref<18x16x384xbf16, #tpu.memory_space<vmem>>, vector<18x16x128xbf16>
    tpu.vector_store %arg10[%c0_26, %c0_27, %c256], %44 {strides = array<i32>} : memref<18x16x384xbf16, #tpu.memory_space<vmem>>, vector<18x16x128xbf16>,
    %c0_28 = arith.constant 0 : index
    %c0_29 = arith.constant 0 : index
    %c0_30 = arith.constant 0 : index
    %46 = vector.load %arg10[%c0_28, %c0_29, %c0_30] : memref<18x16x384xbf16, #tpu.memory_space<vmem>>, vector<16x16x384xbf16>
    %47 = vector.shape_cast %46 : vector<16x16x384xbf16> to vector<256x384xbf16>
    %c0_31 = arith.constant 0 : index
    %c0_32 = arith.constant 0 : index
    %c0_33 = arith.constant 0 : index
    %48 = vector.load %arg7[%c0_31, %c0_32, %c0_33] : memref<3x384x128xbf16, #tpu.memory_space<vmem>>, vector<1x384x128xbf16>
    %49 = vector.shape_cast %48 : vector<1x384x128xbf16> to vector<384x128xbf16>
    %cst_34 = arith.constant dense<0.000000e+00> : vector<256x128xf32>
    %50 = tpu.matmul %47, %49, %cst_34 {dimension_numbers = #tpu.dot_dimension_numbers<[1], [0], [0], [1], [0, 0, 1, 1], [], []>} : vector<256x384xbf16>, vector<384x128xbf16>, vector<256x128xf32> -> vector<256x128xf32>
    %c1 = arith.constant 1 : index
    %c0_35 = arith.constant 0 : index
    %c0_36 = arith.constant 0 : index
    %51 = vector.load %arg10[%c1, %c0_35, %c0_36] : memref<18x16x384xbf16, #tpu.memory_space<vmem>>, vector<16x16x384xbf16>
    %52 = vector.shape_cast %51 : vector<16x16x384xbf16> to vector<256x384xbf16>
    %c1_37 = arith.constant 1 : index
    %c0_38 = arith.constant 0 : index
    %c0_39 = arith.constant 0 : index
    %53 = vector.load %arg7[%c1_37, %c0_38, %c0_39] : memref<3x384x128xbf16, #tpu.memory_space<vmem>>, vector<1x384x128xbf16>
    %54 = vector.shape_cast %53 : vector<1x384x128xbf16> to vector<384x128xbf16>
    %cst_40 = arith.constant dense<0.000000e+00> : vector<256x128xf32>
    %55 = tpu.matmul %52, %54, %cst_40 {dimension_numbers = #tpu.dot_dimension_numbers<[1], [0], [0], [1], [0, 0, 1, 1], [], []>} : vector<256x384xbf16>, vector<384x128xbf16>, vector<256x128xf32> -> vector<256x128xf32>
    %56 = arith.addf %50, %55 : vector<256x128xf32>
    %c2 = arith.constant 2 : index
    %c0_41 = arith.constant 0 : index
    %c0_42 = arith.constant 0 : index
    %57 = vector.load %arg10[%c2, %c0_41, %c0_42] : memref<18x16x384xbf16, #tpu.memory_space<vmem>>, vector<16x16x384xbf16>
    %58 = vector.shape_cast %57 : vector<16x16x384xbf16> to vector<256x384xbf16>
    %c2_43 = arith.constant 2 : index
    %c0_44 = arith.constant 0 : index
    %c0_45 = arith.constant 0 : index
    %59 = vector.load %arg7[%c2_43, %c0_44, %c0_45] : memref<3x384x128xbf16, #tpu.memory_space<vmem>>, vector<1x384x128xbf16>
    %60 = vector.shape_cast %59 : vector<1x384x128xbf16> to vector<384x128xbf16>
    %cst_46 = arith.constant dense<0.000000e+00> : vector<256x128xf32>
    %61 = tpu.matmul %58, %60, %cst_46 {dimension_numbers = #tpu.dot_dimension_numbers<[1], [0], [0], [1], [0, 0, 1, 1], [], []>} : vector<256x384xbf16>, vector<384x128xbf16>, vector<256x128xf32> -> vector<256x128xf32>
    %62 = arith.addf %56, %61 : vector<256x128xf32>
    %c0_47 = arith.constant 0 : index
    %c0_48 = arith.constant 0 : index
    %63 = vector.load %arg8[%c0_47, %c0_48] : memref<1x128xf32, #tpu.memory_space<vmem>>, vector<1x128xf32>
    %64 = vector.broadcast %63 : vector<1x128xf32> to vector<256x128xf32>
    %65 = arith.addf %62, %64 : vector<256x128xf32>
    %cst_49 = arith.constant 0.000000e+00 : f32
    %66 = vector.broadcast %cst_49 : f32 to vector<256x128xf32>
    %67 = arith.cmpf ogt, %65, %66 : vector<256x128xf32>
    %cst_50 = arith.constant 0.1015625 : f32
    %68 = vector.broadcast %cst_50 : f32 to vector<256x128xf32>
    %69 = arith.mulf %68, %65 : vector<256x128xf32>
    %70 = arith.select %67, %65, %69 : vector<256x128xi1>, vector<256x128xf32>
    %c0_51 = arith.constant 0 : index
    %c0_52 = arith.constant 0 : index
    %c0_53 = arith.constant 0 : index
    %c0_54 = arith.constant 0 : index
    %71 = vector.load %arg2[%c0_51, %c0_52, %c0_53, %c0_54] : memref<1x16x16x128xbf16, #tpu.memory_space<vmem>>, vector<1x16x16x128xbf16>
    %72 = vector.shape_cast %71 : vector<1x16x16x128xbf16> to vector<16x16x128xbf16>
    %73 = vector.shape_cast %72 : vector<16x16x128xbf16> to vector<256x128xbf16>
    %74 = arith.extf %73 : vector<256x128xbf16> to vector<256x128xf32>
    %75 = arith.addf %74, %70 : vector<256x128xf32>
    %76 = vector.shape_cast %75 : vector<256x128xf32> to vector<16x16x128xf32>
    %77 = arith.truncf %76 : vector<16x16x128xf32> to vector<16x16x128xbf16>
    %c0_55 = arith.constant 0 : index
    %c0_56 = arith.constant 0 : index
    %c0_57 = arith.constant 0 : index
    %c0_58 = arith.constant 0 : index
    %78 = vector.load %arg9[%c0_55, %c0_56, %c0_57, %c0_58] : memref<1x16x16x128xbf16, #tpu.memory_space<vmem>>, vector<1x16x16x128xbf16>
    %79 = vector.shape_cast %78 : vector<1x16x16x128xbf16> to vector<16x16x128xbf16>
    %80 = vector.shape_cast %77 : vector<16x16x128xbf16> to vector<1x16x16x128xbf16>
    tpu.vector_store %arg9[%c0_55, %c0_56, %c0_57, %c0_58], %80 {strides = array<i32>} : memref<1x16x16x128xbf16, #tpu.memory_space<vmem>>, vector<1x16x16x128xbf16>,
    return
  }
  func.func @transform_0(%arg0: i32, %arg1: i32) -> (i32, i32, i32, i32) {
    %c0_i32 = arith.constant 0 : i32
    %c0_i32_0 = arith.constant 0 : i32
    %c0_i32_1 = arith.constant 0 : i32
    return %arg0, %arg1, %c0_i32, %c0_i32_0 : i32, i32, i32, i32
  }
  func.func @transform_1(%arg0: i32, %arg1: i32) -> (i32, i32, i32, i32) {
    %c16_i32 = arith.constant 16 : i32
    %0 = arith.muli %arg1, %c16_i32 : i32
    %c1_i32 = arith.constant 1 : i32
    %1 = arith.subi %0, %c1_i32 : i32
    %c0_i32 = arith.constant 0 : i32
    %2 = arith.maxsi %1, %c0_i32 : i32
    %c0_i32_0 = arith.constant 0 : i32
    %c0_i32_1 = arith.constant 0 : i32
    %c0_i32_2 = arith.constant 0 : i32
    return %arg0, %2, %c0_i32_0, %c0_i32_1 : i32, i32, i32, i32
  }
  func.func @transform_2(%arg0: i32, %arg1: i32) -> (i32, i32, i32, i32) {
    %c16_i32 = arith.constant 16 : i32
    %0 = arith.muli %arg1, %c16_i32 : i32
    %c16_i32_0 = arith.constant 16 : i32
    %1 = arith.addi %0, %c16_i32_0 : i32
    %c15_i32 = arith.constant 15 : i32
    %2 = arith.minsi %1, %c15_i32 : i32
    %c0_i32 = arith.constant 0 : i32
    %c0_i32_1 = arith.constant 0 : i32
    %c0_i32_2 = arith.constant 0 : i32
    return %arg0, %2, %c0_i32, %c0_i32_1 : i32, i32, i32, i32
  }
  func.func @transform_3(%arg0: i32, %arg1: i32) -> (i32, i32) {
    %c0_i32 = arith.constant 0 : i32
    %c0_i32_0 = arith.constant 0 : i32
    %c0_i32_1 = arith.constant 0 : i32
    return %c0_i32, %c0_i32_0 : i32, i32
  }
  func.func @transform_4(%arg0: i32, %arg1: i32) -> (i32, i32) {
    %c0_i32 = arith.constant 0 : i32
    %c0_i32_0 = arith.constant 0 : i32
    %c0_i32_1 = arith.constant 0 : i32
    return %c0_i32, %c0_i32_0 : i32, i32
  }
  func.func @transform_5(%arg0: i32, %arg1: i32) -> (i32, i32, i32) {
    %c0_i32 = arith.constant 0 : i32
    %c0_i32_0 = arith.constant 0 : i32
    %c0_i32_1 = arith.constant 0 : i32
    %c0_i32_2 = arith.constant 0 : i32
    return %c0_i32, %c0_i32_0, %c0_i32_1 : i32, i32, i32
  }
  func.func @transform_6(%arg0: i32, %arg1: i32) -> (i32, i32) {
    %c0_i32 = arith.constant 0 : i32
    %c0_i32_0 = arith.constant 0 : i32
    %c0_i32_1 = arith.constant 0 : i32
    return %c0_i32, %c0_i32_0 : i32, i32
  }
  func.func @transform_7(%arg0: i32, %arg1: i32) -> (i32, i32, i32, i32) {
    %c0_i32 = arith.constant 0 : i32
    %c0_i32_0 = arith.constant 0 : i32
    %c0_i32_1 = arith.constant 0 : i32
    return %arg0, %arg1, %c0_i32, %c0_i32_0 : i32, i32, i32, i32
  }
}

</mosaic_0001>

<llo_original>
// kernel: tpu_custom_call.1
$region0: #{tpu_custom_call.1}
  #allocation0 [shape = 'u32[]', space=smem, size = 0x4, offset = 0x4, fixed_abs, tag = 'smem constant byte address 0x4 - core index']
  #allocation1 [shape = 'u32[144,128]{1,0:T(1,128)}', space=vmem, size = 0x12000, scoped, tag = 'internal scratch']
  #allocation2 [shape = 'bf16[18,16,384]{2,1,0:T(16,128)(2,1)}', space=vmem, size = 0x36000, scoped, tag = 'scratch operand']
  %s0 = inlined_call_operand.hbm [shape: bf16[2,16,16,128], index: 0, kind: input, shape index: {}]
  %s1 = inlined_call_operand.hbm [shape: bf16[2,16,16,128], index: 1, kind: input, shape index: {}]
  %s2 = inlined_call_operand.hbm [shape: bf16[2,16,16,128], index: 2, kind: input, shape index: {}]
  %s3 = inlined_call_operand.hbm [shape: bf16[128,128], index: 3, kind: input, shape index: {}]
  %s4 = inlined_call_operand.vmem [shape: f32[1,128], index: 4, kind: input, shape index: {}]
  %s5 = inlined_call_operand.hbm [shape: bf16[3,384,128], index: 5, kind: input, shape index: {}]
  %s6 = inlined_call_operand.vmem [shape: f32[1,128], index: 6, kind: input, shape index: {}]
  %s7 = inlined_call_operand.hbm [shape: bf16[2,16,16,128], index: 7, kind: output, shape index: {}]
  %s8 = sld [smem:[#allocation0]]
  $region81: #{tpu_custom_call.1} parent=0
    _
  %s10 = ssub.s32 1, %s8
  %s11 = scalar_select 0, %s10, %s8
  $region1: #{tpu_custom_call.1} parent=0
    #allocation3 [shape = 'u8[131072]{0}', space=vmem, size = 0x20000, scoped, tag = 'input window, operand 0']
    #allocation4 [shape = 's32[2]{0}', space=sflag, size = 0x8, scoped, tag = 'scoped memory for tpu_custom_call.1']
    #allocation5 [shape = 's32[2]{0}', space=sflag, size = 0x8, scoped, tag = 'scoped memory for tpu_custom_call.1']
    #allocation6 [shape = 'u8[8192]{0}', space=vmem, size = 0x2000, scoped, tag = 'input window, operand 1']
    #allocation7 [shape = 's32[2]{0}', space=sflag, size = 0x8, scoped, tag = 'scoped memory for tpu_custom_call.1']
    #allocation8 [shape = 'u8[8192]{0}', space=vmem, size = 0x2000, scoped, tag = 'input window, operand 2']
    #allocation9 [shape = 'u8[32768]{0}', space=vmem, size = 0x8000, scoped, tag = 'input window, operand 3, single buffered']
    #allocation10 [shape = 's32[1]{0}', space=sflag, size = 0x4, scoped, tag = 'scoped memory for tpu_custom_call.1']
    #allocation11 [shape = 'u8[294912]{0}', space=vmem, size = 0x48000, scoped, tag = 'input window, operand 5, single buffered']
    #allocation12 [shape = 'u8[131072]{0}', space=vmem, size = 0x20000, scoped, tag = 'output window, operand 0']
    %12 = vsyncpa [#allocation4], 0
    %s13 = scalar_lea.sflag [#allocation4], 1
    %14 = vsyncpa %s13, 0
    %15 = vsyncpa [#allocation7], 0
    %s16 = scalar_lea.sflag [#allocation7], 1
    %17 = vsyncpa %s16, 0
    %18 = vsyncpa [#allocation10], 0
    %19 = vsyncpa [#allocation5], 0
    %s20 = scalar_lea.sflag [#allocation5], 1
    %21 = vsyncpa %s20, 0
    loop: start=0, step=1, limit=4
    $region2: #{tpu_custom_call.1} parent=1 // loop_pre_header
      _
    $region3: #{tpu_custom_call.1} parent=1 // loop_header
      %s23 = sphi 0, %s27
      %p24 = scmp.ge.s32.totalorder %s23, 4
      %s30 = sphi 0, %s42
      %s31 = sphi 0, %s38
      %s32 = sphi 0, %s30
      %s33 = sphi 0, %s31
      %s34 = sphi 0, %s32
      %s35 = sphi 0, %s33
      %s47 = sphi 0, %s49
      %s50 = sphi 0, %s47
      %s51 = sphi 0, %s50
      %s67 = sphi 0, %s51
      %s83 = sphi 0, %s85
      %s86 = sphi 0, %s83
      %s87 = sphi 0, %s86
      %s103 = sphi 0, %s87
      %s119 = sphi 0, %s121
      %s122 = sphi 0, %s119
      %s123 = sphi 0, %s122
      %s139 = sphi 0, %s123
      %s143 = sphi 0, %s143
      %s145 = sphi 0, %s143
      %s146 = sphi 0, %s145
      %s160 = sphi 0, %s146
      %s164 = sphi 0, %s164
      %s166 = sphi 0, %s164
      %s167 = sphi 0, %s166
      %s181 = sphi 0, %s167
      %s185 = sphi 0, %s185
      %s187 = sphi 0, %s185
      %s188 = sphi 0, %s187
      %s202 = sphi 0, %s188
      %s206 = sphi 0, %s206
      %s208 = sphi 0, %s206
      %s209 = sphi 0, %s208
      %s223 = sphi 0, %s209
      %s231 = sphi 0, %s233
      %s234 = sphi 0, %s231
      %s235 = sphi 0, %s234
      %s251 = sphi 0, %s235
    $region4: #{tpu_custom_call.1} parent=1 // loop_header_branch
      %26 = sbr.rel (%p24) target = $region8
    $region5: #{tpu_custom_call.1} parent=1 // loop_body
      %s28 = ssub.s32 %s23, 1
      %s29 = ssub.s32 %s23, 2
      %s36 = sadd.s32 1, %s31
      %p37 = scmp.ge.s32.totalorder %s36, 1
      %s38 = scalar_select %p37, 0, %s36
      %s39 = sadd.s32 1, %s30
      %s40 = scalar_select %p37, %s39, %s30
      %p41 = scmp.ge.s32.totalorder %s40, 2
      %s42 = scalar_select %p41, 0, %s40
      %s43 = ssub.s32 %s30, %s42
      %s44 = ssub.s32 %s31, %s38
      %s45 = sor.u32 %s43, %s44
      %p46 = scmp.eq.s32.totalorder %s45, 0
      %s48 = sadd.s32 %s47, 1
      %s49 = scalar_select %p46, %s47, %s48
      %p52 = pneg %p46
      %p53 = scmp.eq.s32.totalorder %s23, 1
      %p54 = por %p52, %p53
      %p55 = scmp.ne.s32.totalorder %s47, %s50
      %p56 = scmp.eq.s32.totalorder %s23, 0
      %p57 = por %p55, %p56
      %p58 = scmp.ne.s32.totalorder %s47, %s50
      %p59 = scmp.eq.s32.totalorder %s28, 1
      %p60 = por %p58, %p59
      %p61 = scmp.ne.s32.totalorder %s50, %s51
      %p62 = scmp.eq.s32.totalorder %s28, 0
      %p63 = por %p61, %p62
      %p64 = scmp.ne.s32.totalorder %s50, %s51
      %p65 = scmp.eq.s32.totalorder %s29, 1
      %p66 = por %p64, %p65
      %p68 = scmp.ne.s32.totalorder %s51, %s67
      %p69 = scmp.eq.s32.totalorder %s29, 0
      %p70 = por %p68, %p69
      %s71 = smul.u32 %s31, 16
      %s72 = ssub.s32 %s71, 1
      %p73 = scmp.gt.s32.totalorder %s72, 0
      %s74 = scalar_select %p73, %s72, 0
      %s75 = smul.u32 %s38, 16
      %s76 = ssub.s32 %s75, 1
      %p77 = scmp.gt.s32.totalorder %s76, 0
      %s78 = scalar_select %p77, %s76, 0
      %s79 = ssub.s32 %s30, %s42
      %s80 = ssub.s32 %s74, %s78
      %s81 = sor.u32 %s79, %s80
      %p82 = scmp.eq.s32.totalorder %s81, 0
      %s84 = sadd.s32 %s83, 1
      %s85 = scalar_select %p82, %s83, %s84
      %p88 = pneg %p82
      %p89 = scmp.eq.s32.totalorder %s23, 1
      %p90 = por %p88, %p89
      %p91 = scmp.ne.s32.totalorder %s83, %s86
      %p92 = scmp.eq.s32.totalorder %s23, 0
      %p93 = por %p91, %p92
      %p94 = scmp.ne.s32.totalorder %s83, %s86
      %p95 = scmp.eq.s32.totalorder %s28, 1
      %p96 = por %p94, %p95
      %p97 = scmp.ne.s32.totalorder %s86, %s87
      %p98 = scmp.eq.s32.totalorder %s28, 0
      %p99 = por %p97, %p98
      %p100 = scmp.ne.s32.totalorder %s86, %s87
      %p101 = scmp.eq.s32.totalorder %s29, 1
      %p102 = por %p100, %p101
      %p104 = scmp.ne.s32.totalorder %s87, %s103
      %p105 = scmp.eq.s32.totalorder %s29, 0
      %p106 = por %p104, %p105
      %s107 = smul.u32 %s31, 16
      %s108 = sadd.s32 %s107, 16
      %p109 = scmp.lt.s32.totalorder %s108, 15
      %s110 = scalar_select %p109, %s108, 15
      %s111 = smul.u32 %s38, 16
      %s112 = sadd.s32 %s111, 16
      %p113 = scmp.lt.s32.totalorder %s112, 15
      %s114 = scalar_select %p113, %s112, 15
      %s115 = ssub.s32 %s30, %s42
      %s116 = ssub.s32 %s110, %s114
      %s117 = sor.u32 %s115, %s116
      %p118 = scmp.eq.s32.totalorder %s117, 0
      %s120 = sadd.s32 %s119, 1
      %s121 = scalar_select %p118, %s119, %s120
      %p124 = pneg %p118
      %p125 = scmp.eq.s32.totalorder %s23, 1
      %p126 = por %p124, %p125
      %p127 = scmp.ne.s32.totalorder %s119, %s122
      %p128 = scmp.eq.s32.totalorder %s23, 0
      %p129 = por %p127, %p128
      %p130 = scmp.ne.s32.totalorder %s119, %s122
      %p131 = scmp.eq.s32.totalorder %s28, 1
      %p132 = por %p130, %p131
      %p133 = scmp.ne.s32.totalorder %s122, %s123
      %p134 = scmp.eq.s32.totalorder %s28, 0
      %p135 = por %p133, %p134
      %p136 = scmp.ne.s32.totalorder %s122, %s123
      %p137 = scmp.eq.s32.totalorder %s29, 1
      %p138 = por %p136, %p137
      %p140 = scmp.ne.s32.totalorder %s123, %s139
      %p141 = scmp.eq.s32.totalorder %s29, 0
      %p142 = por %p140, %p141
      %s144 = sadd.s32 %s143, 1
      %p147 = scmp.eq.s32.totalorder %s23, 1
      %p148 = scmp.ne.s32.totalorder %s143, %s145
      %p149 = scmp.eq.s32.totalorder %s23, 0
      %p150 = por %p148, %p149
      %p151 = scmp.ne.s32.totalorder %s143, %s145
      %p152 = scmp.eq.s32.totalorder %s28, 1
      %p153 = por %p151, %p152
      %p154 = scmp.ne.s32.totalorder %s145, %s146
      %p155 = scmp.eq.s32.totalorder %s28, 0
      %p156 = por %p154, %p155
      %p157 = scmp.ne.s32.totalorder %s145, %s146
      %p158 = scmp.eq.s32.totalorder %s29, 1
      %p159 = por %p157, %p158
      %p161 = scmp.ne.s32.totalorder %s146, %s160
      %p162 = scmp.eq.s32.totalorder %s29, 0
      %p163 = por %p161, %p162
      %s165 = sadd.s32 %s164, 1
      %p168 = scmp.eq.s32.totalorder %s23, 1
      %p169 = scmp.ne.s32.totalorder %s164, %s166
      %p170 = scmp.eq.s32.totalorder %s23, 0
      %p171 = por %p169, %p170
      %p172 = scmp.ne.s32.totalorder %s164, %s166
      %p173 = scmp.eq.s32.totalorder %s28, 1
      %p174 = por %p172, %p173
      %p175 = scmp.ne.s32.totalorder %s166, %s167
      %p176 = scmp.eq.s32.totalorder %s28, 0
      %p177 = por %p175, %p176
      %p178 = scmp.ne.s32.totalorder %s166, %s167
      %p179 = scmp.eq.s32.totalorder %s29, 1
      %p180 = por %p178, %p179
      %p182 = scmp.ne.s32.totalorder %s167, %s181
      %p183 = scmp.eq.s32.totalorder %s29, 0
      %p184 = por %p182, %p183
      %s186 = sadd.s32 %s185, 1
      %p189 = scmp.eq.s32.totalorder %s23, 1
      %p190 = scmp.ne.s32.totalorder %s185, %s187
      %p191 = scmp.eq.s32.totalorder %s23, 0
      %p192 = por %p190, %p191
      %p193 = scmp.ne.s32.totalorder %s185, %s187
      %p194 = scmp.eq.s32.totalorder %s28, 1
      %p195 = por %p193, %p194
      %p196 = scmp.ne.s32.totalorder %s187, %s188
      %p197 = scmp.eq.s32.totalorder %s28, 0
      %p198 = por %p196, %p197
      %p199 = scmp.ne.s32.totalorder %s187, %s188
      %p200 = scmp.eq.s32.totalorder %s29, 1
      %p201 = por %p199, %p200
      %p203 = scmp.ne.s32.totalorder %s188, %s202
      %p204 = scmp.eq.s32.totalorder %s29, 0
      %p205 = por %p203, %p204
      %s207 = sadd.s32 %s206, 1
      %p210 = scmp.eq.s32.totalorder %s23, 1
      %p211 = scmp.ne.s32.totalorder %s206, %s208
      %p212 = scmp.eq.s32.totalorder %s23, 0
      %p213 = por %p211, %p212
      %p214 = scmp.ne.s32.totalorder %s206, %s208
      %p215 = scmp.eq.s32.totalorder %s28, 1
      %p216 = por %p214, %p215
      %p217 = scmp.ne.s32.totalorder %s208, %s209
      %p218 = scmp.eq.s32.totalorder %s28, 0
      %p219 = por %p217, %p218
      %p220 = scmp.ne.s32.totalorder %s208, %s209
      %p221 = scmp.eq.s32.totalorder %s29, 1
      %p222 = por %p220, %p221
      %p224 = scmp.ne.s32.totalorder %s209, %s223
      %p225 = scmp.eq.s32.totalorder %s29, 0
      %p226 = por %p224, %p225
      %s227 = ssub.s32 %s30, %s42
      %s228 = ssub.s32 %s31, %s38
      %s229 = sor.u32 %s227, %s228
      %p230 = scmp.eq.s32.totalorder %s229, 0
      %s232 = sadd.s32 %s231, 1
      %s233 = scalar_select %p230, %s231, %s232
      %p236 = pneg %p230
      %p237 = scmp.eq.s32.totalorder %s23, 1
      %p238 = por %p236, %p237
      %p239 = scmp.ne.s32.totalorder %s231, %s234
      %p240 = scmp.eq.s32.totalorder %s23, 0
      %p241 = por %p239, %p240
      %p242 = scmp.ne.s32.totalorder %s231, %s234
      %p243 = scmp.eq.s32.totalorder %s28, 1
      %p244 = por %p242, %p243
      %p245 = scmp.ne.s32.totalorder %s234, %s235
      %p246 = scmp.eq.s32.totalorder %s28, 0
      %p247 = por %p245, %p246
      %p248 = scmp.ne.s32.totalorder %s234, %s235
      %p249 = scmp.eq.s32.totalorder %s29, 1
      %p250 = por %p248, %p249
      %p252 = scmp.ne.s32.totalorder %s235, %s251
      %p253 = scmp.eq.s32.totalorder %s29, 0
      %p254 = por %p252, %p253
      %p255 = scmp.le.s32.totalorder 1, %s23
      %p256 = scmp.lt.s32.totalorder %s23, 3
      %p257 = pnand %p255, %p256
      %p258 = pneg %p257
      // Predicated region
      $region9: #{tpu_custom_call.1} parent=5 // pred_check
        _
      $region10: #{tpu_custom_call.1} parent=5 // pred_check_branch
        %260 = sbr.rel (%p257) target = $region12
      $region11: #{tpu_custom_call.1} parent=5 // pred_region
        %s261 = ssub.s32 %s23, 1
        // Predicated region
        $region13: #{tpu_custom_call.1} parent=11 // pred_check
          %p262 = pneg %p156
        $region14: #{tpu_custom_call.1} parent=11 // pred_check_branch
          %264 = sbr.rel (%p262) target = $region16
        $region15: #{tpu_custom_call.1} parent=11 // pred_region
          %s266 = ssub.s32 1024, 1024
          %267 = vsyncadd [#allocation10], %s266
          %s268 = sshll.u32 [#allocation9], 4
          %s269 = int_to_ptr.vmem [resolvable:$true] %s268
          %274 = dma.hbm_to_vmem [thread:$0]  %s3, 1024, %s269, [#allocation10], 64, 64, 4
        $region16: #{tpu_custom_call.1} parent=11 // pred_fallthru
          _
        // Predicated region
        $region17: #{tpu_custom_call.1} parent=11 // pred_check
          %p275 = pneg %p177
        $region18: #{tpu_custom_call.1} parent=11 // pred_check_branch
          %277 = sbr.rel (%p275) target = $region20
        $region19: #{tpu_custom_call.1} parent=11 // pred_region
          _
        $region20: #{tpu_custom_call.1} parent=11 // pred_fallthru
          _
        // Predicated region
        $region21: #{tpu_custom_call.1} parent=11 // pred_check
          %p278 = pneg %p198
        $region22: #{tpu_custom_call.1} parent=11 // pred_check_branch
          %280 = sbr.rel (%p278) target = $region24
        $region23: #{tpu_custom_call.1} parent=11 // pred_region
          %s282 = ssub.s32 9216, 9216
          %283 = vsyncadd [#allocation10], %s282
          %s284 = sshll.u32 [#allocation11], 4
          %s285 = int_to_ptr.vmem [resolvable:$true] %s284
          %290 = dma.hbm_to_vmem [thread:$0]  %s5, 9216, %s285, [#allocation10], 64, 64, 4
        $region24: #{tpu_custom_call.1} parent=11 // pred_fallthru
          _
        // Predicated region
        $region25: #{tpu_custom_call.1} parent=11 // pred_check
          %p291 = pneg %p219
        $region26: #{tpu_custom_call.1} parent=11 // pred_check_branch
          %293 = sbr.rel (%p291) target = $region28
        $region27: #{tpu_custom_call.1} parent=11 // pred_region
          _
        $region28: #{tpu_custom_call.1} parent=11 // pred_fallthru
          _
      $region12: #{tpu_custom_call.1} parent=5 // pred_fallthru
        _
      %p294 = scmp.lt.s32.totalorder %s23, 2
      // Predicated region
      $region29: #{tpu_custom_call.1} parent=5 // pred_check
        %p295 = pneg %p294
      $region30: #{tpu_custom_call.1} parent=5 // pred_check_branch
        %297 = sbr.rel (%p295) target = $region32
      $region31: #{tpu_custom_call.1} parent=5 // pred_region
        // Predicated region
        $region33: #{tpu_custom_call.1} parent=31 // pred_check
          %p298 = pneg %p57
        $region34: #{tpu_custom_call.1} parent=31 // pred_check_branch
          %300 = sbr.rel (%p298) target = $region36
        $region35: #{tpu_custom_call.1} parent=31 // pred_region
          %s301 = sand.u32 %s47, 1
          %s302 = scalar_lea.sflag [#allocation4], %s301
          %s303 = sand.u32 %s47, 1
          %s304 = smul.addr %s303, 128
          %s305 = scalar_lea.vmem [#allocation3], %s304
          %s306 = smul.u32 16, %s31
          %s308 = ssub.s32 2048, 2048
          %309 = vsyncadd %s302, %s308
          %s310 = smul.addr %s306, 2
          %s311 = smul.addr %s30, 32
          %s312 = sadd.s32 %s310, %s311
          %s313 = smul.addr %s312, 64
          %s314 = scalar_lea.hbm %s0, %s313
          %s315 = sshll.u32 %s305, 4
          %s316 = int_to_ptr.vmem [resolvable:$true] %s315
          %321 = dma.hbm_to_vmem [thread:$0]  %s314, 2048, %s316, %s302, 64, 64, 4
        $region36: #{tpu_custom_call.1} parent=31 // pred_fallthru
          _
        // Predicated region
        $region37: #{tpu_custom_call.1} parent=31 // pred_check
          %p322 = pneg %p93
        $region38: #{tpu_custom_call.1} parent=31 // pred_check_branch
          %324 = sbr.rel (%p322) target = $region40
        $region39: #{tpu_custom_call.1} parent=31 // pred_region
          %s325 = sand.u32 %s23, 1
          %s326 = scalar_lea.sflag [#allocation7], %s325
          %s327 = sand.u32 %s83, 1
          %s328 = smul.addr %s327, 8
          %s329 = scalar_lea.vmem [#allocation6], %s328
          %s330 = smul.u32 %s31, 16
          %s331 = ssub.s32 %s330, 1
          %p332 = scmp.gt.s32.totalorder %s331, 0
          %s333 = scalar_select %p332, %s331, 0
          %s335 = ssub.s32 128, 128
          %336 = vsyncadd %s326, %s335
          %s337 = smul.addr %s333, 2
          %s338 = smul.addr %s30, 32
          %s339 = sadd.s32 %s337, %s338
          %s340 = smul.addr %s339, 64
          %s341 = scalar_lea.hbm %s1, %s340
          %s342 = sshll.u32 %s329, 4
          %s343 = int_to_ptr.vmem [resolvable:$true] %s342
          %348 = dma.hbm_to_vmem [thread:$0]  %s341, 128, %s343, %s326, 64, 64, 4
        $region40: #{tpu_custom_call.1} parent=31 // pred_fallthru
          _
        // Predicated region
        $region41: #{tpu_custom_call.1} parent=31 // pred_check
          %p349 = pneg %p129
        $region42: #{tpu_custom_call.1} parent=31 // pred_check_branch
          %351 = sbr.rel (%p349) target = $region44
        $region43: #{tpu_custom_call.1} parent=31 // pred_region
          %s352 = sand.u32 %s23, 1
          %s353 = scalar_lea.sflag [#allocation7], %s352
          %s354 = sand.u32 %s119, 1
          %s355 = smul.addr %s354, 8
          %s356 = scalar_lea.vmem [#allocation8], %s355
          %s357 = smul.u32 %s31, 16
          %s358 = sadd.s32 %s357, 16
          %p359 = scmp.lt.s32.totalorder %s358, 15
          %s360 = scalar_select %p359, %s358, 15
          %s362 = ssub.s32 128, 128
          %363 = vsyncadd %s353, %s362
          %s364 = smul.addr %s360, 2
          %s365 = smul.addr %s30, 32
          %s366 = sadd.s32 %s364, %s365
          %s367 = smul.addr %s366, 64
          %s368 = scalar_lea.hbm %s2, %s367
          %s369 = sshll.u32 %s356, 4
          %s370 = int_to_ptr.vmem [resolvable:$true] %s369
          %375 = dma.hbm_to_vmem [thread:$0]  %s368, 128, %s370, %s353, 64, 64, 4
        $region44: #{tpu_custom_call.1} parent=31 // pred_fallthru
          _
      $region32: #{tpu_custom_call.1} parent=5 // pred_fallthru
        _
      %p376 = scmp.le.s32.totalorder 1, %s23
      %p377 = scmp.lt.s32.totalorder %s23, 3
      %p378 = pnand %p376, %p377
      %p379 = pneg %p378
      // Predicated region
      $region45: #{tpu_custom_call.1} parent=5 // pred_check
        _
      $region46: #{tpu_custom_call.1} parent=5 // pred_check_branch
        %381 = sbr.rel (%p378) target = $region48
      $region47: #{tpu_custom_call.1} parent=5 // pred_region
        %s382 = ssub.s32 %s23, 1
        %s383 = sand.u32 %s50, 1
        %s384 = scalar_lea.sflag [#allocation4], %s383
        %s385 = sand.u32 %s50, 1
        %s386 = smul.addr %s385, 128
        %s387 = scalar_lea.vmem [#allocation3], %s386
        // Predicated region
        $region49: #{tpu_custom_call.1} parent=47 // pred_check
          %p388 = pneg %p63
        $region50: #{tpu_custom_call.1} parent=47 // pred_check_branch
          %390 = sbr.rel (%p388) target = $region52
        $region51: #{tpu_custom_call.1} parent=47 // pred_region
          %391 = dma.done %s384, 2048
        $region52: #{tpu_custom_call.1} parent=47 // pred_fallthru
          _
        %s392 = sand.u32 %s28, 1
        %s393 = scalar_lea.sflag [#allocation7], %s392
        %s394 = sand.u32 %s86, 1
        %s395 = smul.addr %s394, 8
        %s396 = scalar_lea.vmem [#allocation6], %s395
        // Predicated region
        $region53: #{tpu_custom_call.1} parent=47 // pred_check
          %p397 = pneg %p99
        $region54: #{tpu_custom_call.1} parent=47 // pred_check_branch
          %399 = sbr.rel (%p397) target = $region56
        $region55: #{tpu_custom_call.1} parent=47 // pred_region
          %400 = dma.done %s393, 128
        $region56: #{tpu_custom_call.1} parent=47 // pred_fallthru
          _
        %s401 = sand.u32 %s28, 1
        %s402 = scalar_lea.sflag [#allocation7], %s401
        %s403 = sand.u32 %s122, 1
        %s404 = smul.addr %s403, 8
        %s405 = scalar_lea.vmem [#allocation8], %s404
        // Predicated region
        $region57: #{tpu_custom_call.1} parent=47 // pred_check
          %p406 = pneg %p135
        $region58: #{tpu_custom_call.1} parent=47 // pred_check_branch
          %408 = sbr.rel (%p406) target = $region60
        $region59: #{tpu_custom_call.1} parent=47 // pred_region
          %409 = dma.done %s402, 128
        $region60: #{tpu_custom_call.1} parent=47 // pred_fallthru
          _
        // Predicated region
        $region61: #{tpu_custom_call.1} parent=47 // pred_check
          %p410 = pneg %p156
        $region62: #{tpu_custom_call.1} parent=47 // pred_check_branch
          %412 = sbr.rel (%p410) target = $region64
        $region63: #{tpu_custom_call.1} parent=47 // pred_region
          %413 = dma.done [#allocation10], 1024
        $region64: #{tpu_custom_call.1} parent=47 // pred_fallthru
          _
        // Predicated region
        $region65: #{tpu_custom_call.1} parent=47 // pred_check
          %p414 = pneg %p198
        $region66: #{tpu_custom_call.1} parent=47 // pred_check_branch
          %416 = sbr.rel (%p414) target = $region68
        $region67: #{tpu_custom_call.1} parent=47 // pred_region
          %417 = dma.done [#allocation10], 9216
        $region68: #{tpu_custom_call.1} parent=47 // pred_fallthru
          _
        %s418 = sand.u32 %s50, 1
        %s419 = scalar_lea.sflag [#allocation4], %s418
        %s420 = sand.u32 %s50, 1
        %s421 = smul.addr %s420, 128
        %s422 = scalar_lea.vmem [#allocation3], %s421
        %p423 = pneg %p63
        %p424 = pneg %p60
        %s425 = sand.u32 %s28, 1
        %s426 = scalar_lea.sflag [#allocation7], %s425
        %s427 = sand.u32 %s86, 1
        %s428 = smul.addr %s427, 8
        %s429 = scalar_lea.vmem [#allocation6], %s428
        %p430 = pneg %p99
        %p431 = pneg %p96
        %s432 = sand.u32 %s28, 1
        %s433 = scalar_lea.sflag [#allocation7], %s432
        %s434 = sand.u32 %s122, 1
        %s435 = smul.addr %s434, 8
        %s436 = scalar_lea.vmem [#allocation8], %s435
        %p437 = pneg %p135
        %p438 = pneg %p132
        %p439 = pneg %p156
        %p440 = pneg %p153
        %p441 = pneg %p177
        %p442 = pneg %p174
        %p443 = pneg %p198
        %p444 = pneg %p195
        %p445 = pneg %p219
        %p446 = pneg %p216
        %p447 = pneg %p247
        %p448 = pneg %p244
        %s449 = sand.u32 %s234, 1
        %s450 = scalar_lea.sflag [#allocation5], %s449
        %s451 = sand.u32 %s234, 1
        %s452 = smul.addr %s451, 128
        %s453 = scalar_lea.vmem [#allocation12], %s452
        %s454 = smul.u32 16, %s33
        %s455 = smul.u32 %s33, 16
        %s456 = ssub.s32 %s455, 1
        %p457 = scmp.gt.s32.totalorder %s456, 0
        %s458 = scalar_select %p457, %s456, 0
        %s459 = smul.u32 %s33, 16
        %s460 = sadd.s32 %s459, 16
        %p461 = scmp.lt.s32.totalorder %s460, 15
        %s462 = scalar_select %p461, %s460, 15
        %s463 = smul.u32 16, %s33
        %v465 = vld [vmem:[%s396] sm:$0xf]
        %v466 = vld [vmem:[%s396 + $0x4] sm:$0xf]
        %v467 = vld [vmem:[%s387] sm:$0xf]
        %v468 = vld [vmem:[%s387 + $0x4] sm:$0xf]
        %v469 = vld [vmem:[%s387 + $0x8] sm:$0xf]
        %v470 = vld [vmem:[%s387 + $0xc] sm:$0xf]
        %v471 = vld [vmem:[%s387 + $0x10] sm:$0xf]
        %v472 = vld [vmem:[%s387 + $0x14] sm:$0xf]
        %v473 = vld [vmem:[%s387 + $0x18] sm:$0xf]
        %v474 = vld [vmem:[%s387 + $0x1c] sm:$0xf]
        %v475 = vld [vmem:[%s387 + $0x20] sm:$0xf]
        %v476 = vld [vmem:[%s387 + $0x24] sm:$0xf]
        %v477 = vld [vmem:[%s387 + $0x28] sm:$0xf]
        %v478 = vld [vmem:[%s387 + $0x2c] sm:$0xf]
        %v479 = vld [vmem:[%s387 + $0x30] sm:$0xf]
        %v480 = vld [vmem:[%s387 + $0x34] sm:$0xf]
        %v481 = vld [vmem:[%s387 + $0x38] sm:$0xf]
        %v482 = vld [vmem:[%s387 + $0x3c] sm:$0xf]
        %v483 = vld [vmem:[%s387 + $0x40] sm:$0xf]
        %v484 = vld [vmem:[%s387 + $0x44] sm:$0xf]
        %v485 = vld [vmem:[%s387 + $0x48] sm:$0xf]
        %v486 = vld [vmem:[%s387 + $0x4c] sm:$0xf]
        %v487 = vld [vmem:[%s387 + $0x50] sm:$0xf]
        %v488 = vld [vmem:[%s387 + $0x54] sm:$0xf]
        %v489 = vld [vmem:[%s387 + $0x58] sm:$0xf]
        %v490 = vld [vmem:[%s387 + $0x5c] sm:$0xf]
        %v491 = vld [vmem:[%s387 + $0x60] sm:$0xf]
        %v492 = vld [vmem:[%s387 + $0x64] sm:$0xf]
        %v493 = vld [vmem:[%s387 + $0x68] sm:$0xf]
        %v494 = vld [vmem:[%s387 + $0x6c] sm:$0xf]
        %v495 = vld [vmem:[%s387 + $0x70] sm:$0xf]
        %v496 = vld [vmem:[%s387 + $0x74] sm:$0xf]
        %v497 = vld [vmem:[%s387 + $0x78] sm:$0xf]
        %v498 = vld [vmem:[%s387 + $0x7c] sm:$0xf]
        %v499 = vld [vmem:[%s405] sm:$0xf]
        %v500 = vld [vmem:[%s405 + $0x4] sm:$0xf]
        %v501 = vld [vmem:[#allocation9] sm:$0xf]
        %v502 = vld [vmem:[#allocation9 + $0x4] sm:$0xf]
        %v503 = vld [vmem:[#allocation9 + $0x8] sm:$0xf]
        %v504 = vld [vmem:[#allocation9 + $0xc] sm:$0xf]
        %v505 = vld [vmem:[#allocation9 + $0x10] sm:$0xf]
        %v506 = vld [vmem:[#allocation9 + $0x14] sm:$0xf]
        %v507 = vld [vmem:[#allocation9 + $0x18] sm:$0xf]
        %v508 = vld [vmem:[#allocation9 + $0x1c] sm:$0xf]
        %v509 = vld [vmem:[#allocation9 + $0x20] sm:$0xf]
        %v510 = vld [vmem:[#allocation9 + $0x24] sm:$0xf]
        %v511 = vld [vmem:[#allocation9 + $0x28] sm:$0xf]
        %v512 = vld [vmem:[#allocation9 + $0x2c] sm:$0xf]
        %v513 = vld [vmem:[#allocation9 + $0x30] sm:$0xf]
        %v514 = vld [vmem:[#allocation9 + $0x34] sm:$0xf]
        %v515 = vld [vmem:[#allocation9 + $0x38] sm:$0xf]
        %v516 = vld [vmem:[#allocation9 + $0x3c] sm:$0xf]
        %v517 = vld [vmem:[%s4] sm:$0x1]
        %v519 = vlaneseq
        %v520 = vshrl.u32 %v519, 7
        %v521 = vsub.s32 0, %v520
        %v522 = vrot.slane %v517, %v521
        %v560 = vunpack.c.l.b16 %v465
        %v561 = vunpack.c.l.b16 %v466
        %v562 = vunpack.c.l.b16 %v467
        %v563 = vunpack.c.l.b16 %v468
        %v564 = vunpack.c.l.b16 %v469
        %v565 = vunpack.c.l.b16 %v470
        %v566 = vunpack.c.l.b16 %v471
        %v567 = vunpack.c.l.b16 %v472
        %v568 = vunpack.c.l.b16 %v473
        %v569 = vunpack.c.l.b16 %v474
        %v570 = vunpack.c.l.b16 %v475
        %v571 = vunpack.c.l.b16 %v476
        %v572 = vunpack.c.l.b16 %v477
        %v573 = vunpack.c.l.b16 %v478
        %v574 = vunpack.c.l.b16 %v479
        %v575 = vunpack.c.l.b16 %v480
        %v576 = vunpack.c.l.b16 %v481
        %v577 = vunpack.c.l.b16 %v482
        %v578 = vunpack.c.l.b16 %v483
        %v579 = vunpack.c.l.b16 %v484
        %v580 = vunpack.c.l.b16 %v485
        %v581 = vunpack.c.l.b16 %v486
        %v582 = vunpack.c.l.b16 %v487
        %v583 = vunpack.c.l.b16 %v488
        %v584 = vunpack.c.l.b16 %v489
        %v585 = vunpack.c.l.b16 %v490
        %v586 = vunpack.c.l.b16 %v491
        %v587 = vunpack.c.l.b16 %v492
        %v588 = vunpack.c.l.b16 %v493
        %v589 = vunpack.c.l.b16 %v494
        %v590 = vunpack.c.l.b16 %v495
        %v591 = vunpack.c.l.b16 %v496
        %v592 = vunpack.c.l.b16 %v497
        %v593 = vunpack.c.l.b16 %v498
        %v594 = vunpack.c.l.b16 %v499
        %v595 = vunpack.c.l.b16 %v500
        %v596 = vpack.c.b16 %v561, %v560
        %v597 = vpack.c.b16 %v563, %v562
        %v598 = vpack.c.b16 %v565, %v564
        %v599 = vpack.c.b16 %v567, %v566
        %v600 = vpack.c.b16 %v569, %v568
        %v601 = vpack.c.b16 %v571, %v570
        %v602 = vpack.c.b16 %v573, %v572
        %v603 = vpack.c.b16 %v575, %v574
        %v604 = vpack.c.b16 %v577, %v576
        %v605 = vpack.c.b16 %v579, %v578
        %v606 = vpack.c.b16 %v581, %v580
        %v607 = vpack.c.b16 %v583, %v582
        %v608 = vpack.c.b16 %v585, %v584
        %v609 = vpack.c.b16 %v587, %v586
        %v610 = vpack.c.b16 %v589, %v588
        %v611 = vpack.c.b16 %v591, %v590
        %v612 = vpack.c.b16 %v593, %v592
        %v613 = vpack.c.b16 %v595, %v594
        %v648 = vunpack.c.l.b16 %v501
        %v649 = vunpack.c.l.b16 %v502
        %v650 = vunpack.c.l.b16 %v503
        %v651 = vunpack.c.l.b16 %v504
        %v652 = vunpack.c.l.b16 %v505
        %v653 = vunpack.c.l.b16 %v506
        %v654 = vunpack.c.l.b16 %v507
        %v655 = vunpack.c.l.b16 %v508
        %v656 = vunpack.c.l.b16 %v509
        %v657 = vunpack.c.l.b16 %v510
        %v658 = vunpack.c.l.b16 %v511
        %v659 = vunpack.c.l.b16 %v512
        %v660 = vunpack.c.l.b16 %v513
        %v661 = vunpack.c.l.b16 %v514
        %v662 = vunpack.c.l.b16 %v515
        %v663 = vunpack.c.l.b16 %v516
        %v664 = vpack.c.b16 %v649, %v648
        %v665 = vpack.c.b16 %v651, %v650
        %v666 = vpack.c.b16 %v653, %v652
        %v667 = vpack.c.b16 %v655, %v654
        %v668 = vpack.c.b16 %v657, %v656
        %v669 = vpack.c.b16 %v659, %v658
        %v670 = vpack.c.b16 %v661, %v660
        %v671 = vpack.c.b16 %v663, %v662
        %680 = vmatprep.subr.bf16.mxu0 0
        %681 = vmatpush1.bf16.msra.mxu0 %v664
        %682 = vmatprep.subr.bf16.mxu0 0
        %683 = vmatpush1.bf16.msra.mxu0 %v665
        %684 = vmatprep.subr.bf16.mxu0 0
        %685 = vmatpush1.bf16.msra.mxu0 %v666
        %686 = vmatprep.subr.bf16.mxu0 0
        %687 = vmatpush1.bf16.msra.mxu0 %v667
        %688 = vmatprep.subr.bf16.mxu0 0
        %689 = vmatpush1.bf16.msra.mxu0 %v668
        %690 = vmatprep.subr.bf16.mxu0 0
        %691 = vmatpush1.bf16.msra.mxu0 %v669
        %692 = vmatprep.subr.bf16.mxu0 0
        %693 = vmatpush1.bf16.msra.mxu0 %v670
        %694 = vmatprep.subr.bf16.mxu0 0
        %695 = vmatpush1.bf16.msra.mxu0 %v671
        %696 = vmatprep.subr.bf16.mxu0 0
        %697 = vmatpush1.bf16.msra.mxu0 0
        %698 = vmatprep.subr.bf16.mxu0 0
        %699 = vmatpush1.bf16.msra.mxu0 0
        %700 = vmatprep.subr.bf16.mxu0 0
        %701 = vmatpush1.bf16.msra.mxu0 0
        %702 = vmatprep.subr.bf16.mxu0 0
        %703 = vmatpush1.bf16.msra.mxu0 0
        %704 = vmatprep.subr.bf16.mxu0 0
        %705 = vmatpush1.bf16.msra.mxu0 0
        %706 = vmatprep.subr.bf16.mxu0 0
        %707 = vmatpush1.bf16.msra.mxu0 0
        %708 = vmatprep.subr.bf16.mxu0 0
        %709 = vmatpush1.bf16.msra.mxu0 0
        %710 = vmatprep.subr.bf16.mxu0 0
        %711 = vmatpush1.bf16.msra.mxu0 0
        %712 = vmatprep.mubr.bf16.mxu0 0
        %713 = vmatmul.mubr.bf16.gmra.mrb[0].mxu0 %v596
        %v714 = vpop.f32.mrb[0].mxu0
        %v715 = vadd.f32 %v522, %v714
        %v716 = vpop.f32.mrb[0].mxu0
        %v717 = vpop.f32.mrb[0].mxu0
        %v718 = vadd.f32 %v522, %v717
        %v719 = vpop.f32.mrb[0].mxu0
        %720 = vmatprep.mubr.bf16.mxu0 0
        %721 = vmatmul.mubr.bf16.gmra.mrb[0].mxu0 %v597
        %v722 = vpop.f32.mrb[0].mxu0
        %v723 = vadd.f32 %v522, %v722
        %v724 = vpop.f32.mrb[0].mxu0
        %v725 = vpop.f32.mrb[0].mxu0
        %v726 = vadd.f32 %v522, %v725
        %v727 = vpop.f32.mrb[0].mxu0
        %728 = vmatprep.mubr.bf16.mxu0 0
        %729 = vmatmul.mubr.bf16.gmra.mrb[0].mxu0 %v598
        %v730 = vpop.f32.mrb[0].mxu0
        %v731 = vadd.f32 %v522, %v730
        %v732 = vpop.f32.mrb[0].mxu0
        %v733 = vpop.f32.mrb[0].mxu0
        %v734 = vadd.f32 %v522, %v733
        %v735 = vpop.f32.mrb[0].mxu0
        %736 = vmatprep.mubr.bf16.mxu0 0
        %737 = vmatmul.mubr.bf16.gmra.mrb[0].mxu0 %v599
        %v738 = vpop.f32.mrb[0].mxu0
        %v739 = vadd.f32 %v522, %v738
        %v740 = vpop.f32.mrb[0].mxu0
        %v741 = vpop.f32.mrb[0].mxu0
        %v742 = vadd.f32 %v522, %v741
        %v743 = vpop.f32.mrb[0].mxu0
        %744 = vmatprep.mubr.bf16.mxu0 0
        %745 = vmatmul.mubr.bf16.gmra.mrb[0].mxu0 %v600
        %v746 = vpop.f32.mrb[0].mxu0
        %v747 = vadd.f32 %v522, %v746
        %v748 = vpop.f32.mrb[0].mxu0
        %v749 = vpop.f32.mrb[0].mxu0
        %v750 = vadd.f32 %v522, %v749
        %v751 = vpop.f32.mrb[0].mxu0
        %752 = vmatprep.mubr.bf16.mxu0 0
        %753 = vmatmul.mubr.bf16.gmra.mrb[0].mxu0 %v601
        %v754 = vpop.f32.mrb[0].mxu0
        %v755 = vadd.f32 %v522, %v754
        %v756 = vpop.f32.mrb[0].mxu0
        %v757 = vpop.f32.mrb[0].mxu0
        %v758 = vadd.f32 %v522, %v757
        %v759 = vpop.f32.mrb[0].mxu0
        %760 = vmatprep.mubr.bf16.mxu0 0
        %761 = vmatmul.mubr.bf16.gmra.mrb[0].mxu0 %v602
        %v762 = vpop.f32.mrb[0].mxu0
        %v763 = vadd.f32 %v522, %v762
        %v764 = vpop.f32.mrb[0].mxu0
        %v765 = vpop.f32.mrb[0].mxu0
        %v766 = vadd.f32 %v522, %v765
        %v767 = vpop.f32.mrb[0].mxu0
        %768 = vmatprep.mubr.bf16.mxu0 0
        %769 = vmatmul.mubr.bf16.gmra.mrb[0].mxu0 %v603
        %v770 = vpop.f32.mrb[0].mxu0
        %v771 = vadd.f32 %v522, %v770
        %v772 = vpop.f32.mrb[0].mxu0
        %v773 = vpop.f32.mrb[0].mxu0
        %v774 = vadd.f32 %v522, %v773
        %v775 = vpop.f32.mrb[0].mxu0
        %776 = vmatprep.mubr.bf16.mxu0 0
        %777 = vmatmul.mubr.bf16.gmra.mrb[0].mxu0 %v604
        %v778 = vpop.f32.mrb[0].mxu0
        %v779 = vadd.f32 %v522, %v778
        %v780 = vpop.f32.mrb[0].mxu0
        %v781 = vpop.f32.mrb[0].mxu0
        %v782 = vadd.f32 %v522, %v781
        %v783 = vpop.f32.mrb[0].mxu0
        %784 = vmatprep.mubr.bf16.mxu0 0
        %785 = vmatmul.mubr.bf16.gmra.mrb[0].mxu0 %v605
        %v786 = vpop.f32.mrb[0].mxu0
        %v787 = vadd.f32 %v522, %v786
        %v788 = vpop.f32.mrb[0].mxu0
        %v789 = vpop.f32.mrb[0].mxu0
        %v790 = vadd.f32 %v522, %v789
        %v791 = vpop.f32.mrb[0].mxu0
        %792 = vmatprep.mubr.bf16.mxu0 0
        %793 = vmatmul.mubr.bf16.gmra.mrb[0].mxu0 %v606
        %v794 = vpop.f32.mrb[0].mxu0
        %v795 = vadd.f32 %v522, %v794
        %v796 = vpop.f32.mrb[0].mxu0
        %v797 = vpop.f32.mrb[0].mxu0
        %v798 = vadd.f32 %v522, %v797
        %v799 = vpop.f32.mrb[0].mxu0
        %800 = vmatprep.mubr.bf16.mxu0 0
        %801 = vmatmul.mubr.bf16.gmra.mrb[0].mxu0 %v607
        %v802 = vpop.f32.mrb[0].mxu0
        %v803 = vadd.f32 %v522, %v802
        %v804 = vpop.f32.mrb[0].mxu0
        %v805 = vpop.f32.mrb[0].mxu0
        %v806 = vadd.f32 %v522, %v805
        %v807 = vpop.f32.mrb[0].mxu0
        %808 = vmatprep.mubr.bf16.mxu0 0
        %809 = vmatmul.mubr.bf16.gmra.mrb[0].mxu0 %v608
        %v810 = vpop.f32.mrb[0].mxu0
        %v811 = vadd.f32 %v522, %v810
        %v812 = vpop.f32.mrb[0].mxu0
        %v813 = vpop.f32.mrb[0].mxu0
        %v814 = vadd.f32 %v522, %v813
        %v815 = vpop.f32.mrb[0].mxu0
        %816 = vmatprep.mubr.bf16.mxu0 0
        %817 = vmatmul.mubr.bf16.gmra.mrb[0].mxu0 %v609
        %v818 = vpop.f32.mrb[0].mxu0
        %v819 = vadd.f32 %v522, %v818
        %v820 = vpop.f32.mrb[0].mxu0
        %v821 = vpop.f32.mrb[0].mxu0
        %v822 = vadd.f32 %v522, %v821
        %v823 = vpop.f32.mrb[0].mxu0
        %824 = vmatprep.mubr.bf16.mxu0 0
        %825 = vmatmul.mubr.bf16.gmra.mrb[0].mxu0 %v610
        %v826 = vpop.f32.mrb[0].mxu0
        %v827 = vadd.f32 %v522, %v826
        %v828 = vpop.f32.mrb[0].mxu0
        %v829 = vpop.f32.mrb[0].mxu0
        %v830 = vadd.f32 %v522, %v829
        %v831 = vpop.f32.mrb[0].mxu0
        %832 = vmatprep.mubr.bf16.mxu0 0
        %833 = vmatmul.mubr.bf16.gmra.mrb[0].mxu0 %v611
        %v834 = vpop.f32.mrb[0].mxu0
        %v835 = vadd.f32 %v522, %v834
        %v836 = vpop.f32.mrb[0].mxu0
        %v837 = vpop.f32.mrb[0].mxu0
        %v838 = vadd.f32 %v522, %v837
        %v839 = vpop.f32.mrb[0].mxu0
        %840 = vmatprep.mubr.bf16.mxu0 0
        %841 = vmatmul.mubr.bf16.gmra.mrb[0].mxu0 %v612
        %v842 = vpop.f32.mrb[0].mxu0
        %v843 = vadd.f32 %v522, %v842
        %v844 = vpop.f32.mrb[0].mxu0
        %v845 = vpop.f32.mrb[0].mxu0
        %v846 = vadd.f32 %v522, %v845
        %v847 = vpop.f32.mrb[0].mxu0
        %848 = vmatprep.mubr.bf16.mxu0 0
        %849 = vmatmul.mubr.bf16.gmra.mrb[0].mxu0 %v613
        %v850 = vpop.f32.mrb[0].mxu0
        %v851 = vadd.f32 %v522, %v850
        %v852 = vpop.f32.mrb[0].mxu0
        %v853 = vpop.f32.mrb[0].mxu0
        %v854 = vadd.f32 %v522, %v853
        %v855 = vpop.f32.mrb[0].mxu0
        %856 = vdwg.mxu0
        %vm857 = vcmp.gt.f32.partialorder %v715, 0.0
        %vm858 = vcmp.gt.f32.partialorder %v718, 0.0
        %vm859 = vcmp.gt.f32.partialorder %v723, 0.0
        %vm860 = vcmp.gt.f32.partialorder %v726, 0.0
        %vm861 = vcmp.gt.f32.partialorder %v731, 0.0
        %vm862 = vcmp.gt.f32.partialorder %v734, 0.0
        %vm863 = vcmp.gt.f32.partialorder %v739, 0.0
        %vm864 = vcmp.gt.f32.partialorder %v742, 0.0
        %vm865 = vcmp.gt.f32.partialorder %v747, 0.0
        %vm866 = vcmp.gt.f32.partialorder %v750, 0.0
        %vm867 = vcmp.gt.f32.partialorder %v755, 0.0
        %vm868 = vcmp.gt.f32.partialorder %v758, 0.0
        %vm869 = vcmp.gt.f32.partialorder %v763, 0.0
        %vm870 = vcmp.gt.f32.partialorder %v766, 0.0
        %vm871 = vcmp.gt.f32.partialorder %v771, 0.0
        %vm872 = vcmp.gt.f32.partialorder %v774, 0.0
        %vm873 = vcmp.gt.f32.partialorder %v779, 0.0
        %vm874 = vcmp.gt.f32.partialorder %v782, 0.0
        %vm875 = vcmp.gt.f32.partialorder %v787, 0.0
        %vm876 = vcmp.gt.f32.partialorder %v790, 0.0
        %vm877 = vcmp.gt.f32.partialorder %v795, 0.0
        %vm878 = vcmp.gt.f32.partialorder %v798, 0.0
        %vm879 = vcmp.gt.f32.partialorder %v803, 0.0
        %vm880 = vcmp.gt.f32.partialorder %v806, 0.0
        %vm881 = vcmp.gt.f32.partialorder %v811, 0.0
        %vm882 = vcmp.gt.f32.partialorder %v814, 0.0
        %vm883 = vcmp.gt.f32.partialorder %v819, 0.0
        %vm884 = vcmp.gt.f32.partialorder %v822, 0.0
        %vm885 = vcmp.gt.f32.partialorder %v827, 0.0
        %vm886 = vcmp.gt.f32.partialorder %v830, 0.0
        %vm887 = vcmp.gt.f32.partialorder %v835, 0.0
        %vm888 = vcmp.gt.f32.partialorder %v838, 0.0
        %vm889 = vcmp.gt.f32.partialorder %v843, 0.0
        %vm890 = vcmp.gt.f32.partialorder %v846, 0.0
        %vm891 = vcmp.gt.f32.partialorder %v851, 0.0
        %vm892 = vcmp.gt.f32.partialorder %v854, 0.0
        %v893 = vmul.f32 %v715, 0.1015625
        %v894 = vmul.f32 %v718, 0.1015625
        %v895 = vmul.f32 %v723, 0.1015625
        %v896 = vmul.f32 %v726, 0.1015625
        %v897 = vmul.f32 %v731, 0.1015625
        %v898 = vmul.f32 %v734, 0.1015625
        %v899 = vmul.f32 %v739, 0.1015625
        %v900 = vmul.f32 %v742, 0.1015625
        %v901 = vmul.f32 %v747, 0.1015625
        %v902 = vmul.f32 %v750, 0.1015625
        %v903 = vmul.f32 %v755, 0.1015625
        %v904 = vmul.f32 %v758, 0.1015625
        %v905 = vmul.f32 %v763, 0.1015625
        %v906 = vmul.f32 %v766, 0.1015625
        %v907 = vmul.f32 %v771, 0.1015625
        %v908 = vmul.f32 %v774, 0.1015625
        %v909 = vmul.f32 %v779, 0.1015625
        %v910 = vmul.f32 %v782, 0.1015625
        %v911 = vmul.f32 %v787, 0.1015625
        %v912 = vmul.f32 %v790, 0.1015625
        %v913 = vmul.f32 %v795, 0.1015625
        %v914 = vmul.f32 %v798, 0.1015625
        %v915 = vmul.f32 %v803, 0.1015625
        %v916 = vmul.f32 %v806, 0.1015625
        %v917 = vmul.f32 %v811, 0.1015625
        %v918 = vmul.f32 %v814, 0.1015625
        %v919 = vmul.f32 %v819, 0.1015625
        %v920 = vmul.f32 %v822, 0.1015625
        %v921 = vmul.f32 %v827, 0.1015625
        %v922 = vmul.f32 %v830, 0.1015625
        %v923 = vmul.f32 %v835, 0.1015625
        %v924 = vmul.f32 %v838, 0.1015625
        %v925 = vmul.f32 %v843, 0.1015625
        %v926 = vmul.f32 %v846, 0.1015625
        %v927 = vmul.f32 %v851, 0.1015625
        %v928 = vmul.f32 %v854, 0.1015625
        %v929 = vsel %vm857, %v715, %v893
        %v930 = vsel %vm858, %v718, %v894
        %v931 = vsel %vm859, %v723, %v895
        %v932 = vsel %vm860, %v726, %v896
        %v933 = vsel %vm861, %v731, %v897
        %v934 = vsel %vm862, %v734, %v898
        %v935 = vsel %vm863, %v739, %v899
        %v936 = vsel %vm864, %v742, %v900
        %v937 = vsel %vm865, %v747, %v901
        %v938 = vsel %vm866, %v750, %v902
        %v939 = vsel %vm867, %v755, %v903
        %v940 = vsel %vm868, %v758, %v904
        %v941 = vsel %vm869, %v763, %v905
        %v942 = vsel %vm870, %v766, %v906
        %v943 = vsel %vm871, %v771, %v907
        %v944 = vsel %vm872, %v774, %v908
        %v945 = vsel %vm873, %v779, %v909
        %v946 = vsel %vm874, %v782, %v910
        %v947 = vsel %vm875, %v787, %v911
        %v948 = vsel %vm876, %v790, %v912
        %v949 = vsel %vm877, %v795, %v913
        %v950 = vsel %vm878, %v798, %v914
        %v951 = vsel %vm879, %v803, %v915
        %v952 = vsel %vm880, %v806, %v916
        %v953 = vsel %vm881, %v811, %v917
        %v954 = vsel %vm882, %v814, %v918
        %v955 = vsel %vm883, %v819, %v919
        %v956 = vsel %vm884, %v822, %v920
        %v957 = vsel %vm885, %v827, %v921
        %v958 = vsel %vm886, %v830, %v922
        %v959 = vsel %vm887, %v835, %v923
        %v960 = vsel %vm888, %v838, %v924
        %v961 = vsel %vm889, %v843, %v925
        %v962 = vsel %vm890, %v846, %v926
        %v963 = vsel %vm891, %v851, %v927
        %v964 = vsel %vm892, %v854, %v928
        %p965 = scmp.gt.s32.totalorder %s33, 0
        %s966 = scalar_select %p965, 1, 0
        %v967 = vstv %s966
        %vm968 = vcmp.eq.s32.totalorder %v967, 1
        %p969 = scmp.lt.s32.totalorder %s33, 0
        %s970 = scalar_select %p969, 1, 0
        %v971 = vstv %s970
        %vm972 = vcmp.eq.s32.totalorder %v971, 1
        %v973 = vsel %vm968, 1, 0
        %v974 = vsel %vm972, 1, 0
        %vm975 = vcmp.eq.s32.totalorder %v973, 1
        %vm976 = vcmp.eq.s32.totalorder %v974, 1
        %v977 = vsel %vm975, %v929, 0.0
        %v978 = vsel %vm975, %v930, 0.0
        %v979 = vsel 1, %v931, 0.0
        %v980 = vsel 1, %v932, 0.0
        %v981 = vsel 1, %v933, 0.0
        %v982 = vsel 1, %v934, 0.0
        %v983 = vsel 1, %v935, 0.0
        %v984 = vsel 1, %v936, 0.0
        %v985 = vsel 1, %v937, 0.0
        %v986 = vsel 1, %v938, 0.0
        %v987 = vsel 1, %v939, 0.0
        %v988 = vsel 1, %v940, 0.0
        %v989 = vsel 1, %v941, 0.0
        %v990 = vsel 1, %v942, 0.0
        %v991 = vsel 1, %v943, 0.0
        %v992 = vsel 1, %v944, 0.0
        %v993 = vsel 1, %v945, 0.0
        %v994 = vsel 1, %v946, 0.0
        %v995 = vsel 1, %v947, 0.0
        %v996 = vsel 1, %v948, 0.0
        %v997 = vsel 1, %v949, 0.0
        %v998 = vsel 1, %v950, 0.0
        %v999 = vsel 1, %v951, 0.0
        %v1000 = vsel 1, %v952, 0.0
        %v1001 = vsel 1, %v953, 0.0
        %v1002 = vsel 1, %v954, 0.0
        %v1003 = vsel 1, %v955, 0.0
        %v1004 = vsel 1, %v956, 0.0
        %v1005 = vsel 1, %v957, 0.0
        %v1006 = vsel 1, %v958, 0.0
        %v1007 = vsel 1, %v959, 0.0
        %v1008 = vsel 1, %v960, 0.0
        %v1009 = vsel 1, %v961, 0.0
        %v1010 = vsel 1, %v962, 0.0
        %v1011 = vsel %vm976, %v963, 0.0
        %v1012 = vsel %vm976, %v964, 0.0
        %vm1049 = vcmask 1040384
        %v1050 = vrot.slane %v977, 7
        %v1051 = vrot.slane %v978, 7
        %v1052 = vsel %vm1049, %v1050, %v1051
        %v1053 = vrot.slane %v979, 7
        %v1054 = vrot.slane %v980, 7
        %v1055 = vsel %vm1049, %v1053, %v1054
        %v1056 = vrot.slane %v981, 7
        %v1057 = vrot.slane %v982, 7
        %v1058 = vsel %vm1049, %v1056, %v1057
        %v1059 = vrot.slane %v983, 7
        %v1060 = vrot.slane %v984, 7
        %v1061 = vsel %vm1049, %v1059, %v1060
        %v1062 = vrot.slane %v985, 7
        %v1063 = vrot.slane %v986, 7
        %v1064 = vsel %vm1049, %v1062, %v1063
        %v1065 = vrot.slane %v987, 7
        %v1066 = vrot.slane %v988, 7
        %v1067 = vsel %vm1049, %v1065, %v1066
        %v1068 = vrot.slane %v989, 7
        %v1069 = vrot.slane %v990, 7
        %v1070 = vsel %vm1049, %v1068, %v1069
        %v1071 = vrot.slane %v991, 7
        %v1072 = vrot.slane %v992, 7
        %v1073 = vsel %vm1049, %v1071, %v1072
        %v1074 = vrot.slane %v993, 7
        %v1075 = vrot.slane %v994, 7
        %v1076 = vsel %vm1049, %v1074, %v1075
        %v1077 = vrot.slane %v995, 7
        %v1078 = vrot.slane %v996, 7
        %v1079 = vsel %vm1049, %v1077, %v1078
        %v1080 = vrot.slane %v997, 7
        %v1081 = vrot.slane %v998, 7
        %v1082 = vsel %vm1049, %v1080, %v1081
        %v1083 = vrot.slane %v999, 7
        %v1084 = vrot.slane %v1000, 7
        %v1085 = vsel %vm1049, %v1083, %v1084
        %v1086 = vrot.slane %v1001, 7
        %v1087 = vrot.slane %v1002, 7
        %v1088 = vsel %vm1049, %v1086, %v1087
        %v1089 = vrot.slane %v1003, 7
        %v1090 = vrot.slane %v1004, 7
        %v1091 = vsel %vm1049, %v1089, %v1090
        %v1092 = vrot.slane %v1005, 7
        %v1093 = vrot.slane %v1006, 7
        %v1094 = vsel %vm1049, %v1092, %v1093
        %v1095 = vrot.slane %v1007, 7
        %v1096 = vrot.slane %v1008, 7
        %v1097 = vsel %vm1049, %v1095, %v1096
        %v1098 = vrot.slane %v1009, 7
        %v1099 = vrot.slane %v1010, 7
        %v1100 = vsel %vm1049, %v1098, %v1099
        %v1101 = vrot.slane %v1011, 7
        %v1102 = vrot.slane %v1012, 7
        %v1103 = vsel %vm1049, %v1101, %v1102
        %v1140 = vsel %vm1049, 0.0, %v1050
        %v1141 = vsel %vm1049, 0.0, %v1053
        %v1142 = vsel %vm1049, 0.0, %v1056
        %v1143 = vsel %vm1049, 0.0, %v1059
        %v1144 = vsel %vm1049, 0.0, %v1062
        %v1145 = vsel %vm1049, 0.0, %v1065
        %v1146 = vsel %vm1049, 0.0, %v1068
        %v1147 = vsel %vm1049, 0.0, %v1071
        %v1148 = vsel %vm1049, 0.0, %v1074
        %v1149 = vsel %vm1049, 0.0, %v1077
        %v1150 = vsel %vm1049, 0.0, %v1080
        %v1151 = vsel %vm1049, 0.0, %v1083
        %v1152 = vsel %vm1049, 0.0, %v1086
        %v1153 = vsel %vm1049, 0.0, %v1089
        %v1154 = vsel %vm1049, 0.0, %v1092
        %v1155 = vsel %vm1049, 0.0, %v1095
        %v1156 = vsel %vm1049, 0.0, %v1098
        %v1157 = vsel %vm1049, 0.0, %v1101
        %vm1158 = vcmask 1046528
        %v1159 = vrot.slane %v977, 1
        %v1160 = vrot.slane %v978, 1
        %v1161 = vsel %vm1158, %v1159, %v1160
        %v1162 = vrot.slane %v979, 1
        %v1163 = vrot.slane %v980, 1
        %v1164 = vsel %vm1158, %v1162, %v1163
        %v1165 = vrot.slane %v981, 1
        %v1166 = vrot.slane %v982, 1
        %v1167 = vsel %vm1158, %v1165, %v1166
        %v1168 = vrot.slane %v983, 1
        %v1169 = vrot.slane %v984, 1
        %v1170 = vsel %vm1158, %v1168, %v1169
        %v1171 = vrot.slane %v985, 1
        %v1172 = vrot.slane %v986, 1
        %v1173 = vsel %vm1158, %v1171, %v1172
        %v1174 = vrot.slane %v987, 1
        %v1175 = vrot.slane %v988, 1
        %v1176 = vsel %vm1158, %v1174, %v1175
        %v1177 = vrot.slane %v989, 1
        %v1178 = vrot.slane %v990, 1
        %v1179 = vsel %vm1158, %v1177, %v1178
        %v1180 = vrot.slane %v991, 1
        %v1181 = vrot.slane %v992, 1
        %v1182 = vsel %vm1158, %v1180, %v1181
        %v1183 = vrot.slane %v993, 1
        %v1184 = vrot.slane %v994, 1
        %v1185 = vsel %vm1158, %v1183, %v1184
        %v1186 = vrot.slane %v995, 1
        %v1187 = vrot.slane %v996, 1
        %v1188 = vsel %vm1158, %v1186, %v1187
        %v1189 = vrot.slane %v997, 1
        %v1190 = vrot.slane %v998, 1
        %v1191 = vsel %vm1158, %v1189, %v1190
        %v1192 = vrot.slane %v999, 1
        %v1193 = vrot.slane %v1000, 1
        %v1194 = vsel %vm1158, %v1192, %v1193
        %v1195 = vrot.slane %v1001, 1
        %v1196 = vrot.slane %v1002, 1
        %v1197 = vsel %vm1158, %v1195, %v1196
        %v1198 = vrot.slane %v1003, 1
        %v1199 = vrot.slane %v1004, 1
        %v1200 = vsel %vm1158, %v1198, %v1199
        %v1201 = vrot.slane %v1005, 1
        %v1202 = vrot.slane %v1006, 1
        %v1203 = vsel %vm1158, %v1201, %v1202
        %v1204 = vrot.slane %v1007, 1
        %v1205 = vrot.slane %v1008, 1
        %v1206 = vsel %vm1158, %v1204, %v1205
        %v1207 = vrot.slane %v1009, 1
        %v1208 = vrot.slane %v1010, 1
        %v1209 = vsel %vm1158, %v1207, %v1208
        %v1210 = vrot.slane %v1011, 1
        %v1211 = vrot.slane %v1012, 1
        %v1212 = vsel %vm1158, %v1210, %v1211
        %v1249 = vsel %vm1158, %v1160, 0.0
        %v1250 = vsel %vm1158, %v1163, 0.0
        %v1251 = vsel %vm1158, %v1166, 0.0
        %v1252 = vsel %vm1158, %v1169, 0.0
        %v1253 = vsel %vm1158, %v1172, 0.0
        %v1254 = vsel %vm1158, %v1175, 0.0
        %v1255 = vsel %vm1158, %v1178, 0.0
        %v1256 = vsel %vm1158, %v1181, 0.0
        %v1257 = vsel %vm1158, %v1184, 0.0
        %v1258 = vsel %vm1158, %v1187, 0.0
        %v1259 = vsel %vm1158, %v1190, 0.0
        %v1260 = vsel %vm1158, %v1193, 0.0
        %v1261 = vsel %vm1158, %v1196, 0.0
        %v1262 = vsel %vm1158, %v1199, 0.0
        %v1263 = vsel %vm1158, %v1202, 0.0
        %v1264 = vsel %vm1158, %v1205, 0.0
        %v1265 = vsel %vm1158, %v1208, 0.0
        %v1266 = vsel %vm1158, %v1211, 0.0
        %v1267 = vpack.c.bf16 %v1052, %v1140
        %v1268 = vpack.c.bf16 %v1055, %v1141
        %v1269 = vpack.c.bf16 %v1058, %v1142
        %v1270 = vpack.c.bf16 %v1061, %v1143
        %v1271 = vpack.c.bf16 %v1064, %v1144
        %v1272 = vpack.c.bf16 %v1067, %v1145
        %v1273 = vpack.c.bf16 %v1070, %v1146
        %v1274 = vpack.c.bf16 %v1073, %v1147
        %v1275 = vpack.c.bf16 %v1076, %v1148
        %v1276 = vpack.c.bf16 %v1079, %v1149
        %v1277 = vpack.c.bf16 %v1082, %v1150
        %v1278 = vpack.c.bf16 %v1085, %v1151
        %v1279 = vpack.c.bf16 %v1088, %v1152
        %v1280 = vpack.c.bf16 %v1091, %v1153
        %v1281 = vpack.c.bf16 %v1094, %v1154
        %v1282 = vpack.c.bf16 %v1097, %v1155
        %v1283 = vpack.c.bf16 %v1100, %v1156
        %v1284 = vpack.c.bf16 %v1103, %v1157
        %1285 = vst [vmem:[#allocation2] sm:$0xff] %v1267
        %1286 = vst [vmem:[#allocation2 + $0x18] sm:$0xff] %v1268
        %1287 = vst [vmem:[#allocation2 + $0x30] sm:$0xff] %v1269
        %1288 = vst [vmem:[#allocation2 + $0x48] sm:$0xff] %v1270
        %1289 = vst [vmem:[#allocation2 + $0x60] sm:$0xff] %v1271
        %1290 = vst [vmem:[#allocation2 + $0x78] sm:$0xff] %v1272
        %1291 = vst [vmem:[#allocation2 + $0x90] sm:$0xff] %v1273
        %1292 = vst [vmem:[#allocation2 + $0xa8] sm:$0xff] %v1274
        %1293 = vst [vmem:[#allocation2 + $0xc0] sm:$0xff] %v1275
        %1294 = vst [vmem:[#allocation2 + $0xd8] sm:$0xff] %v1276
        %1295 = vst [vmem:[#allocation2 + $0xf0] sm:$0xff] %v1277
        %1296 = vst [vmem:[#allocation2 + $0x108] sm:$0xff] %v1278
        %1297 = vst [vmem:[#allocation2 + $0x120] sm:$0xff] %v1279
        %1298 = vst [vmem:[#allocation2 + $0x138] sm:$0xff] %v1280
        %1299 = vst [vmem:[#allocation2 + $0x150] sm:$0xff] %v1281
        %1300 = vst [vmem:[#allocation2 + $0x168] sm:$0xff] %v1282
        %1301 = vst [vmem:[#allocation2 + $0x180] sm:$0xff] %v1283
        %1302 = vst [vmem:[#allocation2 + $0x198] sm:$0xff] %v1284
        %v1303 = vpack.c.bf16 %v978, %v977
        %v1304 = vpack.c.bf16 %v980, %v979
        %v1305 = vpack.c.bf16 %v982, %v981
        %v1306 = vpack.c.bf16 %v984, %v983
        %v1307 = vpack.c.bf16 %v986, %v985
        %v1308 = vpack.c.bf16 %v988, %v987
        %v1309 = vpack.c.bf16 %v990, %v989
        %v1310 = vpack.c.bf16 %v992, %v991
        %v1311 = vpack.c.bf16 %v994, %v993
        %v1312 = vpack.c.bf16 %v996, %v995
        %v1313 = vpack.c.bf16 %v998, %v997
        %v1314 = vpack.c.bf16 %v1000, %v999
        %v1315 = vpack.c.bf16 %v1002, %v1001
        %v1316 = vpack.c.bf16 %v1004, %v1003
        %v1317 = vpack.c.bf16 %v1006, %v1005
        %v1318 = vpack.c.bf16 %v1008, %v1007
        %v1319 = vpack.c.bf16 %v1010, %v1009
        %v1320 = vpack.c.bf16 %v1012, %v1011
        %1321 = vst [vmem:[#allocation2 + $0x8] sm:$0xff] %v1303
        %1322 = vst [vmem:[#allocation2 + $0x20] sm:$0xff] %v1304
        %1323 = vst [vmem:[#allocation2 + $0x38] sm:$0xff] %v1305
        %1324 = vst [vmem:[#allocation2 + $0x50] sm:$0xff] %v1306
        %1325 = vst [vmem:[#allocation2 + $0x68] sm:$0xff] %v1307
        %1326 = vst [vmem:[#allocation2 + $0x80] sm:$0xff] %v1308
        %1327 = vst [vmem:[#allocation2 + $0x98] sm:$0xff] %v1309
        %1328 = vst [vmem:[#allocation2 + $0xb0] sm:$0xff] %v1310
        %1329 = vst [vmem:[#allocation2 + $0xc8] sm:$0xff] %v1311
        %1330 = vst [vmem:[#allocation2 + $0xe0] sm:$0xff] %v1312
        %1331 = vst [vmem:[#allocation2 + $0xf8] sm:$0xff] %v1313
        %1332 = vst [vmem:[#allocation2 + $0x110] sm:$0xff] %v1314
        %1333 = vst [vmem:[#allocation2 + $0x128] sm:$0xff] %v1315
        %1334 = vst [vmem:[#allocation2 + $0x140] sm:$0xff] %v1316
        %1335 = vst [vmem:[#allocation2 + $0x158] sm:$0xff] %v1317
        %1336 = vst [vmem:[#allocation2 + $0x170] sm:$0xff] %v1318
        %1337 = vst [vmem:[#allocation2 + $0x188] sm:$0xff] %v1319
        %1338 = vst [vmem:[#allocation2 + $0x1a0] sm:$0xff] %v1320
        %v1339 = vpack.c.bf16 %v1249, %v1161
        %v1340 = vpack.c.bf16 %v1250, %v1164
        %v1341 = vpack.c.bf16 %v1251, %v1167
        %v1342 = vpack.c.bf16 %v1252, %v1170
        %v1343 = vpack.c.bf16 %v1253, %v1173
        %v1344 = vpack.c.bf16 %v1254, %v1176
        %v1345 = vpack.c.bf16 %v1255, %v1179
        %v1346 = vpack.c.bf16 %v1256, %v1182
        %v1347 = vpack.c.bf16 %v1257, %v1185
        %v1348 = vpack.c.bf16 %v1258, %v1188
        %v1349 = vpack.c.bf16 %v1259, %v1191
        %v1350 = vpack.c.bf16 %v1260, %v1194
        %v1351 = vpack.c.bf16 %v1261, %v1197
        %v1352 = vpack.c.bf16 %v1262, %v1200
        %v1353 = vpack.c.bf16 %v1263, %v1203
        %v1354 = vpack.c.bf16 %v1264, %v1206
        %v1355 = vpack.c.bf16 %v1265, %v1209
        %v1356 = vpack.c.bf16 %v1266, %v1212
        %1357 = vst [vmem:[#allocation2 + $0x10] sm:$0xff] %v1339
        %1358 = vst [vmem:[#allocation2 + $0x28] sm:$0xff] %v1340
        %1359 = vst [vmem:[#allocation2 + $0x40] sm:$0xff] %v1341
        %1360 = vst [vmem:[#allocation2 + $0x58] sm:$0xff] %v1342
        %1361 = vst [vmem:[#allocation2 + $0x70] sm:$0xff] %v1343
        %1362 = vst [vmem:[#allocation2 + $0x88] sm:$0xff] %v1344
        %1363 = vst [vmem:[#allocation2 + $0xa0] sm:$0xff] %v1345
        %1364 = vst [vmem:[#allocation2 + $0xb8] sm:$0xff] %v1346
        %1365 = vst [vmem:[#allocation2 + $0xd0] sm:$0xff] %v1347
        %1366 = vst [vmem:[#allocation2 + $0xe8] sm:$0xff] %v1348
        %1367 = vst [vmem:[#allocation2 + $0x100] sm:$0xff] %v1349
        %1368 = vst [vmem:[#allocation2 + $0x118] sm:$0xff] %v1350
        %1369 = vst [vmem:[#allocation2 + $0x130] sm:$0xff] %v1351
        %1370 = vst [vmem:[#allocation2 + $0x148] sm:$0xff] %v1352
        %1371 = vst [vmem:[#allocation2 + $0x160] sm:$0xff] %v1353
        %1372 = vst [vmem:[#allocation2 + $0x178] sm:$0xff] %v1354
        %1373 = vst [vmem:[#allocation2 + $0x190] sm:$0xff] %v1355
        %1374 = vst [vmem:[#allocation2 + $0x1a8] sm:$0xff] %v1356
        %v1375 = vld [vmem:[#allocation2] sm:$0xff]
        %v1376 = vld [vmem:[#allocation2 + $0x8] sm:$0xff]
        %v1377 = vld [vmem:[#allocation2 + $0x10] sm:$0xff]
        %v1378 = vld [vmem:[#allocation2 + $0x18] sm:$0xff]
        %v1379 = vld [vmem:[#allocation2 + $0x20] sm:$0xff]
        %v1380 = vld [vmem:[#allocation2 + $0x28] sm:$0xff]
        %v1381 = vld [vmem:[#allocation2 + $0x30] sm:$0xff]
        %v1382 = vld [vmem:[#allocation2 + $0x38] sm:$0xff]
        %v1383 = vld [vmem:[#allocation2 + $0x40] sm:$0xff]
        %v1384 = vld [vmem:[#allocation2 + $0x48] sm:$0xff]
        %v1385 = vld [vmem:[#allocation2 + $0x50] sm:$0xff]
        %v1386 = vld [vmem:[#allocation2 + $0x58] sm:$0xff]
        %v1387 = vld [vmem:[#allocation2 + $0x60] sm:$0xff]
        %v1388 = vld [vmem:[#allocation2 + $0x68] sm:$0xff]
        %v1389 = vld [vmem:[#allocation2 + $0x70] sm:$0xff]
        %v1390 = vld [vmem:[#allocation2 + $0x78] sm:$0xff]
        %v1391 = vld [vmem:[#allocation2 + $0x80] sm:$0xff]
        %v1392 = vld [vmem:[#allocation2 + $0x88] sm:$0xff]
        %v1393 = vld [vmem:[#allocation2 + $0x90] sm:$0xff]
        %v1394 = vld [vmem:[#allocation2 + $0x98] sm:$0xff]
        %v1395 = vld [vmem:[#allocation2 + $0xa0] sm:$0xff]
        %v1396 = vld [vmem:[#allocation2 + $0xa8] sm:$0xff]
        %v1397 = vld [vmem:[#allocation2 + $0xb0] sm:$0xff]
        %v1398 = vld [vmem:[#allocation2 + $0xb8] sm:$0xff]
        %v1399 = vld [vmem:[#allocation2 + $0xc0] sm:$0xff]
        %v1400 = vld [vmem:[#allocation2 + $0xc8] sm:$0xff]
        %v1401 = vld [vmem:[#allocation2 + $0xd0] sm:$0xff]
        %v1402 = vld [vmem:[#allocation2 + $0xd8] sm:$0xff]
        %v1403 = vld [vmem:[#allocation2 + $0xe0] sm:$0xff]
        %v1404 = vld [vmem:[#allocation2 + $0xe8] sm:$0xff]
        %v1405 = vld [vmem:[#allocation2 + $0xf0] sm:$0xff]
        %v1406 = vld [vmem:[#allocation2 + $0xf8] sm:$0xff]
        %v1407 = vld [vmem:[#allocation2 + $0x100] sm:$0xff]
        %v1408 = vld [vmem:[#allocation2 + $0x108] sm:$0xff]
        %v1409 = vld [vmem:[#allocation2 + $0x110] sm:$0xff]
        %v1410 = vld [vmem:[#allocation2 + $0x118] sm:$0xff]
        %v1411 = vld [vmem:[#allocation2 + $0x120] sm:$0xff]
        %v1412 = vld [vmem:[#allocation2 + $0x128] sm:$0xff]
        %v1413 = vld [vmem:[#allocation2 + $0x130] sm:$0xff]
        %v1414 = vld [vmem:[#allocation2 + $0x138] sm:$0xff]
        %v1415 = vld [vmem:[#allocation2 + $0x140] sm:$0xff]
        %v1416 = vld [vmem:[#allocation2 + $0x148] sm:$0xff]
        %v1417 = vld [vmem:[#allocation2 + $0x150] sm:$0xff]
        %v1418 = vld [vmem:[#allocation2 + $0x158] sm:$0xff]
        %v1419 = vld [vmem:[#allocation2 + $0x160] sm:$0xff]
        %v1420 = vld [vmem:[#allocation2 + $0x168] sm:$0xff]
        %v1421 = vld [vmem:[#allocation2 + $0x170] sm:$0xff]
        %v1422 = vld [vmem:[#allocation2 + $0x178] sm:$0xff]
        %v1423 = vld [vmem:[#allocation11] sm:$0xf]
        %v1424 = vld [vmem:[#allocation11 + $0x4] sm:$0xf]
        %v1425 = vld [vmem:[#allocation11 + $0x8] sm:$0xf]
        %v1426 = vld [vmem:[#allocation11 + $0xc] sm:$0xf]
        %v1427 = vld [vmem:[#allocation11 + $0x10] sm:$0xf]
        %v1428 = vld [vmem:[#allocation11 + $0x14] sm:$0xf]
        %v1429 = vld [vmem:[#allocation11 + $0x18] sm:$0xf]
        %v1430 = vld [vmem:[#allocation11 + $0x1c] sm:$0xf]
        %v1431 = vld [vmem:[#allocation11 + $0x20] sm:$0xf]
        %v1432 = vld [vmem:[#allocation11 + $0x24] sm:$0xf]
        %v1433 = vld [vmem:[#allocation11 + $0x28] sm:$0xf]
        %v1434 = vld [vmem:[#allocation11 + $0x2c] sm:$0xf]
        %v1435 = vld [vmem:[#allocation11 + $0x30] sm:$0xf]
        %v1436 = vld [vmem:[#allocation11 + $0x34] sm:$0xf]
        %v1437 = vld [vmem:[#allocation11 + $0x38] sm:$0xf]
        %v1438 = vld [vmem:[#allocation11 + $0x3c] sm:$0xf]
        %v1439 = vld [vmem:[#allocation11 + $0x40] sm:$0xf]
        %v1440 = vld [vmem:[#allocation11 + $0x44] sm:$0xf]
        %v1441 = vld [vmem:[#allocation11 + $0x48] sm:$0xf]
        %v1442 = vld [vmem:[#allocation11 + $0x4c] sm:$0xf]
        %v1443 = vld [vmem:[#allocation11 + $0x50] sm:$0xf]
        %v1444 = vld [vmem:[#allocation11 + $0x54] sm:$0xf]
        %v1445 = vld [vmem:[#allocation11 + $0x58] sm:$0xf]
        %v1446 = vld [vmem:[#allocation11 + $0x5c] sm:$0xf]
        %v1447 = vld [vmem:[#allocation11 + $0x60] sm:$0xf]
        %v1448 = vld [vmem:[#allocation11 + $0x64] sm:$0xf]
        %v1449 = vld [vmem:[#allocation11 + $0x68] sm:$0xf]
        %v1450 = vld [vmem:[#allocation11 + $0x6c] sm:$0xf]
        %v1451 = vld [vmem:[#allocation11 + $0x70] sm:$0xf]
        %v1452 = vld [vmem:[#allocation11 + $0x74] sm:$0xf]
        %v1453 = vld [vmem:[#allocation11 + $0x78] sm:$0xf]
        %v1454 = vld [vmem:[#allocation11 + $0x7c] sm:$0xf]
        %v1455 = vld [vmem:[#allocation11 + $0x80] sm:$0xf]
        %v1456 = vld [vmem:[#allocation11 + $0x84] sm:$0xf]
        %v1457 = vld [vmem:[#allocation11 + $0x88] sm:$0xf]
        %v1458 = vld [vmem:[#allocation11 + $0x8c] sm:$0xf]
        %v1459 = vld [vmem:[#allocation11 + $0x90] sm:$0xf]
        %v1460 = vld [vmem:[#allocation11 + $0x94] sm:$0xf]
        %v1461 = vld [vmem:[#allocation11 + $0x98] sm:$0xf]
        %v1462 = vld [vmem:[#allocation11 + $0x9c] sm:$0xf]
        %v1463 = vld [vmem:[#allocation11 + $0xa0] sm:$0xf]
        %v1464 = vld [vmem:[#allocation11 + $0xa4] sm:$0xf]
        %v1465 = vld [vmem:[#allocation11 + $0xa8] sm:$0xf]
        %v1466 = vld [vmem:[#allocation11 + $0xac] sm:$0xf]
        %v1467 = vld [vmem:[#allocation11 + $0xb0] sm:$0xf]
        %v1468 = vld [vmem:[#allocation11 + $0xb4] sm:$0xf]
        %v1469 = vld [vmem:[#allocation11 + $0xb8] sm:$0xf]
        %v1470 = vld [vmem:[#allocation11 + $0xbc] sm:$0xf]
        %s1471 = scalar_lea.vmem [#allocation2], 24
        %v1472 = vld [vmem:[%s1471] sm:$0xff]
        %v1473 = vld [vmem:[%s1471 + $0x8] sm:$0xff]
        %v1474 = vld [vmem:[%s1471 + $0x10] sm:$0xff]
        %v1475 = vld [vmem:[%s1471 + $0x18] sm:$0xff]
        %v1476 = vld [vmem:[%s1471 + $0x20] sm:$0xff]
        %v1477 = vld [vmem:[%s1471 + $0x28] sm:$0xff]
        %v1478 = vld [vmem:[%s1471 + $0x30] sm:$0xff]
        %v1479 = vld [vmem:[%s1471 + $0x38] sm:$0xff]
        %v1480 = vld [vmem:[%s1471 + $0x40] sm:$0xff]
        %v1481 = vld [vmem:[%s1471 + $0x48] sm:$0xff]
        %v1482 = vld [vmem:[%s1471 + $0x50] sm:$0xff]
        %v1483 = vld [vmem:[%s1471 + $0x58] sm:$0xff]
        %v1484 = vld [vmem:[%s1471 + $0x60] sm:$0xff]
        %v1485 = vld [vmem:[%s1471 + $0x68] sm:$0xff]
        %v1486 = vld [vmem:[%s1471 + $0x70] sm:$0xff]
        %v1487 = vld [vmem:[%s1471 + $0x78] sm:$0xff]
        %v1488 = vld [vmem:[%s1471 + $0x80] sm:$0xff]
        %v1489 = vld [vmem:[%s1471 + $0x88] sm:$0xff]
        %v1490 = vld [vmem:[%s1471 + $0x90] sm:$0xff]
        %v1491 = vld [vmem:[%s1471 + $0x98] sm:$0xff]
        %v1492 = vld [vmem:[%s1471 + $0xa0] sm:$0xff]
        %v1493 = vld [vmem:[%s1471 + $0xa8] sm:$0xff]
        %v1494 = vld [vmem:[%s1471 + $0xb0] sm:$0xff]
        %v1495 = vld [vmem:[%s1471 + $0xb8] sm:$0xff]
        %v1496 = vld [vmem:[%s1471 + $0xc0] sm:$0xff]
        %v1497 = vld [vmem:[%s1471 + $0xc8] sm:$0xff]
        %v1498 = vld [vmem:[%s1471 + $0xd0] sm:$0xff]
        %v1499 = vld [vmem:[%s1471 + $0xd8] sm:$0xff]
        %v1500 = vld [vmem:[%s1471 + $0xe0] sm:$0xff]
        %v1501 = vld [vmem:[%s1471 + $0xe8] sm:$0xff]
        %v1502 = vld [vmem:[%s1471 + $0xf0] sm:$0xff]
        %v1503 = vld [vmem:[%s1471 + $0xf8] sm:$0xff]
        %v1504 = vld [vmem:[%s1471 + $0x100] sm:$0xff]
        %v1505 = vld [vmem:[%s1471 + $0x108] sm:$0xff]
        %v1506 = vld [vmem:[%s1471 + $0x110] sm:$0xff]
        %v1507 = vld [vmem:[%s1471 + $0x118] sm:$0xff]
        %v1508 = vld [vmem:[%s1471 + $0x120] sm:$0xff]
        %v1509 = vld [vmem:[%s1471 + $0x128] sm:$0xff]
        %v1510 = vld [vmem:[%s1471 + $0x130] sm:$0xff]
        %v1511 = vld [vmem:[%s1471 + $0x138] sm:$0xff]
        %v1512 = vld [vmem:[%s1471 + $0x140] sm:$0xff]
        %v1513 = vld [vmem:[%s1471 + $0x148] sm:$0xff]
        %v1514 = vld [vmem:[%s1471 + $0x150] sm:$0xff]
        %v1515 = vld [vmem:[%s1471 + $0x158] sm:$0xff]
        %v1516 = vld [vmem:[%s1471 + $0x160] sm:$0xff]
        %v1517 = vld [vmem:[%s1471 + $0x168] sm:$0xff]
        %v1518 = vld [vmem:[%s1471 + $0x170] sm:$0xff]
        %v1519 = vld [vmem:[%s1471 + $0x178] sm:$0xff]
        %s1520 = scalar_lea.vmem [#allocation11], 192
        %v1521 = vld [vmem:[%s1520] sm:$0xf]
        %v1522 = vld [vmem:[%s1520 + $0x4] sm:$0xf]
        %v1523 = vld [vmem:[%s1520 + $0x8] sm:$0xf]
        %v1524 = vld [vmem:[%s1520 + $0xc] sm:$0xf]
        %v1525 = vld [vmem:[%s1520 + $0x10] sm:$0xf]
        %v1526 = vld [vmem:[%s1520 + $0x14] sm:$0xf]
        %v1527 = vld [vmem:[%s1520 + $0x18] sm:$0xf]
        %v1528 = vld [vmem:[%s1520 + $0x1c] sm:$0xf]
        %v1529 = vld [vmem:[%s1520 + $0x20] sm:$0xf]
        %v1530 = vld [vmem:[%s1520 + $0x24] sm:$0xf]
        %v1531 = vld [vmem:[%s1520 + $0x28] sm:$0xf]
        %v1532 = vld [vmem:[%s1520 + $0x2c] sm:$0xf]
        %v1533 = vld [vmem:[%s1520 + $0x30] sm:$0xf]
        %v1534 = vld [vmem:[%s1520 + $0x34] sm:$0xf]
        %v1535 = vld [vmem:[%s1520 + $0x38] sm:$0xf]
        %v1536 = vld [vmem:[%s1520 + $0x3c] sm:$0xf]
        %v1537 = vld [vmem:[%s1520 + $0x40] sm:$0xf]
        %v1538 = vld [vmem:[%s1520 + $0x44] sm:$0xf]
        %v1539 = vld [vmem:[%s1520 + $0x48] sm:$0xf]
        %v1540 = vld [vmem:[%s1520 + $0x4c] sm:$0xf]
        %v1541 = vld [vmem:[%s1520 + $0x50] sm:$0xf]
        %v1542 = vld [vmem:[%s1520 + $0x54] sm:$0xf]
        %v1543 = vld [vmem:[%s1520 + $0x58] sm:$0xf]
        %v1544 = vld [vmem:[%s1520 + $0x5c] sm:$0xf]
        %v1545 = vld [vmem:[%s1520 + $0x60] sm:$0xf]
        %v1546 = vld [vmem:[%s1520 + $0x64] sm:$0xf]
        %v1547 = vld [vmem:[%s1520 + $0x68] sm:$0xf]
        %v1548 = vld [vmem:[%s1520 + $0x6c] sm:$0xf]
        %v1549 = vld [vmem:[%s1520 + $0x70] sm:$0xf]
        %v1550 = vld [vmem:[%s1520 + $0x74] sm:$0xf]
        %v1551 = vld [vmem:[%s1520 + $0x78] sm:$0xf]
        %v1552 = vld [vmem:[%s1520 + $0x7c] sm:$0xf]
        %v1553 = vld [vmem:[%s1520 + $0x80] sm:$0xf]
        %v1554 = vld [vmem:[%s1520 + $0x84] sm:$0xf]
        %v1555 = vld [vmem:[%s1520 + $0x88] sm:$0xf]
        %v1556 = vld [vmem:[%s1520 + $0x8c] sm:$0xf]
        %v1557 = vld [vmem:[%s1520 + $0x90] sm:$0xf]
        %v1558 = vld [vmem:[%s1520 + $0x94] sm:$0xf]
        %v1559 = vld [vmem:[%s1520 + $0x98] sm:$0xf]
        %v1560 = vld [vmem:[%s1520 + $0x9c] sm:$0xf]
        %v1561 = vld [vmem:[%s1520 + $0xa0] sm:$0xf]
        %v1562 = vld [vmem:[%s1520 + $0xa4] sm:$0xf]
        %v1563 = vld [vmem:[%s1520 + $0xa8] sm:$0xf]
        %v1564 = vld [vmem:[%s1520 + $0xac] sm:$0xf]
        %v1565 = vld [vmem:[%s1520 + $0xb0] sm:$0xf]
        %v1566 = vld [vmem:[%s1520 + $0xb4] sm:$0xf]
        %v1567 = vld [vmem:[%s1520 + $0xb8] sm:$0xf]
        %v1568 = vld [vmem:[%s1520 + $0xbc] sm:$0xf]
        %v1617 = vunpack.c.l.b16 %v1521
        %v1618 = vunpack.c.l.b16 %v1522
        %v1619 = vunpack.c.l.b16 %v1523
        %v1620 = vunpack.c.l.b16 %v1524
        %v1621 = vunpack.c.l.b16 %v1525
        %v1622 = vunpack.c.l.b16 %v1526
        %v1623 = vunpack.c.l.b16 %v1527
        %v1624 = vunpack.c.l.b16 %v1528
        %v1625 = vunpack.c.l.b16 %v1529
        %v1626 = vunpack.c.l.b16 %v1530
        %v1627 = vunpack.c.l.b16 %v1531
        %v1628 = vunpack.c.l.b16 %v1532
        %v1629 = vunpack.c.l.b16 %v1533
        %v1630 = vunpack.c.l.b16 %v1534
        %v1631 = vunpack.c.l.b16 %v1535
        %v1632 = vunpack.c.l.b16 %v1536
        %v1633 = vunpack.c.l.b16 %v1537
        %v1634 = vunpack.c.l.b16 %v1538
        %v1635 = vunpack.c.l.b16 %v1539
        %v1636 = vunpack.c.l.b16 %v1540
        %v1637 = vunpack.c.l.b16 %v1541
        %v1638 = vunpack.c.l.b16 %v1542
        %v1639 = vunpack.c.l.b16 %v1543
        %v1640 = vunpack.c.l.b16 %v1544
        %v1641 = vunpack.c.l.b16 %v1545
        %v1642 = vunpack.c.l.b16 %v1546
        %v1643 = vunpack.c.l.b16 %v1547
        %v1644 = vunpack.c.l.b16 %v1548
        %v1645 = vunpack.c.l.b16 %v1549
        %v1646 = vunpack.c.l.b16 %v1550
        %v1647 = vunpack.c.l.b16 %v1551
        %v1648 = vunpack.c.l.b16 %v1552
        %v1649 = vunpack.c.l.b16 %v1553
        %v1650 = vunpack.c.l.b16 %v1554
        %v1651 = vunpack.c.l.b16 %v1555
        %v1652 = vunpack.c.l.b16 %v1556
        %v1653 = vunpack.c.l.b16 %v1557
        %v1654 = vunpack.c.l.b16 %v1558
        %v1655 = vunpack.c.l.b16 %v1559
        %v1656 = vunpack.c.l.b16 %v1560
        %v1657 = vunpack.c.l.b16 %v1561
        %v1658 = vunpack.c.l.b16 %v1562
        %v1659 = vunpack.c.l.b16 %v1563
        %v1660 = vunpack.c.l.b16 %v1564
        %v1661 = vunpack.c.l.b16 %v1565
        %v1662 = vunpack.c.l.b16 %v1566
        %v1663 = vunpack.c.l.b16 %v1567
        %v1664 = vunpack.c.l.b16 %v1568
        %v1665 = vpack.c.b16 %v1618, %v1617
        %v1666 = vpack.c.b16 %v1620, %v1619
        %v1667 = vpack.c.b16 %v1622, %v1621
        %v1668 = vpack.c.b16 %v1624, %v1623
        %v1669 = vpack.c.b16 %v1626, %v1625
        %v1670 = vpack.c.b16 %v1628, %v1627
        %v1671 = vpack.c.b16 %v1630, %v1629
        %v1672 = vpack.c.b16 %v1632, %v1631
        %v1673 = vpack.c.b16 %v1634, %v1633
        %v1674 = vpack.c.b16 %v1636, %v1635
        %v1675 = vpack.c.b16 %v1638, %v1637
        %v1676 = vpack.c.b16 %v1640, %v1639
        %v1677 = vpack.c.b16 %v1642, %v1641
        %v1678 = vpack.c.b16 %v1644, %v1643
        %v1679 = vpack.c.b16 %v1646, %v1645
        %v1680 = vpack.c.b16 %v1648, %v1647
        %v1681 = vpack.c.b16 %v1650, %v1649
        %v1682 = vpack.c.b16 %v1652, %v1651
        %v1683 = vpack.c.b16 %v1654, %v1653
        %v1684 = vpack.c.b16 %v1656, %v1655
        %v1685 = vpack.c.b16 %v1658, %v1657
        %v1686 = vpack.c.b16 %v1660, %v1659
        %v1687 = vpack.c.b16 %v1662, %v1661
        %v1688 = vpack.c.b16 %v1664, %v1663
        %1713 = vmatprep.subr.bf16.mxu0 0
        %1714 = vmatpush1.bf16.msra.mxu0 %v1665
        %1715 = vmatprep.subr.bf16.mxu0 0
        %1716 = vmatpush1.bf16.msra.mxu0 %v1666
        %1717 = vmatprep.subr.bf16.mxu0 0
        %1718 = vmatpush1.bf16.msra.mxu0 %v1667
        %1719 = vmatprep.subr.bf16.mxu0 0
        %1720 = vmatpush1.bf16.msra.mxu0 %v1668
        %1721 = vmatprep.subr.bf16.mxu0 0
        %1722 = vmatpush1.bf16.msra.mxu0 %v1669
        %1723 = vmatprep.subr.bf16.mxu0 0
        %1724 = vmatpush1.bf16.msra.mxu0 %v1670
        %1725 = vmatprep.subr.bf16.mxu0 0
        %1726 = vmatpush1.bf16.msra.mxu0 %v1671
        %1727 = vmatprep.subr.bf16.mxu0 0
        %1728 = vmatpush1.bf16.msra.mxu0 %v1672
        %1729 = vmatprep.subr.bf16.mxu0 0
        %1730 = vmatpush1.bf16.msra.mxu0 %v1673
        %1731 = vmatprep.subr.bf16.mxu0 0
        %1732 = vmatpush1.bf16.msra.mxu0 %v1674
        %1733 = vmatprep.subr.bf16.mxu0 0
        %1734 = vmatpush1.bf16.msra.mxu0 %v1675
        %1735 = vmatprep.subr.bf16.mxu0 0
        %1736 = vmatpush1.bf16.msra.mxu0 %v1676
        %1737 = vmatprep.subr.bf16.mxu0 0
        %1738 = vmatpush1.bf16.msra.mxu0 %v1677
        %1739 = vmatprep.subr.bf16.mxu0 0
        %1740 = vmatpush1.bf16.msra.mxu0 %v1678
        %1741 = vmatprep.subr.bf16.mxu0 0
        %1742 = vmatpush1.bf16.msra.mxu0 %v1679
        %1743 = vmatprep.subr.bf16.mxu0 0
        %1744 = vmatpush1.bf16.msra.mxu0 %v1680
        %1745 = vmatprep.mubr.bf16.mxu0 %v1473
        %1746 = vmatmul.mubr.bf16.gmra.mrb[0].mxu0 %v1472
        %v1747 = vpop.f32.mrb[0].mxu0
        %v1748 = vadd.f32 0.0, %v1747
        %v1749 = vpop.f32.mrb[0].mxu0
        %v1750 = vpop.f32.mrb[0].mxu0
        %v1751 = vadd.f32 0.0, %v1750
        %v1752 = vpop.f32.mrb[0].mxu0
        %1753 = vmatprep.mubr.bf16.mxu0 %v1476
        %1754 = vmatmul.mubr.bf16.gmra.mrb[0].mxu0 %v1475
        %v1755 = vpop.f32.mrb[0].mxu0
        %v1756 = vadd.f32 0.0, %v1755
        %v1757 = vpop.f32.mrb[0].mxu0
        %v1758 = vpop.f32.mrb[0].mxu0
        %v1759 = vadd.f32 0.0, %v1758
        %v1760 = vpop.f32.mrb[0].mxu0
        %1761 = vmatprep.mubr.bf16.mxu0 %v1479
        %1762 = vmatmul.mubr.bf16.gmra.mrb[0].mxu0 %v1478
        %v1763 = vpop.f32.mrb[0].mxu0
        %v1764 = vadd.f32 0.0, %v1763
        %v1765 = vpop.f32.mrb[0].mxu0
        %v1766 = vpop.f32.mrb[0].mxu0
        %v1767 = vadd.f32 0.0, %v1766
        %v1768 = vpop.f32.mrb[0].mxu0
        %1769 = vmatprep.mubr.bf16.mxu0 %v1482
        %1770 = vmatmul.mubr.bf16.gmra.mrb[0].mxu0 %v1481
        %v1771 = vpop.f32.mrb[0].mxu0
        %v1772 = vadd.f32 0.0, %v1771
        %v1773 = vpop.f32.mrb[0].mxu0
        %v1774 = vpop.f32.mrb[0].mxu0
        %v1775 = vadd.f32 0.0, %v1774
        %v1776 = vpop.f32.mrb[0].mxu0
        %1777 = vmatprep.mubr.bf16.mxu0 %v1485
        %1778 = vmatmul.mubr.bf16.gmra.mrb[0].mxu0 %v1484
        %v1779 = vpop.f32.mrb[0].mxu0
        %v1780 = vadd.f32 0.0, %v1779
        %v1781 = vpop.f32.mrb[0].mxu0
        %v1782 = vpop.f32.mrb[0].mxu0
        %v1783 = vadd.f32 0.0, %v1782
        %v1784 = vpop.f32.mrb[0].mxu0
        %1785 = vmatprep.mubr.bf16.mxu0 %v1488
        %1786 = vmatmul.mubr.bf16.gmra.mrb[0].mxu0 %v1487
        %v1787 = vpop.f32.mrb[0].mxu0
        %v1788 = vadd.f32 0.0, %v1787
        %v1789 = vpop.f32.mrb[0].mxu0
        %v1790 = vpop.f32.mrb[0].mxu0
        %v1791 = vadd.f32 0.0, %v1790
        %v1792 = vpop.f32.mrb[0].mxu0
        %1793 = vmatprep.mubr.bf16.mxu0 %v1491
        %1794 = vmatmul.mubr.bf16.gmra.mrb[0].mxu0 %v1490
        %v1795 = vpop.f32.mrb[0].mxu0
        %v1796 = vadd.f32 0.0, %v1795
        %v1797 = vpop.f32.mrb[0].mxu0
        %v1798 = vpop.f32.mrb[0].mxu0
        %v1799 = vadd.f32 0.0, %v1798
        %v1800 = vpop.f32.mrb[0].mxu0
        %1801 = vmatprep.mubr.bf16.mxu0 %v1494
        %1802 = vmatmul.mubr.bf16.gmra.mrb[0].mxu0 %v1493
        %v1803 = vpop.f32.mrb[0].mxu0
        %v1804 = vadd.f32 0.0, %v1803
        %v1805 = vpop.f32.mrb[0].mxu0
        %v1806 = vpop.f32.mrb[0].mxu0
        %v1807 = vadd.f32 0.0, %v1806
        %v1808 = vpop.f32.mrb[0].mxu0
        %1809 = vmatprep.mubr.bf16.mxu0 %v1497
        %1810 = vmatmul.mubr.bf16.gmra.mrb[0].mxu0 %v1496
        %v1811 = vpop.f32.mrb[0].mxu0
        %v1812 = vadd.f32 0.0, %v1811
        %v1813 = vpop.f32.mrb[0].mxu0
        %v1814 = vpop.f32.mrb[0].mxu0
        %v1815 = vadd.f32 0.0, %v1814
        %v1816 = vpop.f32.mrb[0].mxu0
        %1817 = vmatprep.mubr.bf16.mxu0 %v1500
        %1818 = vmatmul.mubr.bf16.gmra.mrb[0].mxu0 %v1499
        %v1819 = vpop.f32.mrb[0].mxu0
        %v1820 = vadd.f32 0.0, %v1819
        %v1821 = vpop.f32.mrb[0].mxu0
        %v1822 = vpop.f32.mrb[0].mxu0
        %v1823 = vadd.f32 0.0, %v1822
        %v1824 = vpop.f32.mrb[0].mxu0
        %1825 = vmatprep.mubr.bf16.mxu0 %v1503
        %1826 = vmatmul.mubr.bf16.gmra.mrb[0].mxu0 %v1502
        %v1827 = vpop.f32.mrb[0].mxu0
        %v1828 = vadd.f32 0.0, %v1827
        %v1829 = vpop.f32.mrb[0].mxu0
        %v1830 = vpop.f32.mrb[0].mxu0
        %v1831 = vadd.f32 0.0, %v1830
        %v1832 = vpop.f32.mrb[0].mxu0
        %1833 = vmatprep.mubr.bf16.mxu0 %v1506
        %1834 = vmatmul.mubr.bf16.gmra.mrb[0].mxu0 %v1505
        %v1835 = vpop.f32.mrb[0].mxu0
        %v1836 = vadd.f32 0.0, %v1835
        %v1837 = vpop.f32.mrb[0].mxu0
        %v1838 = vpop.f32.mrb[0].mxu0
        %v1839 = vadd.f32 0.0, %v1838
        %v1840 = vpop.f32.mrb[0].mxu0
        %1841 = vmatprep.mubr.bf16.mxu0 %v1509
        %1842 = vmatmul.mubr.bf16.gmra.mrb[0].mxu0 %v1508
        %v1843 = vpop.f32.mrb[0].mxu0
        %v1844 = vadd.f32 0.0, %v1843
        %v1845 = vpop.f32.mrb[0].mxu0
        %v1846 = vpop.f32.mrb[0].mxu0
        %v1847 = vadd.f32 0.0, %v1846
        %v1848 = vpop.f32.mrb[0].mxu0
        %1849 = vmatprep.mubr.bf16.mxu0 %v1512
        %1850 = vmatmul.mubr.bf16.gmra.mrb[0].mxu0 %v1511
        %v1851 = vpop.f32.mrb[0].mxu0
        %v1852 = vadd.f32 0.0, %v1851
        %v1853 = vpop.f32.mrb[0].mxu0
        %v1854 = vpop.f32.mrb[0].mxu0
        %v1855 = vadd.f32 0.0, %v1854
        %v1856 = vpop.f32.mrb[0].mxu0
        %1857 = vmatprep.mubr.bf16.mxu0 %v1515
        %1858 = vmatmul.mubr.bf16.gmra.mrb[0].mxu0 %v1514
        %v1859 = vpop.f32.mrb[0].mxu0
        %v1860 = vadd.f32 0.0, %v1859
        %v1861 = vpop.f32.mrb[0].mxu0
        %v1862 = vpop.f32.mrb[0].mxu0
        %v1863 = vadd.f32 0.0, %v1862
        %v1864 = vpop.f32.mrb[0].mxu0
        %1865 = vmatprep.mubr.bf16.mxu0 %v1518
        %1866 = vmatmul.mubr.bf16.gmra.mrb[0].mxu0 %v1517
        %v1867 = vpop.f32.mrb[0].mxu0
        %v1868 = vadd.f32 0.0, %v1867
        %v1869 = vpop.f32.mrb[0].mxu0
        %v1870 = vpop.f32.mrb[0].mxu0
        %v1871 = vadd.f32 0.0, %v1870
        %v1872 = vpop.f32.mrb[0].mxu0
        %1873 = vdwg.mxu0
        %1874 = vmatprep.subr.bf16.mxu0 0
        %1875 = vmatpush1.bf16.msra.mxu0 %v1681
        %1876 = vmatprep.subr.bf16.mxu0 0
        %1877 = vmatpush1.bf16.msra.mxu0 %v1682
        %1878 = vmatprep.subr.bf16.mxu0 0
        %1879 = vmatpush1.bf16.msra.mxu0 %v1683
        %1880 = vmatprep.subr.bf16.mxu0 0
        %1881 = vmatpush1.bf16.msra.mxu0 %v1684
        %1882 = vmatprep.subr.bf16.mxu0 0
        %1883 = vmatpush1.bf16.msra.mxu0 %v1685
        %1884 = vmatprep.subr.bf16.mxu0 0
        %1885 = vmatpush1.bf16.msra.mxu0 %v1686
        %1886 = vmatprep.subr.bf16.mxu0 0
        %1887 = vmatpush1.bf16.msra.mxu0 %v1687
        %1888 = vmatprep.subr.bf16.mxu0 0
        %1889 = vmatpush1.bf16.msra.mxu0 %v1688
        %1890 = vmatprep.subr.bf16.mxu0 0
        %1891 = vmatpush1.bf16.msra.mxu0 0
        %1892 = vmatprep.subr.bf16.mxu0 0
        %1893 = vmatpush1.bf16.msra.mxu0 0
        %1894 = vmatprep.subr.bf16.mxu0 0
        %1895 = vmatpush1.bf16.msra.mxu0 0
        %1896 = vmatprep.subr.bf16.mxu0 0
        %1897 = vmatpush1.bf16.msra.mxu0 0
        %1898 = vmatprep.subr.bf16.mxu0 0
        %1899 = vmatpush1.bf16.msra.mxu0 0
        %1900 = vmatprep.subr.bf16.mxu0 0
        %1901 = vmatpush1.bf16.msra.mxu0 0
        %1902 = vmatprep.subr.bf16.mxu0 0
        %1903 = vmatpush1.bf16.msra.mxu0 0
        %1904 = vmatprep.subr.bf16.mxu0 0
        %1905 = vmatpush1.bf16.msra.mxu0 0
        %1906 = vmatprep.mubr.bf16.mxu0 0
        %1907 = vmatmul.mubr.bf16.gmra.mrb[0].mxu0 %v1474
        %v1908 = vpop.f32.mrb[0].mxu0
        %v1909 = vadd.f32 %v1748, %v1908
        %v1910 = vpop.f32.mrb[0].mxu0
        %v1911 = vpop.f32.mrb[0].mxu0
        %v1912 = vadd.f32 %v1751, %v1911
        %v1913 = vpop.f32.mrb[0].mxu0
        %1914 = vmatprep.mubr.bf16.mxu0 0
        %1915 = vmatmul.mubr.bf16.gmra.mrb[0].mxu0 %v1477
        %v1916 = vpop.f32.mrb[0].mxu0
        %v1917 = vadd.f32 %v1756, %v1916
        %v1918 = vpop.f32.mrb[0].mxu0
        %v1919 = vpop.f32.mrb[0].mxu0
        %v1920 = vadd.f32 %v1759, %v1919
        %v1921 = vpop.f32.mrb[0].mxu0
        %1922 = vmatprep.mubr.bf16.mxu0 0
        %1923 = vmatmul.mubr.bf16.gmra.mrb[0].mxu0 %v1480
        %v1924 = vpop.f32.mrb[0].mxu0
        %v1925 = vadd.f32 %v1764, %v1924
        %v1926 = vpop.f32.mrb[0].mxu0
        %v1927 = vpop.f32.mrb[0].mxu0
        %v1928 = vadd.f32 %v1767, %v1927
        %v1929 = vpop.f32.mrb[0].mxu0
        %1930 = vmatprep.mubr.bf16.mxu0 0
        %1931 = vmatmul.mubr.bf16.gmra.mrb[0].mxu0 %v1483
        %v1932 = vpop.f32.mrb[0].mxu0
        %v1933 = vadd.f32 %v1772, %v1932
        %v1934 = vpop.f32.mrb[0].mxu0
        %v1935 = vpop.f32.mrb[0].mxu0
        %v1936 = vadd.f32 %v1775, %v1935
        %v1937 = vpop.f32.mrb[0].mxu0
        %1938 = vmatprep.mubr.bf16.mxu0 0
        %1939 = vmatmul.mubr.bf16.gmra.mrb[0].mxu0 %v1486
        %v1940 = vpop.f32.mrb[0].mxu0
        %v1941 = vadd.f32 %v1780, %v1940
        %v1942 = vpop.f32.mrb[0].mxu0
        %v1943 = vpop.f32.mrb[0].mxu0
        %v1944 = vadd.f32 %v1783, %v1943
        %v1945 = vpop.f32.mrb[0].mxu0
        %1946 = vmatprep.mubr.bf16.mxu0 0
        %1947 = vmatmul.mubr.bf16.gmra.mrb[0].mxu0 %v1489
        %v1948 = vpop.f32.mrb[0].mxu0
        %v1949 = vadd.f32 %v1788, %v1948
        %v1950 = vpop.f32.mrb[0].mxu0
        %v1951 = vpop.f32.mrb[0].mxu0
        %v1952 = vadd.f32 %v1791, %v1951
        %v1953 = vpop.f32.mrb[0].mxu0
        %1954 = vmatprep.mubr.bf16.mxu0 0
        %1955 = vmatmul.mubr.bf16.gmra.mrb[0].mxu0 %v1492
        %v1956 = vpop.f32.mrb[0].mxu0
        %v1957 = vadd.f32 %v1796, %v1956
        %v1958 = vpop.f32.mrb[0].mxu0
        %v1959 = vpop.f32.mrb[0].mxu0
        %v1960 = vadd.f32 %v1799, %v1959
        %v1961 = vpop.f32.mrb[0].mxu0
        %1962 = vmatprep.mubr.bf16.mxu0 0
        %1963 = vmatmul.mubr.bf16.gmra.mrb[0].mxu0 %v1495
        %v1964 = vpop.f32.mrb[0].mxu0
        %v1965 = vadd.f32 %v1804, %v1964
        %v1966 = vpop.f32.mrb[0].mxu0
        %v1967 = vpop.f32.mrb[0].mxu0
        %v1968 = vadd.f32 %v1807, %v1967
        %v1969 = vpop.f32.mrb[0].mxu0
        %1970 = vmatprep.mubr.bf16.mxu0 0
        %1971 = vmatmul.mubr.bf16.gmra.mrb[0].mxu0 %v1498
        %v1972 = vpop.f32.mrb[0].mxu0
        %v1973 = vadd.f32 %v1812, %v1972
        %v1974 = vpop.f32.mrb[0].mxu0
        %v1975 = vpop.f32.mrb[0].mxu0
        %v1976 = vadd.f32 %v1815, %v1975
        %v1977 = vpop.f32.mrb[0].mxu0
        %1978 = vmatprep.mubr.bf16.mxu0 0
        %1979 = vmatmul.mubr.bf16.gmra.mrb[0].mxu0 %v1501
        %v1980 = vpop.f32.mrb[0].mxu0
        %v1981 = vadd.f32 %v1820, %v1980
        %v1982 = vpop.f32.mrb[0].mxu0
        %v1983 = vpop.f32.mrb[0].mxu0
        %v1984 = vadd.f32 %v1823, %v1983
        %v1985 = vpop.f32.mrb[0].mxu0
        %1986 = vmatprep.mubr.bf16.mxu0 0
        %1987 = vmatmul.mubr.bf16.gmra.mrb[0].mxu0 %v1504
        %v1988 = vpop.f32.mrb[0].mxu0
        %v1989 = vadd.f32 %v1828, %v1988
        %v1990 = vpop.f32.mrb[0].mxu0
        %v1991 = vpop.f32.mrb[0].mxu0
        %v1992 = vadd.f32 %v1831, %v1991
        %v1993 = vpop.f32.mrb[0].mxu0
        %1994 = vmatprep.mubr.bf16.mxu0 0
        %1995 = vmatmul.mubr.bf16.gmra.mrb[0].mxu0 %v1507
        %v1996 = vpop.f32.mrb[0].mxu0
        %v1997 = vadd.f32 %v1836, %v1996
        %v1998 = vpop.f32.mrb[0].mxu0
        %v1999 = vpop.f32.mrb[0].mxu0
        %v2000 = vadd.f32 %v1839, %v1999
        %v2001 = vpop.f32.mrb[0].mxu0
        %2002 = vmatprep.mubr.bf16.mxu0 0
        %2003 = vmatmul.mubr.bf16.gmra.mrb[0].mxu0 %v1510
        %v2004 = vpop.f32.mrb[0].mxu0
        %v2005 = vadd.f32 %v1844, %v2004
        %v2006 = vpop.f32.mrb[0].mxu0
        %v2007 = vpop.f32.mrb[0].mxu0
        %v2008 = vadd.f32 %v1847, %v2007
        %v2009 = vpop.f32.mrb[0].mxu0
        %2010 = vmatprep.mubr.bf16.mxu0 0
        %2011 = vmatmul.mubr.bf16.gmra.mrb[0].mxu0 %v1513
        %v2012 = vpop.f32.mrb[0].mxu0
        %v2013 = vadd.f32 %v1852, %v2012
        %v2014 = vpop.f32.mrb[0].mxu0
        %v2015 = vpop.f32.mrb[0].mxu0
        %v2016 = vadd.f32 %v1855, %v2015
        %v2017 = vpop.f32.mrb[0].mxu0
        %2018 = vmatprep.mubr.bf16.mxu0 0
        %2019 = vmatmul.mubr.bf16.gmra.mrb[0].mxu0 %v1516
        %v2020 = vpop.f32.mrb[0].mxu0
        %v2021 = vadd.f32 %v1860, %v2020
        %v2022 = vpop.f32.mrb[0].mxu0
        %v2023 = vpop.f32.mrb[0].mxu0
        %v2024 = vadd.f32 %v1863, %v2023
        %v2025 = vpop.f32.mrb[0].mxu0
        %2026 = vmatprep.mubr.bf16.mxu0 0
        %2027 = vmatmul.mubr.bf16.gmra.mrb[0].mxu0 %v1519
        %v2028 = vpop.f32.mrb[0].mxu0
        %v2029 = vadd.f32 %v1868, %v2028
        %v2030 = vpop.f32.mrb[0].mxu0
        %v2031 = vpop.f32.mrb[0].mxu0
        %v2032 = vadd.f32 %v1871, %v2031
        %v2033 = vpop.f32.mrb[0].mxu0
        %2034 = vdwg.mxu0
        %v2083 = vunpack.c.l.b16 %v1423
        %v2084 = vunpack.c.l.b16 %v1424
        %v2085 = vunpack.c.l.b16 %v1425
        %v2086 = vunpack.c.l.b16 %v1426
        %v2087 = vunpack.c.l.b16 %v1427
        %v2088 = vunpack.c.l.b16 %v1428
        %v2089 = vunpack.c.l.b16 %v1429
        %v2090 = vunpack.c.l.b16 %v1430
        %v2091 = vunpack.c.l.b16 %v1431
        %v2092 = vunpack.c.l.b16 %v1432
        %v2093 = vunpack.c.l.b16 %v1433
        %v2094 = vunpack.c.l.b16 %v1434
        %v2095 = vunpack.c.l.b16 %v1435
        %v2096 = vunpack.c.l.b16 %v1436
        %v2097 = vunpack.c.l.b16 %v1437
        %v2098 = vunpack.c.l.b16 %v1438
        %v2099 = vunpack.c.l.b16 %v1439
        %v2100 = vunpack.c.l.b16 %v1440
        %v2101 = vunpack.c.l.b16 %v1441
        %v2102 = vunpack.c.l.b16 %v1442
        %v2103 = vunpack.c.l.b16 %v1443
        %v2104 = vunpack.c.l.b16 %v1444
        %v2105 = vunpack.c.l.b16 %v1445
        %v2106 = vunpack.c.l.b16 %v1446
        %v2107 = vunpack.c.l.b16 %v1447
        %v2108 = vunpack.c.l.b16 %v1448
        %v2109 = vunpack.c.l.b16 %v1449
        %v2110 = vunpack.c.l.b16 %v1450
        %v2111 = vunpack.c.l.b16 %v1451
        %v2112 = vunpack.c.l.b16 %v1452
        %v2113 = vunpack.c.l.b16 %v1453
        %v2114 = vunpack.c.l.b16 %v1454
        %v2115 = vunpack.c.l.b16 %v1455
        %v2116 = vunpack.c.l.b16 %v1456
        %v2117 = vunpack.c.l.b16 %v1457
        %v2118 = vunpack.c.l.b16 %v1458
        %v2119 = vunpack.c.l.b16 %v1459
        %v2120 = vunpack.c.l.b16 %v1460
        %v2121 = vunpack.c.l.b16 %v1461
        %v2122 = vunpack.c.l.b16 %v1462
        %v2123 = vunpack.c.l.b16 %v1463
        %v2124 = vunpack.c.l.b16 %v1464
        %v2125 = vunpack.c.l.b16 %v1465
        %v2126 = vunpack.c.l.b16 %v1466
        %v2127 = vunpack.c.l.b16 %v1467
        %v2128 = vunpack.c.l.b16 %v1468
        %v2129 = vunpack.c.l.b16 %v1469
        %v2130 = vunpack.c.l.b16 %v1470
        %v2131 = vpack.c.b16 %v2084, %v2083
        %v2132 = vpack.c.b16 %v2086, %v2085
        %v2133 = vpack.c.b16 %v2088, %v2087
        %v2134 = vpack.c.b16 %v2090, %v2089
        %v2135 = vpack.c.b16 %v2092, %v2091
        %v2136 = vpack.c.b16 %v2094, %v2093
        %v2137 = vpack.c.b16 %v2096, %v2095
        %v2138 = vpack.c.b16 %v2098, %v2097
        %v2139 = vpack.c.b16 %v2100, %v2099
        %v2140 = vpack.c.b16 %v2102, %v2101
        %v2141 = vpack.c.b16 %v2104, %v2103
        %v2142 = vpack.c.b16 %v2106, %v2105
        %v2143 = vpack.c.b16 %v2108, %v2107
        %v2144 = vpack.c.b16 %v2110, %v2109
        %v2145 = vpack.c.b16 %v2112, %v2111
        %v2146 = vpack.c.b16 %v2114, %v2113
        %v2147 = vpack.c.b16 %v2116, %v2115
        %v2148 = vpack.c.b16 %v2118, %v2117
        %v2149 = vpack.c.b16 %v2120, %v2119
        %v2150 = vpack.c.b16 %v2122, %v2121
        %v2151 = vpack.c.b16 %v2124, %v2123
        %v2152 = vpack.c.b16 %v2126, %v2125
        %v2153 = vpack.c.b16 %v2128, %v2127
        %v2154 = vpack.c.b16 %v2130, %v2129
        %2179 = vmatprep.subr.bf16.mxu0 0
        %2180 = vmatpush1.bf16.msra.mxu0 %v2131
        %2181 = vmatprep.subr.bf16.mxu0 0
        %2182 = vmatpush1.bf16.msra.mxu0 %v2132
        %2183 = vmatprep.subr.bf16.mxu0 0
        %2184 = vmatpush1.bf16.msra.mxu0 %v2133
        %2185 = vmatprep.subr.bf16.mxu0 0
        %2186 = vmatpush1.bf16.msra.mxu0 %v2134
        %2187 = vmatprep.subr.bf16.mxu0 0
        %2188 = vmatpush1.bf16.msra.mxu0 %v2135
        %2189 = vmatprep.subr.bf16.mxu0 0
        %2190 = vmatpush1.bf16.msra.mxu0 %v2136
        %2191 = vmatprep.subr.bf16.mxu0 0
        %2192 = vmatpush1.bf16.msra.mxu0 %v2137
        %2193 = vmatprep.subr.bf16.mxu0 0
        %2194 = vmatpush1.bf16.msra.mxu0 %v2138
        %2195 = vmatprep.subr.bf16.mxu0 0
        %2196 = vmatpush1.bf16.msra.mxu0 %v2139
        %2197 = vmatprep.subr.bf16.mxu0 0
        %2198 = vmatpush1.bf16.msra.mxu0 %v2140
        %2199 = vmatprep.subr.bf16.mxu0 0
        %2200 = vmatpush1.bf16.msra.mxu0 %v2141
        %2201 = vmatprep.subr.bf16.mxu0 0
        %2202 = vmatpush1.bf16.msra.mxu0 %v2142
        %2203 = vmatprep.subr.bf16.mxu0 0
        %2204 = vmatpush1.bf16.msra.mxu0 %v2143
        %2205 = vmatprep.subr.bf16.mxu0 0
        %2206 = vmatpush1.bf16.msra.mxu0 %v2144
        %2207 = vmatprep.subr.bf16.mxu0 0
        %2208 = vmatpush1.bf16.msra.mxu0 %v2145
        %2209 = vmatprep.subr.bf16.mxu0 0
        %2210 = vmatpush1.bf16.msra.mxu0 %v2146
        %2211 = vmatprep.mubr.bf16.mxu0 %v1376
        %2212 = vmatmul.mubr.bf16.gmra.mrb[0].mxu0 %v1375
        %v2213 = vpop.f32.mrb[0].mxu0
        %v2214 = vadd.f32 %v1909, %v2213
        %v2215 = vpop.f32.mrb[0].mxu0
        %v2216 = vpop.f32.mrb[0].mxu0
        %v2217 = vadd.f32 %v1912, %v2216
        %v2218 = vpop.f32.mrb[0].mxu0
        %2219 = vmatprep.mubr.bf16.mxu0 %v1379
        %2220 = vmatmul.mubr.bf16.gmra.mrb[0].mxu0 %v1378
        %v2221 = vpop.f32.mrb[0].mxu0
        %v2222 = vadd.f32 %v1917, %v2221
        %v2223 = vpop.f32.mrb[0].mxu0
        %v2224 = vpop.f32.mrb[0].mxu0
        %v2225 = vadd.f32 %v1920, %v2224
        %v2226 = vpop.f32.mrb[0].mxu0
        %2227 = vmatprep.mubr.bf16.mxu0 %v1382
        %2228 = vmatmul.mubr.bf16.gmra.mrb[0].mxu0 %v1381
        %v2229 = vpop.f32.mrb[0].mxu0
        %v2230 = vadd.f32 %v1925, %v2229
        %v2231 = vpop.f32.mrb[0].mxu0
        %v2232 = vpop.f32.mrb[0].mxu0
        %v2233 = vadd.f32 %v1928, %v2232
        %v2234 = vpop.f32.mrb[0].mxu0
        %2235 = vmatprep.mubr.bf16.mxu0 %v1385
        %2236 = vmatmul.mubr.bf16.gmra.mrb[0].mxu0 %v1384
        %v2237 = vpop.f32.mrb[0].mxu0
        %v2238 = vadd.f32 %v1933, %v2237
        %v2239 = vpop.f32.mrb[0].mxu0
        %v2240 = vpop.f32.mrb[0].mxu0
        %v2241 = vadd.f32 %v1936, %v2240
        %v2242 = vpop.f32.mrb[0].mxu0
        %2243 = vmatprep.mubr.bf16.mxu0 %v1388
        %2244 = vmatmul.mubr.bf16.gmra.mrb[0].mxu0 %v1387
        %v2245 = vpop.f32.mrb[0].mxu0
        %v2246 = vadd.f32 %v1941, %v2245
        %v2247 = vpop.f32.mrb[0].mxu0
        %v2248 = vpop.f32.mrb[0].mxu0
        %v2249 = vadd.f32 %v1944, %v2248
        %v2250 = vpop.f32.mrb[0].mxu0
        %2251 = vmatprep.mubr.bf16.mxu0 %v1391
        %2252 = vmatmul.mubr.bf16.gmra.mrb[0].mxu0 %v1390
        %v2253 = vpop.f32.mrb[0].mxu0
        %v2254 = vadd.f32 %v1949, %v2253
        %v2255 = vpop.f32.mrb[0].mxu0
        %v2256 = vpop.f32.mrb[0].mxu0
        %v2257 = vadd.f32 %v1952, %v2256
        %v2258 = vpop.f32.mrb[0].mxu0
        %2259 = vmatprep.mubr.bf16.mxu0 %v1394
        %2260 = vmatmul.mubr.bf16.gmra.mrb[0].mxu0 %v1393
        %v2261 = vpop.f32.mrb[0].mxu0
        %v2262 = vadd.f32 %v1957, %v2261
        %v2263 = vpop.f32.mrb[0].mxu0
        %v2264 = vpop.f32.mrb[0].mxu0
        %v2265 = vadd.f32 %v1960, %v2264
        %v2266 = vpop.f32.mrb[0].mxu0
        %2267 = vmatprep.mubr.bf16.mxu0 %v1397
        %2268 = vmatmul.mubr.bf16.gmra.mrb[0].mxu0 %v1396
        %v2269 = vpop.f32.mrb[0].mxu0
        %v2270 = vadd.f32 %v1965, %v2269
        %v2271 = vpop.f32.mrb[0].mxu0
        %v2272 = vpop.f32.mrb[0].mxu0
        %v2273 = vadd.f32 %v1968, %v2272
        %v2274 = vpop.f32.mrb[0].mxu0
        %2275 = vmatprep.mubr.bf16.mxu0 %v1400
        %2276 = vmatmul.mubr.bf16.gmra.mrb[0].mxu0 %v1399
        %v2277 = vpop.f32.mrb[0].mxu0
        %v2278 = vadd.f32 %v1973, %v2277
        %v2279 = vpop.f32.mrb[0].mxu0
        %v2280 = vpop.f32.mrb[0].mxu0
        %v2281 = vadd.f32 %v1976, %v2280
        %v2282 = vpop.f32.mrb[0].mxu0
        %2283 = vmatprep.mubr.bf16.mxu0 %v1403
        %2284 = vmatmul.mubr.bf16.gmra.mrb[0].mxu0 %v1402
        %v2285 = vpop.f32.mrb[0].mxu0
        %v2286 = vadd.f32 %v1981, %v2285
        %v2287 = vpop.f32.mrb[0].mxu0
        %v2288 = vpop.f32.mrb[0].mxu0
        %v2289 = vadd.f32 %v1984, %v2288
        %v2290 = vpop.f32.mrb[0].mxu0
        %2291 = vmatprep.mubr.bf16.mxu0 %v1406
        %2292 = vmatmul.mubr.bf16.gmra.mrb[0].mxu0 %v1405
        %v2293 = vpop.f32.mrb[0].mxu0
        %v2294 = vadd.f32 %v1989, %v2293
        %v2295 = vpop.f32.mrb[0].mxu0
        %v2296 = vpop.f32.mrb[0].mxu0
        %v2297 = vadd.f32 %v1992, %v2296
        %v2298 = vpop.f32.mrb[0].mxu0
        %2299 = vmatprep.mubr.bf16.mxu0 %v1409
        %2300 = vmatmul.mubr.bf16.gmra.mrb[0].mxu0 %v1408
        %v2301 = vpop.f32.mrb[0].mxu0
        %v2302 = vadd.f32 %v1997, %v2301
        %v2303 = vpop.f32.mrb[0].mxu0
        %v2304 = vpop.f32.mrb[0].mxu0
        %v2305 = vadd.f32 %v2000, %v2304
        %v2306 = vpop.f32.mrb[0].mxu0
        %2307 = vmatprep.mubr.bf16.mxu0 %v1412
        %2308 = vmatmul.mubr.bf16.gmra.mrb[0].mxu0 %v1411
        %v2309 = vpop.f32.mrb[0].mxu0
        %v2310 = vadd.f32 %v2005, %v2309
        %v2311 = vpop.f32.mrb[0].mxu0
        %v2312 = vpop.f32.mrb[0].mxu0
        %v2313 = vadd.f32 %v2008, %v2312
        %v2314 = vpop.f32.mrb[0].mxu0
        %2315 = vmatprep.mubr.bf16.mxu0 %v1415
        %2316 = vmatmul.mubr.bf16.gmra.mrb[0].mxu0 %v1414
        %v2317 = vpop.f32.mrb[0].mxu0
        %v2318 = vadd.f32 %v2013, %v2317
        %v2319 = vpop.f32.mrb[0].mxu0
        %v2320 = vpop.f32.mrb[0].mxu0
        %v2321 = vadd.f32 %v2016, %v2320
        %v2322 = vpop.f32.mrb[0].mxu0
        %2323 = vmatprep.mubr.bf16.mxu0 %v1418
        %2324 = vmatmul.mubr.bf16.gmra.mrb[0].mxu0 %v1417
        %v2325 = vpop.f32.mrb[0].mxu0
        %v2326 = vadd.f32 %v2021, %v2325
        %v2327 = vpop.f32.mrb[0].mxu0
        %v2328 = vpop.f32.mrb[0].mxu0
        %v2329 = vadd.f32 %v2024, %v2328
        %v2330 = vpop.f32.mrb[0].mxu0
        %2331 = vmatprep.mubr.bf16.mxu0 %v1421
        %2332 = vmatmul.mubr.bf16.gmra.mrb[0].mxu0 %v1420
        %v2333 = vpop.f32.mrb[0].mxu0
        %v2334 = vadd.f32 %v2029, %v2333
        %v2335 = vpop.f32.mrb[0].mxu0
        %v2336 = vpop.f32.mrb[0].mxu0
        %v2337 = vadd.f32 %v2032, %v2336
        %v2338 = vpop.f32.mrb[0].mxu0
        %2339 = vdwg.mxu0
        %2340 = vmatprep.subr.bf16.mxu0 0
        %2341 = vmatpush1.bf16.msra.mxu0 %v2147
        %2342 = vmatprep.subr.bf16.mxu0 0
        %2343 = vmatpush1.bf16.msra.mxu0 %v2148
        %2344 = vmatprep.subr.bf16.mxu0 0
        %2345 = vmatpush1.bf16.msra.mxu0 %v2149
        %2346 = vmatprep.subr.bf16.mxu0 0
        %2347 = vmatpush1.bf16.msra.mxu0 %v2150
        %2348 = vmatprep.subr.bf16.mxu0 0
        %2349 = vmatpush1.bf16.msra.mxu0 %v2151
        %2350 = vmatprep.subr.bf16.mxu0 0
        %2351 = vmatpush1.bf16.msra.mxu0 %v2152
        %2352 = vmatprep.subr.bf16.mxu0 0
        %2353 = vmatpush1.bf16.msra.mxu0 %v2153
        %2354 = vmatprep.subr.bf16.mxu0 0
        %2355 = vmatpush1.bf16.msra.mxu0 %v2154
        %2356 = vmatprep.subr.bf16.mxu0 0
        %2357 = vmatpush1.bf16.msra.mxu0 0
        %2358 = vmatprep.subr.bf16.mxu0 0
        %2359 = vmatpush1.bf16.msra.mxu0 0
        %2360 = vmatprep.subr.bf16.mxu0 0
        %2361 = vmatpush1.bf16.msra.mxu0 0
        %2362 = vmatprep.subr.bf16.mxu0 0
        %2363 = vmatpush1.bf16.msra.mxu0 0
        %2364 = vmatprep.subr.bf16.mxu0 0
        %2365 = vmatpush1.bf16.msra.mxu0 0
        %2366 = vmatprep.subr.bf16.mxu0 0
        %2367 = vmatpush1.bf16.msra.mxu0 0
        %2368 = vmatprep.subr.bf16.mxu0 0
        %2369 = vmatpush1.bf16.msra.mxu0 0
        %2370 = vmatprep.subr.bf16.mxu0 0
        %2371 = vmatpush1.bf16.msra.mxu0 0
        %2372 = vmatprep.mubr.bf16.mxu0 0
        %2373 = vmatmul.mubr.bf16.gmra.mrb[0].mxu0 %v1377
        %v2374 = vpop.f32.mrb[0].mxu0
        %v2375 = vadd.f32 %v2214, %v2374
        %v2376 = vpop.f32.mrb[0].mxu0
        %v2377 = vpop.f32.mrb[0].mxu0
        %v2378 = vadd.f32 %v2217, %v2377
        %v2379 = vpop.f32.mrb[0].mxu0
        %2380 = vmatprep.mubr.bf16.mxu0 0
        %2381 = vmatmul.mubr.bf16.gmra.mrb[0].mxu0 %v1380
        %v2382 = vpop.f32.mrb[0].mxu0
        %v2383 = vadd.f32 %v2222, %v2382
        %v2384 = vpop.f32.mrb[0].mxu0
        %v2385 = vpop.f32.mrb[0].mxu0
        %v2386 = vadd.f32 %v2225, %v2385
        %v2387 = vpop.f32.mrb[0].mxu0
        %2388 = vmatprep.mubr.bf16.mxu0 0
        %2389 = vmatmul.mubr.bf16.gmra.mrb[0].mxu0 %v1383
        %v2390 = vpop.f32.mrb[0].mxu0
        %v2391 = vadd.f32 %v2230, %v2390
        %v2392 = vpop.f32.mrb[0].mxu0
        %v2393 = vpop.f32.mrb[0].mxu0
        %v2394 = vadd.f32 %v2233, %v2393
        %v2395 = vpop.f32.mrb[0].mxu0
        %2396 = vmatprep.mubr.bf16.mxu0 0
        %2397 = vmatmul.mubr.bf16.gmra.mrb[0].mxu0 %v1386
        %v2398 = vpop.f32.mrb[0].mxu0
        %v2399 = vadd.f32 %v2238, %v2398
        %v2400 = vpop.f32.mrb[0].mxu0
        %v2401 = vpop.f32.mrb[0].mxu0
        %v2402 = vadd.f32 %v2241, %v2401
        %v2403 = vpop.f32.mrb[0].mxu0
        %2404 = vmatprep.mubr.bf16.mxu0 0
        %2405 = vmatmul.mubr.bf16.gmra.mrb[0].mxu0 %v1389
        %v2406 = vpop.f32.mrb[0].mxu0
        %v2407 = vadd.f32 %v2246, %v2406
        %v2408 = vpop.f32.mrb[0].mxu0
        %v2409 = vpop.f32.mrb[0].mxu0
        %v2410 = vadd.f32 %v2249, %v2409
        %v2411 = vpop.f32.mrb[0].mxu0
        %2412 = vmatprep.mubr.bf16.mxu0 0
        %2413 = vmatmul.mubr.bf16.gmra.mrb[0].mxu0 %v1392
        %v2414 = vpop.f32.mrb[0].mxu0
        %v2415 = vadd.f32 %v2254, %v2414
        %v2416 = vpop.f32.mrb[0].mxu0
        %v2417 = vpop.f32.mrb[0].mxu0
        %v2418 = vadd.f32 %v2257, %v2417
        %v2419 = vpop.f32.mrb[0].mxu0
        %2420 = vmatprep.mubr.bf16.mxu0 0
        %2421 = vmatmul.mubr.bf16.gmra.mrb[0].mxu0 %v1395
        %v2422 = vpop.f32.mrb[0].mxu0
        %v2423 = vadd.f32 %v2262, %v2422
        %v2424 = vpop.f32.mrb[0].mxu0
        %v2425 = vpop.f32.mrb[0].mxu0
        %v2426 = vadd.f32 %v2265, %v2425
        %v2427 = vpop.f32.mrb[0].mxu0
        %2428 = vmatprep.mubr.bf16.mxu0 0
        %2429 = vmatmul.mubr.bf16.gmra.mrb[0].mxu0 %v1398
        %v2430 = vpop.f32.mrb[0].mxu0
        %v2431 = vadd.f32 %v2270, %v2430
        %v2432 = vpop.f32.mrb[0].mxu0
        %v2433 = vpop.f32.mrb[0].mxu0
        %v2434 = vadd.f32 %v2273, %v2433
        %v2435 = vpop.f32.mrb[0].mxu0
        %2436 = vmatprep.mubr.bf16.mxu0 0
        %2437 = vmatmul.mubr.bf16.gmra.mrb[0].mxu0 %v1401
        %v2438 = vpop.f32.mrb[0].mxu0
        %v2439 = vadd.f32 %v2278, %v2438
        %v2440 = vpop.f32.mrb[0].mxu0
        %v2441 = vpop.f32.mrb[0].mxu0
        %v2442 = vadd.f32 %v2281, %v2441
        %v2443 = vpop.f32.mrb[0].mxu0
        %2444 = vmatprep.mubr.bf16.mxu0 0
        %2445 = vmatmul.mubr.bf16.gmra.mrb[0].mxu0 %v1404
        %v2446 = vpop.f32.mrb[0].mxu0
        %v2447 = vadd.f32 %v2286, %v2446
        %v2448 = vpop.f32.mrb[0].mxu0
        %v2449 = vpop.f32.mrb[0].mxu0
        %v2450 = vadd.f32 %v2289, %v2449
        %v2451 = vpop.f32.mrb[0].mxu0
        %2452 = vmatprep.mubr.bf16.mxu0 0
        %2453 = vmatmul.mubr.bf16.gmra.mrb[0].mxu0 %v1407
        %v2454 = vpop.f32.mrb[0].mxu0
        %v2455 = vadd.f32 %v2294, %v2454
        %v2456 = vpop.f32.mrb[0].mxu0
        %v2457 = vpop.f32.mrb[0].mxu0
        %v2458 = vadd.f32 %v2297, %v2457
        %v2459 = vpop.f32.mrb[0].mxu0
        %2460 = vmatprep.mubr.bf16.mxu0 0
        %2461 = vmatmul.mubr.bf16.gmra.mrb[0].mxu0 %v1410
        %v2462 = vpop.f32.mrb[0].mxu0
        %v2463 = vadd.f32 %v2302, %v2462
        %v2464 = vpop.f32.mrb[0].mxu0
        %v2465 = vpop.f32.mrb[0].mxu0
        %v2466 = vadd.f32 %v2305, %v2465
        %v2467 = vpop.f32.mrb[0].mxu0
        %2468 = vmatprep.mubr.bf16.mxu0 0
        %2469 = vmatmul.mubr.bf16.gmra.mrb[0].mxu0 %v1413
        %v2470 = vpop.f32.mrb[0].mxu0
        %v2471 = vadd.f32 %v2310, %v2470
        %v2472 = vpop.f32.mrb[0].mxu0
        %v2473 = vpop.f32.mrb[0].mxu0
        %v2474 = vadd.f32 %v2313, %v2473
        %v2475 = vpop.f32.mrb[0].mxu0
        %2476 = vmatprep.mubr.bf16.mxu0 0
        %2477 = vmatmul.mubr.bf16.gmra.mrb[0].mxu0 %v1416
        %v2478 = vpop.f32.mrb[0].mxu0
        %v2479 = vadd.f32 %v2318, %v2478
        %v2480 = vpop.f32.mrb[0].mxu0
        %v2481 = vpop.f32.mrb[0].mxu0
        %v2482 = vadd.f32 %v2321, %v2481
        %v2483 = vpop.f32.mrb[0].mxu0
        %2484 = vmatprep.mubr.bf16.mxu0 0
        %2485 = vmatmul.mubr.bf16.gmra.mrb[0].mxu0 %v1419
        %v2486 = vpop.f32.mrb[0].mxu0
        %v2487 = vadd.f32 %v2326, %v2486
        %v2488 = vpop.f32.mrb[0].mxu0
        %v2489 = vpop.f32.mrb[0].mxu0
        %v2490 = vadd.f32 %v2329, %v2489
        %v2491 = vpop.f32.mrb[0].mxu0
        %2492 = vmatprep.mubr.bf16.mxu0 0
        %2493 = vmatmul.mubr.bf16.gmra.mrb[0].mxu0 %v1422
        %v2494 = vpop.f32.mrb[0].mxu0
        %v2495 = vadd.f32 %v2334, %v2494
        %v2496 = vpop.f32.mrb[0].mxu0
        %v2497 = vpop.f32.mrb[0].mxu0
        %v2498 = vadd.f32 %v2337, %v2497
        %v2499 = vpop.f32.mrb[0].mxu0
        %2500 = vdwg.mxu0
        %s2501 = scalar_lea.vmem [#allocation2], 48
        %v2502 = vld [vmem:[%s2501] sm:$0xff]
        %v2503 = vld [vmem:[%s2501 + $0x8] sm:$0xff]
        %v2504 = vld [vmem:[%s2501 + $0x10] sm:$0xff]
        %v2505 = vld [vmem:[%s2501 + $0x18] sm:$0xff]
        %v2506 = vld [vmem:[%s2501 + $0x20] sm:$0xff]
        %v2507 = vld [vmem:[%s2501 + $0x28] sm:$0xff]
        %v2508 = vld [vmem:[%s2501 + $0x30] sm:$0xff]
        %v2509 = vld [vmem:[%s2501 + $0x38] sm:$0xff]
        %v2510 = vld [vmem:[%s2501 + $0x40] sm:$0xff]
        %v2511 = vld [vmem:[%s2501 + $0x48] sm:$0xff]
        %v2512 = vld [vmem:[%s2501 + $0x50] sm:$0xff]
        %v2513 = vld [vmem:[%s2501 + $0x58] sm:$0xff]
        %v2514 = vld [vmem:[%s2501 + $0x60] sm:$0xff]
        %v2515 = vld [vmem:[%s2501 + $0x68] sm:$0xff]
        %v2516 = vld [vmem:[%s2501 + $0x70] sm:$0xff]
        %v2517 = vld [vmem:[%s2501 + $0x78] sm:$0xff]
        %v2518 = vld [vmem:[%s2501 + $0x80] sm:$0xff]
        %v2519 = vld [vmem:[%s2501 + $0x88] sm:$0xff]
        %v2520 = vld [vmem:[%s2501 + $0x90] sm:$0xff]
        %v2521 = vld [vmem:[%s2501 + $0x98] sm:$0xff]
        %v2522 = vld [vmem:[%s2501 + $0xa0] sm:$0xff]
        %v2523 = vld [vmem:[%s2501 + $0xa8] sm:$0xff]
        %v2524 = vld [vmem:[%s2501 + $0xb0] sm:$0xff]
        %v2525 = vld [vmem:[%s2501 + $0xb8] sm:$0xff]
        %v2526 = vld [vmem:[%s2501 + $0xc0] sm:$0xff]
        %v2527 = vld [vmem:[%s2501 + $0xc8] sm:$0xff]
        %v2528 = vld [vmem:[%s2501 + $0xd0] sm:$0xff]
        %v2529 = vld [vmem:[%s2501 + $0xd8] sm:$0xff]
        %v2530 = vld [vmem:[%s2501 + $0xe0] sm:$0xff]
        %v2531 = vld [vmem:[%s2501 + $0xe8] sm:$0xff]
        %v2532 = vld [vmem:[%s2501 + $0xf0] sm:$0xff]
        %v2533 = vld [vmem:[%s2501 + $0xf8] sm:$0xff]
        %v2534 = vld [vmem:[%s2501 + $0x100] sm:$0xff]
        %v2535 = vld [vmem:[%s2501 + $0x108] sm:$0xff]
        %v2536 = vld [vmem:[%s2501 + $0x110] sm:$0xff]
        %v2537 = vld [vmem:[%s2501 + $0x118] sm:$0xff]
        %v2538 = vld [vmem:[%s2501 + $0x120] sm:$0xff]
        %v2539 = vld [vmem:[%s2501 + $0x128] sm:$0xff]
        %v2540 = vld [vmem:[%s2501 + $0x130] sm:$0xff]
        %v2541 = vld [vmem:[%s2501 + $0x138] sm:$0xff]
        %v2542 = vld [vmem:[%s2501 + $0x140] sm:$0xff]
        %v2543 = vld [vmem:[%s2501 + $0x148] sm:$0xff]
        %v2544 = vld [vmem:[%s2501 + $0x150] sm:$0xff]
        %v2545 = vld [vmem:[%s2501 + $0x158] sm:$0xff]
        %v2546 = vld [vmem:[%s2501 + $0x160] sm:$0xff]
        %v2547 = vld [vmem:[%s2501 + $0x168] sm:$0xff]
        %v2548 = vld [vmem:[%s2501 + $0x170] sm:$0xff]
        %v2549 = vld [vmem:[%s2501 + $0x178] sm:$0xff]
        %s2550 = scalar_lea.vmem [#allocation11], 384
        %v2551 = vld [vmem:[%s2550] sm:$0xf]
        %v2552 = vld [vmem:[%s2550 + $0x4] sm:$0xf]
        %v2553 = vld [vmem:[%s2550 + $0x8] sm:$0xf]
        %v2554 = vld [vmem:[%s2550 + $0xc] sm:$0xf]
        %v2555 = vld [vmem:[%s2550 + $0x10] sm:$0xf]
        %v2556 = vld [vmem:[%s2550 + $0x14] sm:$0xf]
        %v2557 = vld [vmem:[%s2550 + $0x18] sm:$0xf]
        %v2558 = vld [vmem:[%s2550 + $0x1c] sm:$0xf]
        %v2559 = vld [vmem:[%s2550 + $0x20] sm:$0xf]
        %v2560 = vld [vmem:[%s2550 + $0x24] sm:$0xf]
        %v2561 = vld [vmem:[%s2550 + $0x28] sm:$0xf]
        %v2562 = vld [vmem:[%s2550 + $0x2c] sm:$0xf]
        %v2563 = vld [vmem:[%s2550 + $0x30] sm:$0xf]
        %v2564 = vld [vmem:[%s2550 + $0x34] sm:$0xf]
        %v2565 = vld [vmem:[%s2550 + $0x38] sm:$0xf]
        %v2566 = vld [vmem:[%s2550 + $0x3c] sm:$0xf]
        %v2567 = vld [vmem:[%s2550 + $0x40] sm:$0xf]
        %v2568 = vld [vmem:[%s2550 + $0x44] sm:$0xf]
        %v2569 = vld [vmem:[%s2550 + $0x48] sm:$0xf]
        %v2570 = vld [vmem:[%s2550 + $0x4c] sm:$0xf]
        %v2571 = vld [vmem:[%s2550 + $0x50] sm:$0xf]
        %v2572 = vld [vmem:[%s2550 + $0x54] sm:$0xf]
        %v2573 = vld [vmem:[%s2550 + $0x58] sm:$0xf]
        %v2574 = vld [vmem:[%s2550 + $0x5c] sm:$0xf]
        %v2575 = vld [vmem:[%s2550 + $0x60] sm:$0xf]
        %v2576 = vld [vmem:[%s2550 + $0x64] sm:$0xf]
        %v2577 = vld [vmem:[%s2550 + $0x68] sm:$0xf]
        %v2578 = vld [vmem:[%s2550 + $0x6c] sm:$0xf]
        %v2579 = vld [vmem:[%s2550 + $0x70] sm:$0xf]
        %v2580 = vld [vmem:[%s2550 + $0x74] sm:$0xf]
        %v2581 = vld [vmem:[%s2550 + $0x78] sm:$0xf]
        %v2582 = vld [vmem:[%s2550 + $0x7c] sm:$0xf]
        %v2583 = vld [vmem:[%s2550 + $0x80] sm:$0xf]
        %v2584 = vld [vmem:[%s2550 + $0x84] sm:$0xf]
        %v2585 = vld [vmem:[%s2550 + $0x88] sm:$0xf]
        %v2586 = vld [vmem:[%s2550 + $0x8c] sm:$0xf]
        %v2587 = vld [vmem:[%s2550 + $0x90] sm:$0xf]
        %v2588 = vld [vmem:[%s2550 + $0x94] sm:$0xf]
        %v2589 = vld [vmem:[%s2550 + $0x98] sm:$0xf]
        %v2590 = vld [vmem:[%s2550 + $0x9c] sm:$0xf]
        %v2591 = vld [vmem:[%s2550 + $0xa0] sm:$0xf]
        %v2592 = vld [vmem:[%s2550 + $0xa4] sm:$0xf]
        %v2593 = vld [vmem:[%s2550 + $0xa8] sm:$0xf]
        %v2594 = vld [vmem:[%s2550 + $0xac] sm:$0xf]
        %v2595 = vld [vmem:[%s2550 + $0xb0] sm:$0xf]
        %v2596 = vld [vmem:[%s2550 + $0xb4] sm:$0xf]
        %v2597 = vld [vmem:[%s2550 + $0xb8] sm:$0xf]
        %v2598 = vld [vmem:[%s2550 + $0xbc] sm:$0xf]
        %v2647 = vunpack.c.l.b16 %v2551
        %v2648 = vunpack.c.l.b16 %v2552
        %v2649 = vunpack.c.l.b16 %v2553
        %v2650 = vunpack.c.l.b16 %v2554
        %v2651 = vunpack.c.l.b16 %v2555
        %v2652 = vunpack.c.l.b16 %v2556
        %v2653 = vunpack.c.l.b16 %v2557
        %v2654 = vunpack.c.l.b16 %v2558
        %v2655 = vunpack.c.l.b16 %v2559
        %v2656 = vunpack.c.l.b16 %v2560
        %v2657 = vunpack.c.l.b16 %v2561
        %v2658 = vunpack.c.l.b16 %v2562
        %v2659 = vunpack.c.l.b16 %v2563
        %v2660 = vunpack.c.l.b16 %v2564
        %v2661 = vunpack.c.l.b16 %v2565
        %v2662 = vunpack.c.l.b16 %v2566
        %v2663 = vunpack.c.l.b16 %v2567
        %v2664 = vunpack.c.l.b16 %v2568
        %v2665 = vunpack.c.l.b16 %v2569
        %v2666 = vunpack.c.l.b16 %v2570
        %v2667 = vunpack.c.l.b16 %v2571
        %v2668 = vunpack.c.l.b16 %v2572
        %v2669 = vunpack.c.l.b16 %v2573
        %v2670 = vunpack.c.l.b16 %v2574
        %v2671 = vunpack.c.l.b16 %v2575
        %v2672 = vunpack.c.l.b16 %v2576
        %v2673 = vunpack.c.l.b16 %v2577
        %v2674 = vunpack.c.l.b16 %v2578
        %v2675 = vunpack.c.l.b16 %v2579
        %v2676 = vunpack.c.l.b16 %v2580
        %v2677 = vunpack.c.l.b16 %v2581
        %v2678 = vunpack.c.l.b16 %v2582
        %v2679 = vunpack.c.l.b16 %v2583
        %v2680 = vunpack.c.l.b16 %v2584
        %v2681 = vunpack.c.l.b16 %v2585
        %v2682 = vunpack.c.l.b16 %v2586
        %v2683 = vunpack.c.l.b16 %v2587
        %v2684 = vunpack.c.l.b16 %v2588
        %v2685 = vunpack.c.l.b16 %v2589
        %v2686 = vunpack.c.l.b16 %v2590
        %v2687 = vunpack.c.l.b16 %v2591
        %v2688 = vunpack.c.l.b16 %v2592
        %v2689 = vunpack.c.l.b16 %v2593
        %v2690 = vunpack.c.l.b16 %v2594
        %v2691 = vunpack.c.l.b16 %v2595
        %v2692 = vunpack.c.l.b16 %v2596
        %v2693 = vunpack.c.l.b16 %v2597
        %v2694 = vunpack.c.l.b16 %v2598
        %v2695 = vpack.c.b16 %v2648, %v2647
        %v2696 = vpack.c.b16 %v2650, %v2649
        %v2697 = vpack.c.b16 %v2652, %v2651
        %v2698 = vpack.c.b16 %v2654, %v2653
        %v2699 = vpack.c.b16 %v2656, %v2655
        %v2700 = vpack.c.b16 %v2658, %v2657
        %v2701 = vpack.c.b16 %v2660, %v2659
        %v2702 = vpack.c.b16 %v2662, %v2661
        %v2703 = vpack.c.b16 %v2664, %v2663
        %v2704 = vpack.c.b16 %v2666, %v2665
        %v2705 = vpack.c.b16 %v2668, %v2667
        %v2706 = vpack.c.b16 %v2670, %v2669
        %v2707 = vpack.c.b16 %v2672, %v2671
        %v2708 = vpack.c.b16 %v2674, %v2673
        %v2709 = vpack.c.b16 %v2676, %v2675
        %v2710 = vpack.c.b16 %v2678, %v2677
        %v2711 = vpack.c.b16 %v2680, %v2679
        %v2712 = vpack.c.b16 %v2682, %v2681
        %v2713 = vpack.c.b16 %v2684, %v2683
        %v2714 = vpack.c.b16 %v2686, %v2685
        %v2715 = vpack.c.b16 %v2688, %v2687
        %v2716 = vpack.c.b16 %v2690, %v2689
        %v2717 = vpack.c.b16 %v2692, %v2691
        %v2718 = vpack.c.b16 %v2694, %v2693
        %2743 = vmatprep.subr.bf16.mxu0 0
        %2744 = vmatpush1.bf16.msra.mxu0 %v2695
        %2745 = vmatprep.subr.bf16.mxu0 0
        %2746 = vmatpush1.bf16.msra.mxu0 %v2696
        %2747 = vmatprep.subr.bf16.mxu0 0
        %2748 = vmatpush1.bf16.msra.mxu0 %v2697
        %2749 = vmatprep.subr.bf16.mxu0 0
        %2750 = vmatpush1.bf16.msra.mxu0 %v2698
        %2751 = vmatprep.subr.bf16.mxu0 0
        %2752 = vmatpush1.bf16.msra.mxu0 %v2699
        %2753 = vmatprep.subr.bf16.mxu0 0
        %2754 = vmatpush1.bf16.msra.mxu0 %v2700
        %2755 = vmatprep.subr.bf16.mxu0 0
        %2756 = vmatpush1.bf16.msra.mxu0 %v2701
        %2757 = vmatprep.subr.bf16.mxu0 0
        %2758 = vmatpush1.bf16.msra.mxu0 %v2702
        %2759 = vmatprep.subr.bf16.mxu0 0
        %2760 = vmatpush1.bf16.msra.mxu0 %v2703
        %2761 = vmatprep.subr.bf16.mxu0 0
        %2762 = vmatpush1.bf16.msra.mxu0 %v2704
        %2763 = vmatprep.subr.bf16.mxu0 0
        %2764 = vmatpush1.bf16.msra.mxu0 %v2705
        %2765 = vmatprep.subr.bf16.mxu0 0
        %2766 = vmatpush1.bf16.msra.mxu0 %v2706
        %2767 = vmatprep.subr.bf16.mxu0 0
        %2768 = vmatpush1.bf16.msra.mxu0 %v2707
        %2769 = vmatprep.subr.bf16.mxu0 0
        %2770 = vmatpush1.bf16.msra.mxu0 %v2708
        %2771 = vmatprep.subr.bf16.mxu0 0
        %2772 = vmatpush1.bf16.msra.mxu0 %v2709
        %2773 = vmatprep.subr.bf16.mxu0 0
        %2774 = vmatpush1.bf16.msra.mxu0 %v2710
        %2775 = vmatprep.mubr.bf16.mxu0 %v2503
        %2776 = vmatmul.mubr.bf16.gmra.mrb[0].mxu0 %v2502
        %v2777 = vpop.f32.mrb[0].mxu0
        %v2778 = vadd.f32 0.0, %v2777
        %v2779 = vpop.f32.mrb[0].mxu0
        %v2780 = vpop.f32.mrb[0].mxu0
        %v2781 = vadd.f32 0.0, %v2780
        %v2782 = vpop.f32.mrb[0].mxu0
        %2783 = vmatprep.mubr.bf16.mxu0 %v2506
        %2784 = vmatmul.mubr.bf16.gmra.mrb[0].mxu0 %v2505
        %v2785 = vpop.f32.mrb[0].mxu0
        %v2786 = vadd.f32 0.0, %v2785
        %v2787 = vpop.f32.mrb[0].mxu0
        %v2788 = vpop.f32.mrb[0].mxu0
        %v2789 = vadd.f32 0.0, %v2788
        %v2790 = vpop.f32.mrb[0].mxu0
        %2791 = vmatprep.mubr.bf16.mxu0 %v2509
        %2792 = vmatmul.mubr.bf16.gmra.mrb[0].mxu0 %v2508
        %v2793 = vpop.f32.mrb[0].mxu0
        %v2794 = vadd.f32 0.0, %v2793
        %v2795 = vpop.f32.mrb[0].mxu0
        %v2796 = vpop.f32.mrb[0].mxu0
        %v2797 = vadd.f32 0.0, %v2796
        %v2798 = vpop.f32.mrb[0].mxu0
        %2799 = vmatprep.mubr.bf16.mxu0 %v2512
        %2800 = vmatmul.mubr.bf16.gmra.mrb[0].mxu0 %v2511
        %v2801 = vpop.f32.mrb[0].mxu0
        %v2802 = vadd.f32 0.0, %v2801
        %v2803 = vpop.f32.mrb[0].mxu0
        %v2804 = vpop.f32.mrb[0].mxu0
        %v2805 = vadd.f32 0.0, %v2804
        %v2806 = vpop.f32.mrb[0].mxu0
        %2807 = vmatprep.mubr.bf16.mxu0 %v2515
        %2808 = vmatmul.mubr.bf16.gmra.mrb[0].mxu0 %v2514
        %v2809 = vpop.f32.mrb[0].mxu0
        %v2810 = vadd.f32 0.0, %v2809
        %v2811 = vpop.f32.mrb[0].mxu0
        %v2812 = vpop.f32.mrb[0].mxu0
        %v2813 = vadd.f32 0.0, %v2812
        %v2814 = vpop.f32.mrb[0].mxu0
        %2815 = vmatprep.mubr.bf16.mxu0 %v2518
        %2816 = vmatmul.mubr.bf16.gmra.mrb[0].mxu0 %v2517
        %v2817 = vpop.f32.mrb[0].mxu0
        %v2818 = vadd.f32 0.0, %v2817
        %v2819 = vpop.f32.mrb[0].mxu0
        %v2820 = vpop.f32.mrb[0].mxu0
        %v2821 = vadd.f32 0.0, %v2820
        %v2822 = vpop.f32.mrb[0].mxu0
        %2823 = vmatprep.mubr.bf16.mxu0 %v2521
        %2824 = vmatmul.mubr.bf16.gmra.mrb[0].mxu0 %v2520
        %v2825 = vpop.f32.mrb[0].mxu0
        %v2826 = vadd.f32 0.0, %v2825
        %v2827 = vpop.f32.mrb[0].mxu0
        %v2828 = vpop.f32.mrb[0].mxu0
        %v2829 = vadd.f32 0.0, %v2828
        %v2830 = vpop.f32.mrb[0].mxu0
        %2831 = vmatprep.mubr.bf16.mxu0 %v2524
        %2832 = vmatmul.mubr.bf16.gmra.mrb[0].mxu0 %v2523
        %v2833 = vpop.f32.mrb[0].mxu0
        %v2834 = vadd.f32 0.0, %v2833
        %v2835 = vpop.f32.mrb[0].mxu0
        %v2836 = vpop.f32.mrb[0].mxu0
        %v2837 = vadd.f32 0.0, %v2836
        %v2838 = vpop.f32.mrb[0].mxu0
        %2839 = vmatprep.mubr.bf16.mxu0 %v2527
        %2840 = vmatmul.mubr.bf16.gmra.mrb[0].mxu0 %v2526
        %v2841 = vpop.f32.mrb[0].mxu0
        %v2842 = vadd.f32 0.0, %v2841
        %v2843 = vpop.f32.mrb[0].mxu0
        %v2844 = vpop.f32.mrb[0].mxu0
        %v2845 = vadd.f32 0.0, %v2844
        %v2846 = vpop.f32.mrb[0].mxu0
        %2847 = vmatprep.mubr.bf16.mxu0 %v2530
        %2848 = vmatmul.mubr.bf16.gmra.mrb[0].mxu0 %v2529
        %v2849 = vpop.f32.mrb[0].mxu0
        %v2850 = vadd.f32 0.0, %v2849
        %v2851 = vpop.f32.mrb[0].mxu0
        %v2852 = vpop.f32.mrb[0].mxu0
        %v2853 = vadd.f32 0.0, %v2852
        %v2854 = vpop.f32.mrb[0].mxu0
        %2855 = vmatprep.mubr.bf16.mxu0 %v2533
        %2856 = vmatmul.mubr.bf16.gmra.mrb[0].mxu0 %v2532
        %v2857 = vpop.f32.mrb[0].mxu0
        %v2858 = vadd.f32 0.0, %v2857
        %v2859 = vpop.f32.mrb[0].mxu0
        %v2860 = vpop.f32.mrb[0].mxu0
        %v2861 = vadd.f32 0.0, %v2860
        %v2862 = vpop.f32.mrb[0].mxu0
        %2863 = vmatprep.mubr.bf16.mxu0 %v2536
        %2864 = vmatmul.mubr.bf16.gmra.mrb[0].mxu0 %v2535
        %v2865 = vpop.f32.mrb[0].mxu0
        %v2866 = vadd.f32 0.0, %v2865
        %v2867 = vpop.f32.mrb[0].mxu0
        %v2868 = vpop.f32.mrb[0].mxu0
        %v2869 = vadd.f32 0.0, %v2868
        %v2870 = vpop.f32.mrb[0].mxu0
        %2871 = vmatprep.mubr.bf16.mxu0 %v2539
        %2872 = vmatmul.mubr.bf16.gmra.mrb[0].mxu0 %v2538
        %v2873 = vpop.f32.mrb[0].mxu0
        %v2874 = vadd.f32 0.0, %v2873
        %v2875 = vpop.f32.mrb[0].mxu0
        %v2876 = vpop.f32.mrb[0].mxu0
        %v2877 = vadd.f32 0.0, %v2876
        %v2878 = vpop.f32.mrb[0].mxu0
        %2879 = vmatprep.mubr.bf16.mxu0 %v2542
        %2880 = vmatmul.mubr.bf16.gmra.mrb[0].mxu0 %v2541
        %v2881 = vpop.f32.mrb[0].mxu0
        %v2882 = vadd.f32 0.0, %v2881
        %v2883 = vpop.f32.mrb[0].mxu0
        %v2884 = vpop.f32.mrb[0].mxu0
        %v2885 = vadd.f32 0.0, %v2884
        %v2886 = vpop.f32.mrb[0].mxu0
        %2887 = vmatprep.mubr.bf16.mxu0 %v2545
        %2888 = vmatmul.mubr.bf16.gmra.mrb[0].mxu0 %v2544
        %v2889 = vpop.f32.mrb[0].mxu0
        %v2890 = vadd.f32 0.0, %v2889
        %v2891 = vpop.f32.mrb[0].mxu0
        %v2892 = vpop.f32.mrb[0].mxu0
        %v2893 = vadd.f32 0.0, %v2892
        %v2894 = vpop.f32.mrb[0].mxu0
        %2895 = vmatprep.mubr.bf16.mxu0 %v2548
        %2896 = vmatmul.mubr.bf16.gmra.mrb[0].mxu0 %v2547
        %v2897 = vpop.f32.mrb[0].mxu0
        %v2898 = vadd.f32 0.0, %v2897
        %v2899 = vpop.f32.mrb[0].mxu0
        %v2900 = vpop.f32.mrb[0].mxu0
        %v2901 = vadd.f32 0.0, %v2900
        %v2902 = vpop.f32.mrb[0].mxu0
        %2903 = vdwg.mxu0
        %2904 = vmatprep.subr.bf16.mxu0 0
        %2905 = vmatpush1.bf16.msra.mxu0 %v2711
        %2906 = vmatprep.subr.bf16.mxu0 0
        %2907 = vmatpush1.bf16.msra.mxu0 %v2712
        %2908 = vmatprep.subr.bf16.mxu0 0
        %2909 = vmatpush1.bf16.msra.mxu0 %v2713
        %2910 = vmatprep.subr.bf16.mxu0 0
        %2911 = vmatpush1.bf16.msra.mxu0 %v2714
        %2912 = vmatprep.subr.bf16.mxu0 0
        %2913 = vmatpush1.bf16.msra.mxu0 %v2715
        %2914 = vmatprep.subr.bf16.mxu0 0
        %2915 = vmatpush1.bf16.msra.mxu0 %v2716
        %2916 = vmatprep.subr.bf16.mxu0 0
        %2917 = vmatpush1.bf16.msra.mxu0 %v2717
        %2918 = vmatprep.subr.bf16.mxu0 0
        %2919 = vmatpush1.bf16.msra.mxu0 %v2718
        %2920 = vmatprep.subr.bf16.mxu0 0
        %2921 = vmatpush1.bf16.msra.mxu0 0
        %2922 = vmatprep.subr.bf16.mxu0 0
        %2923 = vmatpush1.bf16.msra.mxu0 0
        %2924 = vmatprep.subr.bf16.mxu0 0
        %2925 = vmatpush1.bf16.msra.mxu0 0
        %2926 = vmatprep.subr.bf16.mxu0 0
        %2927 = vmatpush1.bf16.msra.mxu0 0
        %2928 = vmatprep.subr.bf16.mxu0 0
        %2929 = vmatpush1.bf16.msra.mxu0 0
        %2930 = vmatprep.subr.bf16.mxu0 0
        %2931 = vmatpush1.bf16.msra.mxu0 0
        %2932 = vmatprep.subr.bf16.mxu0 0
        %2933 = vmatpush1.bf16.msra.mxu0 0
        %2934 = vmatprep.subr.bf16.mxu0 0
        %2935 = vmatpush1.bf16.msra.mxu0 0
        %2936 = vmatprep.mubr.bf16.mxu0 0
        %2937 = vmatmul.mubr.bf16.gmra.mrb[0].mxu0 %v2504
        %v2938 = vpop.f32.mrb[0].mxu0
        %v2939 = vadd.f32 %v2778, %v2938
        %v2940 = vpop.f32.mrb[0].mxu0
        %v2941 = vpop.f32.mrb[0].mxu0
        %v2942 = vadd.f32 %v2781, %v2941
        %v2943 = vpop.f32.mrb[0].mxu0
        %2944 = vmatprep.mubr.bf16.mxu0 0
        %2945 = vmatmul.mubr.bf16.gmra.mrb[0].mxu0 %v2507
        %v2946 = vpop.f32.mrb[0].mxu0
        %v2947 = vadd.f32 %v2786, %v2946
        %v2948 = vpop.f32.mrb[0].mxu0
        %v2949 = vpop.f32.mrb[0].mxu0
        %v2950 = vadd.f32 %v2789, %v2949
        %v2951 = vpop.f32.mrb[0].mxu0
        %2952 = vmatprep.mubr.bf16.mxu0 0
        %2953 = vmatmul.mubr.bf16.gmra.mrb[0].mxu0 %v2510
        %v2954 = vpop.f32.mrb[0].mxu0
        %v2955 = vadd.f32 %v2794, %v2954
        %v2956 = vpop.f32.mrb[0].mxu0
        %v2957 = vpop.f32.mrb[0].mxu0
        %v2958 = vadd.f32 %v2797, %v2957
        %v2959 = vpop.f32.mrb[0].mxu0
        %2960 = vmatprep.mubr.bf16.mxu0 0
        %2961 = vmatmul.mubr.bf16.gmra.mrb[0].mxu0 %v2513
        %v2962 = vpop.f32.mrb[0].mxu0
        %v2963 = vadd.f32 %v2802, %v2962
        %v2964 = vpop.f32.mrb[0].mxu0
        %v2965 = vpop.f32.mrb[0].mxu0
        %v2966 = vadd.f32 %v2805, %v2965
        %v2967 = vpop.f32.mrb[0].mxu0
        %2968 = vmatprep.mubr.bf16.mxu0 0
        %2969 = vmatmul.mubr.bf16.gmra.mrb[0].mxu0 %v2516
        %v2970 = vpop.f32.mrb[0].mxu0
        %v2971 = vadd.f32 %v2810, %v2970
        %v2972 = vpop.f32.mrb[0].mxu0
        %v2973 = vpop.f32.mrb[0].mxu0
        %v2974 = vadd.f32 %v2813, %v2973
        %v2975 = vpop.f32.mrb[0].mxu0
        %2976 = vmatprep.mubr.bf16.mxu0 0
        %2977 = vmatmul.mubr.bf16.gmra.mrb[0].mxu0 %v2519
        %v2978 = vpop.f32.mrb[0].mxu0
        %v2979 = vadd.f32 %v2818, %v2978
        %v2980 = vpop.f32.mrb[0].mxu0
        %v2981 = vpop.f32.mrb[0].mxu0
        %v2982 = vadd.f32 %v2821, %v2981
        %v2983 = vpop.f32.mrb[0].mxu0
        %2984 = vmatprep.mubr.bf16.mxu0 0
        %2985 = vmatmul.mubr.bf16.gmra.mrb[0].mxu0 %v2522
        %v2986 = vpop.f32.mrb[0].mxu0
        %v2987 = vadd.f32 %v2826, %v2986
        %v2988 = vpop.f32.mrb[0].mxu0
        %v2989 = vpop.f32.mrb[0].mxu0
        %v2990 = vadd.f32 %v2829, %v2989
        %v2991 = vpop.f32.mrb[0].mxu0
        %2992 = vmatprep.mubr.bf16.mxu0 0
        %2993 = vmatmul.mubr.bf16.gmra.mrb[0].mxu0 %v2525
        %v2994 = vpop.f32.mrb[0].mxu0
        %v2995 = vadd.f32 %v2834, %v2994
        %v2996 = vpop.f32.mrb[0].mxu0
        %v2997 = vpop.f32.mrb[0].mxu0
        %v2998 = vadd.f32 %v2837, %v2997
        %v2999 = vpop.f32.mrb[0].mxu0
        %3000 = vmatprep.mubr.bf16.mxu0 0
        %3001 = vmatmul.mubr.bf16.gmra.mrb[0].mxu0 %v2528
        %v3002 = vpop.f32.mrb[0].mxu0
        %v3003 = vadd.f32 %v2842, %v3002
        %v3004 = vpop.f32.mrb[0].mxu0
        %v3005 = vpop.f32.mrb[0].mxu0
        %v3006 = vadd.f32 %v2845, %v3005
        %v3007 = vpop.f32.mrb[0].mxu0
        %3008 = vmatprep.mubr.bf16.mxu0 0
        %3009 = vmatmul.mubr.bf16.gmra.mrb[0].mxu0 %v2531
        %v3010 = vpop.f32.mrb[0].mxu0
        %v3011 = vadd.f32 %v2850, %v3010
        %v3012 = vpop.f32.mrb[0].mxu0
        %v3013 = vpop.f32.mrb[0].mxu0
        %v3014 = vadd.f32 %v2853, %v3013
        %v3015 = vpop.f32.mrb[0].mxu0
        %3016 = vmatprep.mubr.bf16.mxu0 0
        %3017 = vmatmul.mubr.bf16.gmra.mrb[0].mxu0 %v2534
        %v3018 = vpop.f32.mrb[0].mxu0
        %v3019 = vadd.f32 %v2858, %v3018
        %v3020 = vpop.f32.mrb[0].mxu0
        %v3021 = vpop.f32.mrb[0].mxu0
        %v3022 = vadd.f32 %v2861, %v3021
        %v3023 = vpop.f32.mrb[0].mxu0
        %3024 = vmatprep.mubr.bf16.mxu0 0
        %3025 = vmatmul.mubr.bf16.gmra.mrb[0].mxu0 %v2537
        %v3026 = vpop.f32.mrb[0].mxu0
        %v3027 = vadd.f32 %v2866, %v3026
        %v3028 = vpop.f32.mrb[0].mxu0
        %v3029 = vpop.f32.mrb[0].mxu0
        %v3030 = vadd.f32 %v2869, %v3029
        %v3031 = vpop.f32.mrb[0].mxu0
        %3032 = vmatprep.mubr.bf16.mxu0 0
        %3033 = vmatmul.mubr.bf16.gmra.mrb[0].mxu0 %v2540
        %v3034 = vpop.f32.mrb[0].mxu0
        %v3035 = vadd.f32 %v2874, %v3034
        %v3036 = vpop.f32.mrb[0].mxu0
        %v3037 = vpop.f32.mrb[0].mxu0
        %v3038 = vadd.f32 %v2877, %v3037
        %v3039 = vpop.f32.mrb[0].mxu0
        %3040 = vmatprep.mubr.bf16.mxu0 0
        %3041 = vmatmul.mubr.bf16.gmra.mrb[0].mxu0 %v2543
        %v3042 = vpop.f32.mrb[0].mxu0
        %v3043 = vadd.f32 %v2882, %v3042
        %v3044 = vpop.f32.mrb[0].mxu0
        %v3045 = vpop.f32.mrb[0].mxu0
        %v3046 = vadd.f32 %v2885, %v3045
        %v3047 = vpop.f32.mrb[0].mxu0
        %3048 = vmatprep.mubr.bf16.mxu0 0
        %3049 = vmatmul.mubr.bf16.gmra.mrb[0].mxu0 %v2546
        %v3050 = vpop.f32.mrb[0].mxu0
        %v3051 = vadd.f32 %v2890, %v3050
        %v3052 = vpop.f32.mrb[0].mxu0
        %v3053 = vpop.f32.mrb[0].mxu0
        %v3054 = vadd.f32 %v2893, %v3053
        %v3055 = vpop.f32.mrb[0].mxu0
        %3056 = vmatprep.mubr.bf16.mxu0 0
        %3057 = vmatmul.mubr.bf16.gmra.mrb[0].mxu0 %v2549
        %v3058 = vpop.f32.mrb[0].mxu0
        %v3059 = vadd.f32 %v2898, %v3058
        %v3060 = vpop.f32.mrb[0].mxu0
        %v3061 = vpop.f32.mrb[0].mxu0
        %v3062 = vadd.f32 %v2901, %v3061
        %v3063 = vpop.f32.mrb[0].mxu0
        %3064 = vdwg.mxu0
        %v3065 = vadd.f32 %v2375, %v2939
        %v3066 = vadd.f32 %v2378, %v2942
        %v3067 = vadd.f32 %v2383, %v2947
        %v3068 = vadd.f32 %v2386, %v2950
        %v3069 = vadd.f32 %v2391, %v2955
        %v3070 = vadd.f32 %v2394, %v2958
        %v3071 = vadd.f32 %v2399, %v2963
        %v3072 = vadd.f32 %v2402, %v2966
        %v3073 = vadd.f32 %v2407, %v2971
        %v3074 = vadd.f32 %v2410, %v2974
        %v3075 = vadd.f32 %v2415, %v2979
        %v3076 = vadd.f32 %v2418, %v2982
        %v3077 = vadd.f32 %v2423, %v2987
        %v3078 = vadd.f32 %v2426, %v2990
        %v3079 = vadd.f32 %v2431, %v2995
        %v3080 = vadd.f32 %v2434, %v2998
        %v3081 = vadd.f32 %v2439, %v3003
        %v3082 = vadd.f32 %v2442, %v3006
        %v3083 = vadd.f32 %v2447, %v3011
        %v3084 = vadd.f32 %v2450, %v3014
        %v3085 = vadd.f32 %v2455, %v3019
        %v3086 = vadd.f32 %v2458, %v3022
        %v3087 = vadd.f32 %v2463, %v3027
        %v3088 = vadd.f32 %v2466, %v3030
        %v3089 = vadd.f32 %v2471, %v3035
        %v3090 = vadd.f32 %v2474, %v3038
        %v3091 = vadd.f32 %v2479, %v3043
        %v3092 = vadd.f32 %v2482, %v3046
        %v3093 = vadd.f32 %v2487, %v3051
        %v3094 = vadd.f32 %v2490, %v3054
        %v3095 = vadd.f32 %v2495, %v3059
        %v3096 = vadd.f32 %v2498, %v3062
        %v3097 = vld [vmem:[%s6] sm:$0x1]
        %v3099 = vlaneseq
        %v3100 = vshrl.u32 %v3099, 7
        %v3101 = vsub.s32 0, %v3100
        %v3102 = vrot.slane %v3097, %v3101
        %v3104 = vadd.f32 %v3065, %v3102
        %v3105 = vadd.f32 %v3066, %v3102
        %v3106 = vadd.f32 %v3067, %v3102
        %v3107 = vadd.f32 %v3068, %v3102
        %v3108 = vadd.f32 %v3069, %v3102
        %v3109 = vadd.f32 %v3070, %v3102
        %v3110 = vadd.f32 %v3071, %v3102
        %v3111 = vadd.f32 %v3072, %v3102
        %v3112 = vadd.f32 %v3073, %v3102
        %v3113 = vadd.f32 %v3074, %v3102
        %v3114 = vadd.f32 %v3075, %v3102
        %v3115 = vadd.f32 %v3076, %v3102
        %v3116 = vadd.f32 %v3077, %v3102
        %v3117 = vadd.f32 %v3078, %v3102
        %v3118 = vadd.f32 %v3079, %v3102
        %v3119 = vadd.f32 %v3080, %v3102
        %v3120 = vadd.f32 %v3081, %v3102
        %v3121 = vadd.f32 %v3082, %v3102
        %v3122 = vadd.f32 %v3083, %v3102
        %v3123 = vadd.f32 %v3084, %v3102
        %v3124 = vadd.f32 %v3085, %v3102
        %v3125 = vadd.f32 %v3086, %v3102
        %v3126 = vadd.f32 %v3087, %v3102
        %v3127 = vadd.f32 %v3088, %v3102
        %v3128 = vadd.f32 %v3089, %v3102
        %v3129 = vadd.f32 %v3090, %v3102
        %v3130 = vadd.f32 %v3091, %v3102
        %v3131 = vadd.f32 %v3092, %v3102
        %v3132 = vadd.f32 %v3093, %v3102
        %v3133 = vadd.f32 %v3094, %v3102
        %v3134 = vadd.f32 %v3095, %v3102
        %v3135 = vadd.f32 %v3096, %v3102
        %vm3136 = vcmp.gt.f32.partialorder %v3104, 0.0
        %vm3137 = vcmp.gt.f32.partialorder %v3105, 0.0
        %vm3138 = vcmp.gt.f32.partialorder %v3106, 0.0
        %vm3139 = vcmp.gt.f32.partialorder %v3107, 0.0
        %vm3140 = vcmp.gt.f32.partialorder %v3108, 0.0
        %vm3141 = vcmp.gt.f32.partialorder %v3109, 0.0
        %vm3142 = vcmp.gt.f32.partialorder %v3110, 0.0
        %vm3143 = vcmp.gt.f32.partialorder %v3111, 0.0
        %vm3144 = vcmp.gt.f32.partialorder %v3112, 0.0
        %vm3145 = vcmp.gt.f32.partialorder %v3113, 0.0
        %vm3146 = vcmp.gt.f32.partialorder %v3114, 0.0
        %vm3147 = vcmp.gt.f32.partialorder %v3115, 0.0
        %vm3148 = vcmp.gt.f32.partialorder %v3116, 0.0
        %vm3149 = vcmp.gt.f32.partialorder %v3117, 0.0
        %vm3150 = vcmp.gt.f32.partialorder %v3118, 0.0
        %vm3151 = vcmp.gt.f32.partialorder %v3119, 0.0
        %vm3152 = vcmp.gt.f32.partialorder %v3120, 0.0
        %vm3153 = vcmp.gt.f32.partialorder %v3121, 0.0
        %vm3154 = vcmp.gt.f32.partialorder %v3122, 0.0
        %vm3155 = vcmp.gt.f32.partialorder %v3123, 0.0
        %vm3156 = vcmp.gt.f32.partialorder %v3124, 0.0
        %vm3157 = vcmp.gt.f32.partialorder %v3125, 0.0
        %vm3158 = vcmp.gt.f32.partialorder %v3126, 0.0
        %vm3159 = vcmp.gt.f32.partialorder %v3127, 0.0
        %vm3160 = vcmp.gt.f32.partialorder %v3128, 0.0
        %vm3161 = vcmp.gt.f32.partialorder %v3129, 0.0
        %vm3162 = vcmp.gt.f32.partialorder %v3130, 0.0
        %vm3163 = vcmp.gt.f32.partialorder %v3131, 0.0
        %vm3164 = vcmp.gt.f32.partialorder %v3132, 0.0
        %vm3165 = vcmp.gt.f32.partialorder %v3133, 0.0
        %vm3166 = vcmp.gt.f32.partialorder %v3134, 0.0
        %vm3167 = vcmp.gt.f32.partialorder %v3135, 0.0
        %v3168 = vmul.f32 %v3104, 0.1015625
        %v3169 = vmul.f32 %v3105, 0.1015625
        %v3170 = vmul.f32 %v3106, 0.1015625
        %v3171 = vmul.f32 %v3107, 0.1015625
        %v3172 = vmul.f32 %v3108, 0.1015625
        %v3173 = vmul.f32 %v3109, 0.1015625
        %v3174 = vmul.f32 %v3110, 0.1015625
        %v3175 = vmul.f32 %v3111, 0.1015625
        %v3176 = vmul.f32 %v3112, 0.1015625
        %v3177 = vmul.f32 %v3113, 0.1015625
        %v3178 = vmul.f32 %v3114, 0.1015625
        %v3179 = vmul.f32 %v3115, 0.1015625
        %v3180 = vmul.f32 %v3116, 0.1015625
        %v3181 = vmul.f32 %v3117, 0.1015625
        %v3182 = vmul.f32 %v3118, 0.1015625
        %v3183 = vmul.f32 %v3119, 0.1015625
        %v3184 = vmul.f32 %v3120, 0.1015625
        %v3185 = vmul.f32 %v3121, 0.1015625
        %v3186 = vmul.f32 %v3122, 0.1015625
        %v3187 = vmul.f32 %v3123, 0.1015625
        %v3188 = vmul.f32 %v3124, 0.1015625
        %v3189 = vmul.f32 %v3125, 0.1015625
        %v3190 = vmul.f32 %v3126, 0.1015625
        %v3191 = vmul.f32 %v3127, 0.1015625
        %v3192 = vmul.f32 %v3128, 0.1015625
        %v3193 = vmul.f32 %v3129, 0.1015625
        %v3194 = vmul.f32 %v3130, 0.1015625
        %v3195 = vmul.f32 %v3131, 0.1015625
        %v3196 = vmul.f32 %v3132, 0.1015625
        %v3197 = vmul.f32 %v3133, 0.1015625
        %v3198 = vmul.f32 %v3134, 0.1015625
        %v3199 = vmul.f32 %v3135, 0.1015625
        %v3200 = vsel %vm3136, %v3104, %v3168
        %v3201 = vsel %vm3137, %v3105, %v3169
        %v3202 = vsel %vm3138, %v3106, %v3170
        %v3203 = vsel %vm3139, %v3107, %v3171
        %v3204 = vsel %vm3140, %v3108, %v3172
        %v3205 = vsel %vm3141, %v3109, %v3173
        %v3206 = vsel %vm3142, %v3110, %v3174
        %v3207 = vsel %vm3143, %v3111, %v3175
        %v3208 = vsel %vm3144, %v3112, %v3176
        %v3209 = vsel %vm3145, %v3113, %v3177
        %v3210 = vsel %vm3146, %v3114, %v3178
        %v3211 = vsel %vm3147, %v3115, %v3179
        %v3212 = vsel %vm3148, %v3116, %v3180
        %v3213 = vsel %vm3149, %v3117, %v3181
        %v3214 = vsel %vm3150, %v3118, %v3182
        %v3215 = vsel %vm3151, %v3119, %v3183
        %v3216 = vsel %vm3152, %v3120, %v3184
        %v3217 = vsel %vm3153, %v3121, %v3185
        %v3218 = vsel %vm3154, %v3122, %v3186
        %v3219 = vsel %vm3155, %v3123, %v3187
        %v3220 = vsel %vm3156, %v3124, %v3188
        %v3221 = vsel %vm3157, %v3125, %v3189
        %v3222 = vsel %vm3158, %v3126, %v3190
        %v3223 = vsel %vm3159, %v3127, %v3191
        %v3224 = vsel %vm3160, %v3128, %v3192
        %v3225 = vsel %vm3161, %v3129, %v3193
        %v3226 = vsel %vm3162, %v3130, %v3194
        %v3227 = vsel %vm3163, %v3131, %v3195
        %v3228 = vsel %vm3164, %v3132, %v3196
        %v3229 = vsel %vm3165, %v3133, %v3197
        %v3230 = vsel %vm3166, %v3134, %v3198
        %v3231 = vsel %vm3167, %v3135, %v3199
        %v3232 = vld [vmem:[%s387] sm:$0xf]
        %v3233 = vld [vmem:[%s387 + $0x4] sm:$0xf]
        %v3234 = vld [vmem:[%s387 + $0x8] sm:$0xf]
        %v3235 = vld [vmem:[%s387 + $0xc] sm:$0xf]
        %v3236 = vld [vmem:[%s387 + $0x10] sm:$0xf]
        %v3237 = vld [vmem:[%s387 + $0x14] sm:$0xf]
        %v3238 = vld [vmem:[%s387 + $0x18] sm:$0xf]
        %v3239 = vld [vmem:[%s387 + $0x1c] sm:$0xf]
        %v3240 = vld [vmem:[%s387 + $0x20] sm:$0xf]
        %v3241 = vld [vmem:[%s387 + $0x24] sm:$0xf]
        %v3242 = vld [vmem:[%s387 + $0x28] sm:$0xf]
        %v3243 = vld [vmem:[%s387 + $0x2c] sm:$0xf]
        %v3244 = vld [vmem:[%s387 + $0x30] sm:$0xf]
        %v3245 = vld [vmem:[%s387 + $0x34] sm:$0xf]
        %v3246 = vld [vmem:[%s387 + $0x38] sm:$0xf]
        %v3247 = vld [vmem:[%s387 + $0x3c] sm:$0xf]
        %v3248 = vld [vmem:[%s387 + $0x40] sm:$0xf]
        %v3249 = vld [vmem:[%s387 + $0x44] sm:$0xf]
        %v3250 = vld [vmem:[%s387 + $0x48] sm:$0xf]
        %v3251 = vld [vmem:[%s387 + $0x4c] sm:$0xf]
        %v3252 = vld [vmem:[%s387 + $0x50] sm:$0xf]
        %v3253 = vld [vmem:[%s387 + $0x54] sm:$0xf]
        %v3254 = vld [vmem:[%s387 + $0x58] sm:$0xf]
        %v3255 = vld [vmem:[%s387 + $0x5c] sm:$0xf]
        %v3256 = vld [vmem:[%s387 + $0x60] sm:$0xf]
        %v3257 = vld [vmem:[%s387 + $0x64] sm:$0xf]
        %v3258 = vld [vmem:[%s387 + $0x68] sm:$0xf]
        %v3259 = vld [vmem:[%s387 + $0x6c] sm:$0xf]
        %v3260 = vld [vmem:[%s387 + $0x70] sm:$0xf]
        %v3261 = vld [vmem:[%s387 + $0x74] sm:$0xf]
        %v3262 = vld [vmem:[%s387 + $0x78] sm:$0xf]
        %v3263 = vld [vmem:[%s387 + $0x7c] sm:$0xf]
        %v3264 = vunpack.c.l.bf16 %v3232
        %v3265 = vunpack.c.l.bf16 %v3233
        %v3266 = vunpack.c.l.bf16 %v3234
        %v3267 = vunpack.c.l.bf16 %v3235
        %v3268 = vunpack.c.l.bf16 %v3236
        %v3269 = vunpack.c.l.bf16 %v3237
        %v3270 = vunpack.c.l.bf16 %v3238
        %v3271 = vunpack.c.l.bf16 %v3239
        %v3272 = vunpack.c.l.bf16 %v3240
        %v3273 = vunpack.c.l.bf16 %v3241
        %v3274 = vunpack.c.l.bf16 %v3242
        %v3275 = vunpack.c.l.bf16 %v3243
        %v3276 = vunpack.c.l.bf16 %v3244
        %v3277 = vunpack.c.l.bf16 %v3245
        %v3278 = vunpack.c.l.bf16 %v3246
        %v3279 = vunpack.c.l.bf16 %v3247
        %v3280 = vunpack.c.l.bf16 %v3248
        %v3281 = vunpack.c.l.bf16 %v3249
        %v3282 = vunpack.c.l.bf16 %v3250
        %v3283 = vunpack.c.l.bf16 %v3251
        %v3284 = vunpack.c.l.bf16 %v3252
        %v3285 = vunpack.c.l.bf16 %v3253
        %v3286 = vunpack.c.l.bf16 %v3254
        %v3287 = vunpack.c.l.bf16 %v3255
        %v3288 = vunpack.c.l.bf16 %v3256
        %v3289 = vunpack.c.l.bf16 %v3257
        %v3290 = vunpack.c.l.bf16 %v3258
        %v3291 = vunpack.c.l.bf16 %v3259
        %v3292 = vunpack.c.l.bf16 %v3260
        %v3293 = vunpack.c.l.bf16 %v3261
        %v3294 = vunpack.c.l.bf16 %v3262
        %v3295 = vunpack.c.l.bf16 %v3263
        %v3296 = vadd.f32 %v3264, %v3200
        %v3297 = vadd.f32 %v3265, %v3201
        %v3298 = vadd.f32 %v3266, %v3202
        %v3299 = vadd.f32 %v3267, %v3203
        %v3300 = vadd.f32 %v3268, %v3204
        %v3301 = vadd.f32 %v3269, %v3205
        %v3302 = vadd.f32 %v3270, %v3206
        %v3303 = vadd.f32 %v3271, %v3207
        %v3304 = vadd.f32 %v3272, %v3208
        %v3305 = vadd.f32 %v3273, %v3209
        %v3306 = vadd.f32 %v3274, %v3210
        %v3307 = vadd.f32 %v3275, %v3211
        %v3308 = vadd.f32 %v3276, %v3212
        %v3309 = vadd.f32 %v3277, %v3213
        %v3310 = vadd.f32 %v3278, %v3214
        %v3311 = vadd.f32 %v3279, %v3215
        %v3312 = vadd.f32 %v3280, %v3216
        %v3313 = vadd.f32 %v3281, %v3217
        %v3314 = vadd.f32 %v3282, %v3218
        %v3315 = vadd.f32 %v3283, %v3219
        %v3316 = vadd.f32 %v3284, %v3220
        %v3317 = vadd.f32 %v3285, %v3221
        %v3318 = vadd.f32 %v3286, %v3222
        %v3319 = vadd.f32 %v3287, %v3223
        %v3320 = vadd.f32 %v3288, %v3224
        %v3321 = vadd.f32 %v3289, %v3225
        %v3322 = vadd.f32 %v3290, %v3226
        %v3323 = vadd.f32 %v3291, %v3227
        %v3324 = vadd.f32 %v3292, %v3228
        %v3325 = vadd.f32 %v3293, %v3229
        %v3326 = vadd.f32 %v3294, %v3230
        %v3327 = vadd.f32 %v3295, %v3231
        %v3328 = vpack.c.bf16 %v3297, %v3296
        %v3329 = vpack.c.bf16 %v3299, %v3298
        %v3330 = vpack.c.bf16 %v3301, %v3300
        %v3331 = vpack.c.bf16 %v3303, %v3302
        %v3332 = vpack.c.bf16 %v3305, %v3304
        %v3333 = vpack.c.bf16 %v3307, %v3306
        %v3334 = vpack.c.bf16 %v3309, %v3308
        %v3335 = vpack.c.bf16 %v3311, %v3310
        %v3336 = vpack.c.bf16 %v3313, %v3312
        %v3337 = vpack.c.bf16 %v3315, %v3314
        %v3338 = vpack.c.bf16 %v3317, %v3316
        %v3339 = vpack.c.bf16 %v3319, %v3318
        %v3340 = vpack.c.bf16 %v3321, %v3320
        %v3341 = vpack.c.bf16 %v3323, %v3322
        %v3342 = vpack.c.bf16 %v3325, %v3324
        %v3343 = vpack.c.bf16 %v3327, %v3326
        %v3360 = vunpack.c.l.b16 %v3328
        %v3361 = vunpack.c.h.b16 %v3328
        %v3362 = vunpack.c.l.b16 %v3329
        %v3363 = vunpack.c.h.b16 %v3329
        %v3364 = vunpack.c.l.b16 %v3330
        %v3365 = vunpack.c.h.b16 %v3330
        %v3366 = vunpack.c.l.b16 %v3331
        %v3367 = vunpack.c.h.b16 %v3331
        %v3368 = vunpack.c.l.b16 %v3332
        %v3369 = vunpack.c.h.b16 %v3332
        %v3370 = vunpack.c.l.b16 %v3333
        %v3371 = vunpack.c.h.b16 %v3333
        %v3372 = vunpack.c.l.b16 %v3334
        %v3373 = vunpack.c.h.b16 %v3334
        %v3374 = vunpack.c.l.b16 %v3335
        %v3375 = vunpack.c.h.b16 %v3335
        %v3376 = vunpack.c.l.b16 %v3336
        %v3377 = vunpack.c.h.b16 %v3336
        %v3378 = vunpack.c.l.b16 %v3337
        %v3379 = vunpack.c.h.b16 %v3337
        %v3380 = vunpack.c.l.b16 %v3338
        %v3381 = vunpack.c.h.b16 %v3338
        %v3382 = vunpack.c.l.b16 %v3339
        %v3383 = vunpack.c.h.b16 %v3339
        %v3384 = vunpack.c.l.b16 %v3340
        %v3385 = vunpack.c.h.b16 %v3340
        %v3386 = vunpack.c.l.b16 %v3341
        %v3387 = vunpack.c.h.b16 %v3341
        %v3388 = vunpack.c.l.b16 %v3342
        %v3389 = vunpack.c.h.b16 %v3342
        %v3390 = vunpack.c.l.b16 %v3343
        %v3391 = vunpack.c.h.b16 %v3343
        %v3392 = vpack.c.b16 %v3360, %v3360
        %v3393 = vpack.c.b16 %v3361, %v3361
        %v3394 = vpack.c.b16 %v3362, %v3362
        %v3395 = vpack.c.b16 %v3363, %v3363
        %v3396 = vpack.c.b16 %v3364, %v3364
        %v3397 = vpack.c.b16 %v3365, %v3365
        %v3398 = vpack.c.b16 %v3366, %v3366
        %v3399 = vpack.c.b16 %v3367, %v3367
        %v3400 = vpack.c.b16 %v3368, %v3368
        %v3401 = vpack.c.b16 %v3369, %v3369
        %v3402 = vpack.c.b16 %v3370, %v3370
        %v3403 = vpack.c.b16 %v3371, %v3371
        %v3404 = vpack.c.b16 %v3372, %v3372
        %v3405 = vpack.c.b16 %v3373, %v3373
        %v3406 = vpack.c.b16 %v3374, %v3374
        %v3407 = vpack.c.b16 %v3375, %v3375
        %v3408 = vpack.c.b16 %v3376, %v3376
        %v3409 = vpack.c.b16 %v3377, %v3377
        %v3410 = vpack.c.b16 %v3378, %v3378
        %v3411 = vpack.c.b16 %v3379, %v3379
        %v3412 = vpack.c.b16 %v3380, %v3380
        %v3413 = vpack.c.b16 %v3381, %v3381
        %v3414 = vpack.c.b16 %v3382, %v3382
        %v3415 = vpack.c.b16 %v3383, %v3383
        %v3416 = vpack.c.b16 %v3384, %v3384
        %v3417 = vpack.c.b16 %v3385, %v3385
        %v3418 = vpack.c.b16 %v3386, %v3386
        %v3419 = vpack.c.b16 %v3387, %v3387
        %v3420 = vpack.c.b16 %v3388, %v3388
        %v3421 = vpack.c.b16 %v3389, %v3389
        %v3422 = vpack.c.b16 %v3390, %v3390
        %v3423 = vpack.c.b16 %v3391, %v3391
        %3456 = vst [vmem:[%s453] sm:$0xf] %v3392
        %3457 = vst [vmem:[%s453 + $0x4] sm:$0xf] %v3393
        %3458 = vst [vmem:[%s453 + $0x8] sm:$0xf] %v3394
        %3459 = vst [vmem:[%s453 + $0xc] sm:$0xf] %v3395
        %3460 = vst [vmem:[%s453 + $0x10] sm:$0xf] %v3396
        %3461 = vst [vmem:[%s453 + $0x14] sm:$0xf] %v3397
        %3462 = vst [vmem:[%s453 + $0x18] sm:$0xf] %v3398
        %3463 = vst [vmem:[%s453 + $0x1c] sm:$0xf] %v3399
        %3464 = vst [vmem:[%s453 + $0x20] sm:$0xf] %v3400
        %3465 = vst [vmem:[%s453 + $0x24] sm:$0xf] %v3401
        %3466 = vst [vmem:[%s453 + $0x28] sm:$0xf] %v3402
        %3467 = vst [vmem:[%s453 + $0x2c] sm:$0xf] %v3403
        %3468 = vst [vmem:[%s453 + $0x30] sm:$0xf] %v3404
        %3469 = vst [vmem:[%s453 + $0x34] sm:$0xf] %v3405
        %3470 = vst [vmem:[%s453 + $0x38] sm:$0xf] %v3406
        %3471 = vst [vmem:[%s453 + $0x3c] sm:$0xf] %v3407
        %3472 = vst [vmem:[%s453 + $0x40] sm:$0xf] %v3408
        %3473 = vst [vmem:[%s453 + $0x44] sm:$0xf] %v3409
        %3474 = vst [vmem:[%s453 + $0x48] sm:$0xf] %v3410
        %3475 = vst [vmem:[%s453 + $0x4c] sm:$0xf] %v3411
        %3476 = vst [vmem:[%s453 + $0x50] sm:$0xf] %v3412
        %3477 = vst [vmem:[%s453 + $0x54] sm:$0xf] %v3413
        %3478 = vst [vmem:[%s453 + $0x58] sm:$0xf] %v3414
        %3479 = vst [vmem:[%s453 + $0x5c] sm:$0xf] %v3415
        %3480 = vst [vmem:[%s453 + $0x60] sm:$0xf] %v3416
        %3481 = vst [vmem:[%s453 + $0x64] sm:$0xf] %v3417
        %3482 = vst [vmem:[%s453 + $0x68] sm:$0xf] %v3418
        %3483 = vst [vmem:[%s453 + $0x6c] sm:$0xf] %v3419
        %3484 = vst [vmem:[%s453 + $0x70] sm:$0xf] %v3420
        %3485 = vst [vmem:[%s453 + $0x74] sm:$0xf] %v3421
        %3486 = vst [vmem:[%s453 + $0x78] sm:$0xf] %v3422
        %3487 = vst [vmem:[%s453 + $0x7c] sm:$0xf] %v3423
        %s3488 = sand.u32 %s234, 1
        %s3489 = scalar_lea.sflag [#allocation5], %s3488
        %s3490 = sand.u32 %s234, 1
        %s3491 = smul.addr %s3490, 128
        %s3492 = scalar_lea.vmem [#allocation12], %s3491
        // Predicated region
        $region69: #{tpu_custom_call.1} parent=47 // pred_check
          %p3493 = pneg %p244
        $region70: #{tpu_custom_call.1} parent=47 // pred_check_branch
          %3495 = sbr.rel (%p3493) target = $region72
        $region71: #{tpu_custom_call.1} parent=47 // pred_region
          %s3496 = smul.u32 16, %s33
          %s3498 = ssub.s32 2048, 2048
          %3499 = vsyncadd %s3489, %s3498
          %s3500 = smul.addr %s3496, 2
          %s3501 = smul.addr %s32, 32
          %s3502 = sadd.s32 %s3500, %s3501
          %s3503 = smul.addr %s3502, 64
          %s3504 = scalar_lea.hbm %s7, %s3503
          %s3505 = sshll.u32 %s3492, 4
          %s3506 = int_to_ptr.vmem [resolvable:$true] %s3505
          %3511 = dma.vmem_to_hbm [thread:$0]  %s3506, 2048, %s3504, %s3489, 64, 64, 4
        $region72: #{tpu_custom_call.1} parent=47 // pred_fallthru
          _
      $region48: #{tpu_custom_call.1} parent=5 // pred_fallthru
        _
      %p3512 = scmp.le.s32.totalorder 2, %s23
      // Predicated region
      $region73: #{tpu_custom_call.1} parent=5 // pred_check
        %p3513 = pneg %p3512
      $region74: #{tpu_custom_call.1} parent=5 // pred_check_branch
        %3515 = sbr.rel (%p3513) target = $region76
      $region75: #{tpu_custom_call.1} parent=5 // pred_region
        %s3516 = ssub.s32 %s23, 2
        // Predicated region
        $region77: #{tpu_custom_call.1} parent=75 // pred_check
          %p3517 = pneg %p250
        $region78: #{tpu_custom_call.1} parent=75 // pred_check_branch
          %3519 = sbr.rel (%p3517) target = $region80
        $region79: #{tpu_custom_call.1} parent=75 // pred_region
          %s3520 = sand.u32 %s235, 1
          %s3521 = scalar_lea.sflag [#allocation5], %s3520
          %s3522 = sand.u32 %s235, 1
          %s3523 = smul.addr %s3522, 128
          %s3524 = scalar_lea.vmem [#allocation12], %s3523
          %3525 = dma.done %s3521, 2048
        $region80: #{tpu_custom_call.1} parent=75 // pred_fallthru
          _
      $region76: #{tpu_custom_call.1} parent=5 // pred_fallthru
        _
    $region6: #{tpu_custom_call.1} parent=1 // loop_footer
      %s27 = sadd.s32 1, %s23
    $region7: #{tpu_custom_call.1} parent=1 // loop_footer_branch
      %22 = sbr.rel target = $region3
    $region8: #{tpu_custom_call.1} parent=1 // loop_exit
      _
    %3526 = vsyncpa [#allocation4], 1
    %s3527 = scalar_lea.sflag [#allocation4], 1
    %3528 = vsyncpa %s3527, 1
    %3529 = vsyncpa [#allocation7], 1
    %s3530 = scalar_lea.sflag [#allocation7], 1
    %3531 = vsyncpa %s3530, 1
    %3532 = vsyncpa [#allocation10], 1
    %3533 = vsyncpa [#allocation5], 1
    %s3534 = scalar_lea.sflag [#allocation5], 1
    %3535 = vsyncpa %s3534, 1

</llo_original>
